<compile_context>
chip_gen: v7x
topology: tpu7x:2x2x1
jax: 0.10.0
libtpu: 0.0.40
codegen_flags: <defaults>
</compile_context>

<pallas_src>
import functools

import jax
import jax.numpy as jnp
from jax.experimental import pallas as pl
from jax.experimental.pallas import tpu as pltpu


# ----------------------------- helpers ---------------------------------------


def _pick_row_tile(H, W, Cin, Cout, itemsize, budget=12 << 20):
    """Largest divisor of H whose per-step working set fits the budget (v7x safe)."""
    def th_bytes(th):
        hw = th * W
        return (2 * hw * 4 * Cout * 4          # double-buffered f32 output block
                + hw * 9 * Cin * itemsize      # im2col scratch
                + hw * 4 * Cout * 4            # matmul result temp
                + hw * 9 * Cin * 4)            # relayout temp (upper bound)
    cands = [d for d in range(H, 0, -1) if H % d == 0 and (d * W) % 8 == 0]
    if not cands:
        return H
    for th in cands:
        if th_bytes(th) <= budget:
            return th
    return cands[-1]


def _vmem_limit(need_bytes):
    """Real requirement (x2 margin), clamped to the chip's VMEM when discoverable."""
    cap = 96 << 20
    try:
        cap = min(cap, (int(pltpu.get_tpu_info().vmem_capacity_bytes) * 3) // 4)
    except Exception:
        pass
    return int(min(cap, max(8 << 20, 2 * need_bytes)))


def _build_im2col(x_ref, im_ref, r, TH, W, Cin):
    """Write the 9 unique shifted views of the padded image into the im2col scratch.

    K ordering is (dh, dw, cin); the combined weight is built to match.
    """
    xw = x_ref[pl.ds(r * TH, TH + 2), :, :]            # (TH+2, W+2, Cin)
    for dh in range(3):
        for dw in range(3):
            k0 = (dh * 3 + dw) * Cin
            im_ref[:, :, k0:k0 + Cin] = xw[dh:dh + TH, dw:dw + W, :]


# ----------------------------- Pallas kernels --------------------------------


def _make_stats_kernel(TH, W, Cin, Cout, sub):
    """Pass 1: transposed conv (one matmul) -> per-(image,row-tile) BN partial stats."""
    HW = TH * W
    C4 = 4 * Cout
    K9 = 9 * Cin

    def kernel(x_ref, w_ref, s_ref, ss_ref, im_ref):
        r = pl.program_id(1)
        _build_im2col(x_ref, im_ref, r, TH, W, Cin)
        a = im_ref[...].reshape(HW, K9)
        res = jnp.dot(a, w_ref[...], preferred_element_type=jnp.float32)   # (HW, 4*Cout)
        # Partial stats reduced only down to `sub` sublanes (cheap VPU adds).
        rp = res.reshape(HW // sub, sub, C4)
        s_ref[...] = jnp.sum(rp, axis=0)
        ss_ref[...] = jnp.sum(rp * rp, axis=0)

    return kernel


def _make_apply_kernel(TH, W, Cin, Cout):
    """Pass 2: recompute conv (one matmul) + fused BN scale/shift + ReLU, single store."""
    HW = TH * W
    K9 = 9 * Cin

    def kernel(x_ref, w_ref, scale_ref, shift_ref, o_ref, im_ref):
        r = pl.program_id(1)
        _build_im2col(x_ref, im_ref, r, TH, W, Cin)
        a = im_ref[...].reshape(HW, K9)
        res = jnp.dot(a, w_ref[...], preferred_element_type=jnp.float32)   # (HW, 4*Cout)
        o_ref[...] = jnp.maximum(res * scale_ref[...] + shift_ref[...], 0.0)

    return kernel


# --------------------------- pallas_call wrappers ----------------------------


def _conv_stats(x_pad, wc, *, N, H, W, Cin, Cout, TH, RT, sub):
    C4 = 4 * Cout
    K9 = 9 * Cin
    cdtype = x_pad.dtype
    itemsize = jnp.dtype(cdtype).itemsize

    x_blk = (H + 2) * (W + 2) * Cin * itemsize
    w_blk = K9 * C4 * itemsize
    im_blk = TH * W * K9 * itemsize
    tmp = TH * W * C4 * 4 + TH * W * K9 * 4
    need = 2 * x_blk + 2 * w_blk + im_blk + tmp + 4 * (2 * sub * C4 * 4)

    return pl.pallas_call(
        _make_stats_kernel(TH, W, Cin, Cout, sub),
        out_shape=(
            jax.ShapeDtypeStruct((N, RT, sub, C4), jnp.float32),
            jax.ShapeDtypeStruct((N, RT, sub, C4), jnp.float32),
        ),
        grid_spec=pltpu.PrefetchScalarGridSpec(
            num_scalar_prefetch=0,
            grid=(N, RT),
            in_specs=[
                # Whole padded image stays resident across the row-tile axis.
                pl.BlockSpec((None, H + 2, W + 2, Cin), lambda n, r: (n, 0, 0, 0)),
                pl.BlockSpec((K9, C4), lambda n, r: (0, 0)),
            ],
            out_specs=(
                pl.BlockSpec((None, None, sub, C4), lambda n, r: (n, r, 0, 0)),
                pl.BlockSpec((None, None, sub, C4), lambda n, r: (n, r, 0, 0)),
            ),
            scratch_shapes=[pltpu.VMEM((TH, W, K9), cdtype)],
        ),
        compiler_params=pltpu.CompilerParams(
            dimension_semantics=("parallel", "parallel"),
            vmem_limit_bytes=_vmem_limit(need),
        ),
    )(x_pad, wc)


def _conv_bn_relu(x_pad, wc, scale_row, shift_row, *, N, H, W, Cin, Cout, TH, RT):
    C4 = 4 * Cout
    K9 = 9 * Cin
    cdtype = x_pad.dtype
    itemsize = jnp.dtype(cdtype).itemsize

    x_blk = (H + 2) * (W + 2) * Cin * itemsize
    w_blk = K9 * C4 * itemsize
    im_blk = TH * W * K9 * itemsize
    out_blk = TH * W * C4 * 4
    tmp = out_blk + TH * W * K9 * 4
    need = 2 * x_blk + 2 * w_blk + im_blk + tmp + 2 * out_blk + 4 * C4 * 4

    return pl.pallas_call(
        _make_apply_kernel(TH, W, Cin, Cout),
        out_shape=jax.ShapeDtypeStruct((N, H * W, C4), jnp.float32),
        grid_spec=pltpu.PrefetchScalarGridSpec(
            num_scalar_prefetch=0,
            grid=(N, RT),
            in_specs=[
                pl.BlockSpec((None, H + 2, W + 2, Cin), lambda n, r: (n, 0, 0, 0)),
                pl.BlockSpec((K9, C4), lambda n, r: (0, 0)),
                pl.BlockSpec((1, C4), lambda n, r: (0, 0)),
                pl.BlockSpec((1, C4), lambda n, r: (0, 0)),
            ],
            out_specs=pl.BlockSpec((None, TH * W, C4), lambda n, r: (n, r, 0)),
            scratch_shapes=[pltpu.VMEM((TH, W, K9), cdtype)],
        ),
        compiler_params=pltpu.CompilerParams(
            dimension_semantics=("parallel", "parallel"),
            vmem_limit_bytes=_vmem_limit(need),
        ),
    )(x_pad, wc, scale_row, shift_row)


# ------------------------------ Module wrapper -------------------------------


@functools.partial(jax.jit, static_argnames=("eps", "compute_dtype"))
def upsample_block(x_nchw, weight, gamma, beta, eps=1e-5, compute_dtype=jnp.bfloat16):
    """weight: PyTorch ConvTranspose2d layout (Cin, Cout, 4, 4).

    compute_dtype sets the MXU operand dtype (accumulation is always f32); pass
    jnp.float32 if bf16 rounding of x/weight is not acceptable.
    """
    N, Cin, H, W = x_nchw.shape
    Cout = weight.shape[1]
    C4 = 4 * Cout
    K9 = 9 * Cin

    # NHWC + zero pad of 1 (transposed-conv padding=1 halo); cast operands for the MXU.
    x = jnp.transpose(x_nchw, (0, 2, 3, 1))
    x_pad = jnp.pad(x, ((0, 0), (1, 1), (1, 1), (0, 0))).astype(compute_dtype)

    # Combined zero-padded weight (9*Cin, 4*Cout): row k = (dh*3 + dw)*Cin + cin,
    # column = (2a+b)*Cout + cout.  Derived from oh = 2*ih + kh - 1 (stride 2, pad 1):
    # for output parity a, the active taps are dh = a+i, kh = 3-a-2i (i in {0,1}).
    wc = jnp.zeros((3, 3, Cin, 2, 2, Cout), jnp.float32)
    for a in range(2):
        for b in range(2):
            for i in range(2):
                for j in range(2):
                    dh, dw = a + i, b + j
                    kh, kw = 3 - a - 2 * i, 3 - b - 2 * j
                    wc = wc.at[dh, dw, :, a, b, :].set(weight[:, :, kh, kw])
    wc = wc.reshape(K9, C4).astype(compute_dtype)

    TH = _pick_row_tile(H, W, Cin, Cout, jnp.dtype(compute_dtype).itemsize)
    RT = H // TH
    sub = 8 if (TH * W) % 8 == 0 else 1

    # Pass 1: stats only (no output-sized intermediate touches HBM).
    s, ss = _conv_stats(x_pad, wc, N=N, H=H, W=W, Cin=Cin, Cout=Cout,
                        TH=TH, RT=RT, sub=sub)

    # BatchNorm2d training-mode statistics (biased variance) over (N, 2H, 2W).
    count = N * (2 * H) * (2 * W)
    ch_sum = s.sum(axis=(0, 1, 2)).reshape(4, Cout).sum(axis=0)
    ch_ssq = ss.sum(axis=(0, 1, 2)).reshape(4, Cout).sum(axis=0)
    mean = ch_sum / count
    # Single-pass E[x^2]-E[x]^2 in f32, clamped against cancellation; acceptable for
    # forward-pass parity at these scales (Welford would be needed for huge batches).
    var = jnp.maximum(ch_ssq / count - mean * mean, 0.0)
    scale = gamma / jnp.sqrt(var + eps)
    shift = beta - mean * scale
    scale_row = jnp.tile(scale, 4).reshape(1, C4).astype(jnp.float32)
    shift_row = jnp.tile(shift, 4).reshape(1, C4).astype(jnp.float32)

    # Pass 2: recompute conv (cheap) + fused BN scale/shift + ReLU, one wide store.
    y = _conv_bn_relu(x_pad, wc, scale_row, shift_row,
                      N=N, H=H, W=W, Cin=Cin, Cout=Cout, TH=TH, RT=RT)

    # Single combined parity-interleave + NCHW transpose (kept in XLA for lowering
    # robustness): out[n, c, 2h+a, 2w+b] = y[n, h*W + w, (2a+b)*Cout + c].
    out = y.reshape(N, H, W, 2, 2, Cout)
    out = jnp.transpose(out, (0, 5, 1, 3, 2, 4)).reshape(N, Cout, 2 * H, 2 * W)
    return out


# ------------------------------ Reference (JAX) ------------------------------


def reference_upsample_block(x_nchw, weight, gamma, beta, eps=1e-5, operand_dtype=None):
    """Pure-JAX reference with f32 accumulation.  If operand_dtype is given, x/weight
    are rounded through it first so the check matches the kernel's MXU operand dtype."""
    if operand_dtype is not None:
        x_nchw = x_nchw.astype(operand_dtype).astype(jnp.float32)
        weight = weight.astype(operand_dtype).astype(jnp.float32)
    N, Cin, H, W = x_nchw.shape
    Cout = weight.shape[1]
    full = jnp.zeros((N, Cout, 2 * H + 2, 2 * W + 2), jnp.float32)
    for kh in range(4):
        for kw in range(4):
            contrib = jnp.einsum(
                "nchw,cd->ndhw", x_nchw, weight[:, :, kh, kw],
                precision=jax.lax.Precision.HIGHEST)
            full = full.at[:, :, kh: kh + 2 * H: 2, kw: kw + 2 * W: 2].add(contrib)
    conv = full[:, :, 1:1 + 2 * H, 1:1 + 2 * W]               # padding=1 crop
    mean = conv.mean(axis=(0, 2, 3), keepdims=True)
    var = conv.var(axis=(0, 2, 3), keepdims=True)             # biased
    bn = (conv - mean) / jnp.sqrt(var + eps)
    bn = bn * gamma[None, :, None, None] + beta[None, :, None, None]
    return jnp.maximum(bn, 0.0)


# ----------------------------------- Main ------------------------------------

if __name__ == "__main__":
    key = jax.random.PRNGKey(0)
    kx, kw, kg, kb = jax.random.split(key, 4)

    N, Cin, Cout, H, W = 2, 4, 8, 16, 16
    x = jax.random.normal(kx, (N, Cin, H, W), jnp.float32)
    weight = jax.random.normal(kw, (Cin, Cout, 4, 4), jnp.float32) * 0.1
    gamma = 1.0 + 0.1 * jax.random.normal(kg, (Cout,), jnp.float32)
    beta = 0.1 * jax.random.normal(kb, (Cout,), jnp.float32)

    out = jax.block_until_ready(upsample_block(x, weight, gamma, beta))
    assert out.shape == (N, Cout, 2 * H, 2 * W), out.shape

    # Compare against the f32-accumulation reference evaluated on the same bf16-rounded
    # operands (the kernel uses bf16 MXU inputs with f32 accumulation).
    ref = reference_upsample_block(x, weight, gamma, beta, operand_dtype=jnp.bfloat16)
    max_err = float(jnp.max(jnp.abs(out - ref)))
    assert jnp.allclose(out, ref, rtol=2e-3, atol=2e-3), max_err

    print("KERNEL_OK")
</pallas_src>

<mosaic_0001>
module attributes {stable_mosaic.version = 11 : i64} {
  func.func @kernel(%arg0: i32, %arg1: i32, %arg2: memref<1x18x18x4xbf16, #tpu.memory_space<vmem>>, %arg3: memref<36x32xbf16, #tpu.memory_space<vmem>>, %arg4: memref<1x1x8x32xf32, #tpu.memory_space<vmem>>, %arg5: memref<1x1x8x32xf32, #tpu.memory_space<vmem>>, %arg6: memref<16x16x36xbf16, #tpu.memory_space<vmem>>) attributes {dimension_semantics = [#tpu.dimension_semantics<parallel>, #tpu.dimension_semantics<parallel>], iteration_bounds = array<i64: 2, 1>, scalar_prefetch = 0 : i64, scratch_operands = 1 : i64, tpu.core_type = #tpu.core_type<tc>, window_params = [{transform_indices = @transform_0, window_bounds = array<i64: 1, 18, 18, 4>}, {pipeline_mode = #tpu.pipeline_mode<synchronous>, transform_indices = @transform_1, window_bounds = array<i64: 36, 32>}, {transform_indices = @transform_2, window_bounds = array<i64: 1, 1, 8, 32>}, {transform_indices = @transform_3, window_bounds = array<i64: 1, 1, 8, 32>}]} {
    %c16_i32 = arith.constant 16 : i32
    %0 = arith.muli %arg1, %c16_i32 : i32
    %c0 = arith.constant 0 : index
    %1 = arith.index_cast %0 : i32 to index
    %c0_0 = arith.constant 0 : index
    %c0_1 = arith.constant 0 : index
    %2 = vector.load %arg2[%c0, %1, %c0_0, %c0_1] : memref<1x18x18x4xbf16, #tpu.memory_space<vmem>>, vector<1x18x18x4xbf16>
    %3 = vector.shape_cast %2 : vector<1x18x18x4xbf16> to vector<18x18x4xbf16>
    %4 = vector.extract_strided_slice %3 {offsets = [0, 0, 0], sizes = [16, 16, 4], strides = [1, 1, 1]} : vector<18x18x4xbf16> to vector<16x16x4xbf16>
    %c0_2 = arith.constant 0 : index
    %c0_3 = arith.constant 0 : index
    %c0_4 = arith.constant 0 : index
    %5 = vector.load %arg6[%c0_2, %c0_3, %c0_4] : memref<16x16x36xbf16, #tpu.memory_space<vmem>>, vector<16x16x4xbf16>
    tpu.vector_store %arg6[%c0_2, %c0_3, %c0_4], %4 {strides = array<i32>} : memref<16x16x36xbf16, #tpu.memory_space<vmem>>, vector<16x16x4xbf16>,
    %6 = vector.extract_strided_slice %3 {offsets = [0, 1, 0], sizes = [16, 16, 4], strides = [1, 1, 1]} : vector<18x18x4xbf16> to vector<16x16x4xbf16>
    %c0_5 = arith.constant 0 : index
    %c0_6 = arith.constant 0 : index
    %c4 = arith.constant 4 : index
    %7 = vector.load %arg6[%c0_5, %c0_6, %c4] : memref<16x16x36xbf16, #tpu.memory_space<vmem>>, vector<16x16x4xbf16>
    tpu.vector_store %arg6[%c0_5, %c0_6, %c4], %6 {strides = array<i32>} : memref<16x16x36xbf16, #tpu.memory_space<vmem>>, vector<16x16x4xbf16>,
    %8 = vector.extract_strided_slice %3 {offsets = [0, 2, 0], sizes = [16, 16, 4], strides = [1, 1, 1]} : vector<18x18x4xbf16> to vector<16x16x4xbf16>
    %c0_7 = arith.constant 0 : index
    %c0_8 = arith.constant 0 : index
    %c8 = arith.constant 8 : index
    %9 = vector.load %arg6[%c0_7, %c0_8, %c8] : memref<16x16x36xbf16, #tpu.memory_space<vmem>>, vector<16x16x4xbf16>
    tpu.vector_store %arg6[%c0_7, %c0_8, %c8], %8 {strides = array<i32>} : memref<16x16x36xbf16, #tpu.memory_space<vmem>>, vector<16x16x4xbf16>,
    %10 = vector.extract_strided_slice %3 {offsets = [1, 0, 0], sizes = [16, 16, 4], strides = [1, 1, 1]} : vector<18x18x4xbf16> to vector<16x16x4xbf16>
    %c0_9 = arith.constant 0 : index
    %c0_10 = arith.constant 0 : index
    %c12 = arith.constant 12 : index
    %11 = vector.load %arg6[%c0_9, %c0_10, %c12] : memref<16x16x36xbf16, #tpu.memory_space<vmem>>, vector<16x16x4xbf16>
    tpu.vector_store %arg6[%c0_9, %c0_10, %c12], %10 {strides = array<i32>} : memref<16x16x36xbf16, #tpu.memory_space<vmem>>, vector<16x16x4xbf16>,
    %12 = vector.extract_strided_slice %3 {offsets = [1, 1, 0], sizes = [16, 16, 4], strides = [1, 1, 1]} : vector<18x18x4xbf16> to vector<16x16x4xbf16>
    %c0_11 = arith.constant 0 : index
    %c0_12 = arith.constant 0 : index
    %c16 = arith.constant 16 : index
    %13 = vector.load %arg6[%c0_11, %c0_12, %c16] : memref<16x16x36xbf16, #tpu.memory_space<vmem>>, vector<16x16x4xbf16>
    tpu.vector_store %arg6[%c0_11, %c0_12, %c16], %12 {strides = array<i32>} : memref<16x16x36xbf16, #tpu.memory_space<vmem>>, vector<16x16x4xbf16>,
    %14 = vector.extract_strided_slice %3 {offsets = [1, 2, 0], sizes = [16, 16, 4], strides = [1, 1, 1]} : vector<18x18x4xbf16> to vector<16x16x4xbf16>
    %c0_13 = arith.constant 0 : index
    %c0_14 = arith.constant 0 : index
    %c20 = arith.constant 20 : index
    %15 = vector.load %arg6[%c0_13, %c0_14, %c20] : memref<16x16x36xbf16, #tpu.memory_space<vmem>>, vector<16x16x4xbf16>
    tpu.vector_store %arg6[%c0_13, %c0_14, %c20], %14 {strides = array<i32>} : memref<16x16x36xbf16, #tpu.memory_space<vmem>>, vector<16x16x4xbf16>,
    %16 = vector.extract_strided_slice %3 {offsets = [2, 0, 0], sizes = [16, 16, 4], strides = [1, 1, 1]} : vector<18x18x4xbf16> to vector<16x16x4xbf16>
    %c0_15 = arith.constant 0 : index
    %c0_16 = arith.constant 0 : index
    %c24 = arith.constant 24 : index
    %17 = vector.load %arg6[%c0_15, %c0_16, %c24] : memref<16x16x36xbf16, #tpu.memory_space<vmem>>, vector<16x16x4xbf16>
    tpu.vector_store %arg6[%c0_15, %c0_16, %c24], %16 {strides = array<i32>} : memref<16x16x36xbf16, #tpu.memory_space<vmem>>, vector<16x16x4xbf16>,
    %18 = vector.extract_strided_slice %3 {offsets = [2, 1, 0], sizes = [16, 16, 4], strides = [1, 1, 1]} : vector<18x18x4xbf16> to vector<16x16x4xbf16>
    %c0_17 = arith.constant 0 : index
    %c0_18 = arith.constant 0 : index
    %c28 = arith.constant 28 : index
    %19 = vector.load %arg6[%c0_17, %c0_18, %c28] : memref<16x16x36xbf16, #tpu.memory_space<vmem>>, vector<16x16x4xbf16>
    tpu.vector_store %arg6[%c0_17, %c0_18, %c28], %18 {strides = array<i32>} : memref<16x16x36xbf16, #tpu.memory_space<vmem>>, vector<16x16x4xbf16>,
    %20 = vector.extract_strided_slice %3 {offsets = [2, 2, 0], sizes = [16, 16, 4], strides = [1, 1, 1]} : vector<18x18x4xbf16> to vector<16x16x4xbf16>
    %c0_19 = arith.constant 0 : index
    %c0_20 = arith.constant 0 : index
    %c32 = arith.constant 32 : index
    %21 = vector.load %arg6[%c0_19, %c0_20, %c32] : memref<16x16x36xbf16, #tpu.memory_space<vmem>>, vector<16x16x4xbf16>
    tpu.vector_store %arg6[%c0_19, %c0_20, %c32], %20 {strides = array<i32>} : memref<16x16x36xbf16, #tpu.memory_space<vmem>>, vector<16x16x4xbf16>,
    %c0_21 = arith.constant 0 : index
    %c0_22 = arith.constant 0 : index
    %c0_23 = arith.constant 0 : index
    %22 = vector.load %arg6[%c0_21, %c0_22, %c0_23] : memref<16x16x36xbf16, #tpu.memory_space<vmem>>, vector<16x16x36xbf16>
    %23 = vector.shape_cast %22 : vector<16x16x36xbf16> to vector<256x36xbf16>
    %c0_24 = arith.constant 0 : index
    %c0_25 = arith.constant 0 : index
    %24 = vector.load %arg3[%c0_24, %c0_25] : memref<36x32xbf16, #tpu.memory_space<vmem>>, vector<36x32xbf16>
    %cst = arith.constant dense<0.000000e+00> : vector<256x32xf32>
    %25 = tpu.matmul %23, %24, %cst {dimension_numbers = #tpu.dot_dimension_numbers<[1], [0], [0], [1], [0, 0, 1, 1], [], []>} : vector<256x36xbf16>, vector<36x32xbf16>, vector<256x32xf32> -> vector<256x32xf32>
    %26 = vector.shape_cast %25 : vector<256x32xf32> to vector<32x8x32xf32>
    %cst_26 = arith.constant dense<0.000000e+00> : vector<8x32xf32>
    %27 = vector.multi_reduction <add>, %26, %cst_26 [0] : vector<32x8x32xf32> to vector<8x32xf32>
    %c0_27 = arith.constant 0 : index
    %c0_28 = arith.constant 0 : index
    %c0_29 = arith.constant 0 : index
    %c0_30 = arith.constant 0 : index
    %28 = vector.load %arg4[%c0_27, %c0_28, %c0_29, %c0_30] : memref<1x1x8x32xf32, #tpu.memory_space<vmem>>, vector<1x1x8x32xf32>
    %29 = vector.shape_cast %28 : vector<1x1x8x32xf32> to vector<8x32xf32>
    %30 = vector.shape_cast %27 : vector<8x32xf32> to vector<1x1x8x32xf32>
    tpu.vector_store %arg4[%c0_27, %c0_28, %c0_29, %c0_30], %30 {strides = array<i32>} : memref<1x1x8x32xf32, #tpu.memory_space<vmem>>, vector<1x1x8x32xf32>,
    %31 = arith.mulf %26, %26 : vector<32x8x32xf32>
    %cst_31 = arith.constant dense<0.000000e+00> : vector<8x32xf32>
    %32 = vector.multi_reduction <add>, %31, %cst_31 [0] : vector<32x8x32xf32> to vector<8x32xf32>
    %c0_32 = arith.constant 0 : index
    %c0_33 = arith.constant 0 : index
    %c0_34 = arith.constant 0 : index
    %c0_35 = arith.constant 0 : index
    %33 = vector.load %arg5[%c0_32, %c0_33, %c0_34, %c0_35] : memref<1x1x8x32xf32, #tpu.memory_space<vmem>>, vector<1x1x8x32xf32>
    %34 = vector.shape_cast %33 : vector<1x1x8x32xf32> to vector<8x32xf32>
    %35 = vector.shape_cast %32 : vector<8x32xf32> to vector<1x1x8x32xf32>
    tpu.vector_store %arg5[%c0_32, %c0_33, %c0_34, %c0_35], %35 {strides = array<i32>} : memref<1x1x8x32xf32, #tpu.memory_space<vmem>>, vector<1x1x8x32xf32>,
    return
  }
  func.func @transform_0(%arg0: i32, %arg1: i32) -> (i32, i32, i32, i32) {
    %c0_i32 = arith.constant 0 : i32
    %c0_i32_0 = arith.constant 0 : i32
    %c0_i32_1 = arith.constant 0 : i32
    %c0_i32_2 = arith.constant 0 : i32
    return %arg0, %c0_i32, %c0_i32_0, %c0_i32_1 : i32, i32, i32, i32
  }
  func.func @transform_1(%arg0: i32, %arg1: i32) -> (i32, i32) {
    %c0_i32 = arith.constant 0 : i32
    %c0_i32_0 = arith.constant 0 : i32
    %c0_i32_1 = arith.constant 0 : i32
    return %c0_i32, %c0_i32_0 : i32, i32
  }
  func.func @transform_2(%arg0: i32, %arg1: i32) -> (i32, i32, i32, i32) {
    %c0_i32 = arith.constant 0 : i32
    %c0_i32_0 = arith.constant 0 : i32
    %c0_i32_1 = arith.constant 0 : i32
    return %arg0, %arg1, %c0_i32, %c0_i32_0 : i32, i32, i32, i32
  }
  func.func @transform_3(%arg0: i32, %arg1: i32) -> (i32, i32, i32, i32) {
    %c0_i32 = arith.constant 0 : i32
    %c0_i32_0 = arith.constant 0 : i32
    %c0_i32_1 = arith.constant 0 : i32
    return %arg0, %arg1, %c0_i32, %c0_i32_0 : i32, i32, i32, i32
  }
}

module attributes {stable_mosaic.version = 11 : i64} {
  func.func @kernel(%arg0: i32, %arg1: i32, %arg2: memref<1x18x18x4xbf16, #tpu.memory_space<vmem>>, %arg3: memref<36x32xbf16, #tpu.memory_space<vmem>>, %arg4: memref<1x32xf32, #tpu.memory_space<vmem>>, %arg5: memref<1x32xf32, #tpu.memory_space<vmem>>, %arg6: memref<1x256x32xf32, #tpu.memory_space<vmem>>, %arg7: memref<16x16x36xbf16, #tpu.memory_space<vmem>>) attributes {dimension_semantics = [#tpu.dimension_semantics<parallel>, #tpu.dimension_semantics<parallel>], iteration_bounds = array<i64: 2, 1>, scalar_prefetch = 0 : i64, scratch_operands = 1 : i64, tpu.core_type = #tpu.core_type<tc>, window_params = [{transform_indices = @transform_0, window_bounds = array<i64: 1, 18, 18, 4>}, {pipeline_mode = #tpu.pipeline_mode<synchronous>, transform_indices = @transform_1, window_bounds = array<i64: 36, 32>}, {pipeline_mode = #tpu.pipeline_mode<synchronous>, transform_indices = @transform_2, window_bounds = array<i64: 1, 32>}, {pipeline_mode = #tpu.pipeline_mode<synchronous>, transform_indices = @transform_3, window_bounds = array<i64: 1, 32>}, {transform_indices = @transform_4, window_bounds = array<i64: 1, 256, 32>}]} {
    %c16_i32 = arith.constant 16 : i32
    %0 = arith.muli %arg1, %c16_i32 : i32
    %c0 = arith.constant 0 : index
    %1 = arith.index_cast %0 : i32 to index
    %c0_0 = arith.constant 0 : index
    %c0_1 = arith.constant 0 : index
    %2 = vector.load %arg2[%c0, %1, %c0_0, %c0_1] : memref<1x18x18x4xbf16, #tpu.memory_space<vmem>>, vector<1x18x18x4xbf16>
    %3 = vector.shape_cast %2 : vector<1x18x18x4xbf16> to vector<18x18x4xbf16>
    %4 = vector.extract_strided_slice %3 {offsets = [0, 0, 0], sizes = [16, 16, 4], strides = [1, 1, 1]} : vector<18x18x4xbf16> to vector<16x16x4xbf16>
    %c0_2 = arith.constant 0 : index
    %c0_3 = arith.constant 0 : index
    %c0_4 = arith.constant 0 : index
    %5 = vector.load %arg7[%c0_2, %c0_3, %c0_4] : memref<16x16x36xbf16, #tpu.memory_space<vmem>>, vector<16x16x4xbf16>
    tpu.vector_store %arg7[%c0_2, %c0_3, %c0_4], %4 {strides = array<i32>} : memref<16x16x36xbf16, #tpu.memory_space<vmem>>, vector<16x16x4xbf16>,
    %6 = vector.extract_strided_slice %3 {offsets = [0, 1, 0], sizes = [16, 16, 4], strides = [1, 1, 1]} : vector<18x18x4xbf16> to vector<16x16x4xbf16>
    %c0_5 = arith.constant 0 : index
    %c0_6 = arith.constant 0 : index
    %c4 = arith.constant 4 : index
    %7 = vector.load %arg7[%c0_5, %c0_6, %c4] : memref<16x16x36xbf16, #tpu.memory_space<vmem>>, vector<16x16x4xbf16>
    tpu.vector_store %arg7[%c0_5, %c0_6, %c4], %6 {strides = array<i32>} : memref<16x16x36xbf16, #tpu.memory_space<vmem>>, vector<16x16x4xbf16>,
    %8 = vector.extract_strided_slice %3 {offsets = [0, 2, 0], sizes = [16, 16, 4], strides = [1, 1, 1]} : vector<18x18x4xbf16> to vector<16x16x4xbf16>
    %c0_7 = arith.constant 0 : index
    %c0_8 = arith.constant 0 : index
    %c8 = arith.constant 8 : index
    %9 = vector.load %arg7[%c0_7, %c0_8, %c8] : memref<16x16x36xbf16, #tpu.memory_space<vmem>>, vector<16x16x4xbf16>
    tpu.vector_store %arg7[%c0_7, %c0_8, %c8], %8 {strides = array<i32>} : memref<16x16x36xbf16, #tpu.memory_space<vmem>>, vector<16x16x4xbf16>,
    %10 = vector.extract_strided_slice %3 {offsets = [1, 0, 0], sizes = [16, 16, 4], strides = [1, 1, 1]} : vector<18x18x4xbf16> to vector<16x16x4xbf16>
    %c0_9 = arith.constant 0 : index
    %c0_10 = arith.constant 0 : index
    %c12 = arith.constant 12 : index
    %11 = vector.load %arg7[%c0_9, %c0_10, %c12] : memref<16x16x36xbf16, #tpu.memory_space<vmem>>, vector<16x16x4xbf16>
    tpu.vector_store %arg7[%c0_9, %c0_10, %c12], %10 {strides = array<i32>} : memref<16x16x36xbf16, #tpu.memory_space<vmem>>, vector<16x16x4xbf16>,
    %12 = vector.extract_strided_slice %3 {offsets = [1, 1, 0], sizes = [16, 16, 4], strides = [1, 1, 1]} : vector<18x18x4xbf16> to vector<16x16x4xbf16>
    %c0_11 = arith.constant 0 : index
    %c0_12 = arith.constant 0 : index
    %c16 = arith.constant 16 : index
    %13 = vector.load %arg7[%c0_11, %c0_12, %c16] : memref<16x16x36xbf16, #tpu.memory_space<vmem>>, vector<16x16x4xbf16>
    tpu.vector_store %arg7[%c0_11, %c0_12, %c16], %12 {strides = array<i32>} : memref<16x16x36xbf16, #tpu.memory_space<vmem>>, vector<16x16x4xbf16>,
    %14 = vector.extract_strided_slice %3 {offsets = [1, 2, 0], sizes = [16, 16, 4], strides = [1, 1, 1]} : vector<18x18x4xbf16> to vector<16x16x4xbf16>
    %c0_13 = arith.constant 0 : index
    %c0_14 = arith.constant 0 : index
    %c20 = arith.constant 20 : index
    %15 = vector.load %arg7[%c0_13, %c0_14, %c20] : memref<16x16x36xbf16, #tpu.memory_space<vmem>>, vector<16x16x4xbf16>
    tpu.vector_store %arg7[%c0_13, %c0_14, %c20], %14 {strides = array<i32>} : memref<16x16x36xbf16, #tpu.memory_space<vmem>>, vector<16x16x4xbf16>,
    %16 = vector.extract_strided_slice %3 {offsets = [2, 0, 0], sizes = [16, 16, 4], strides = [1, 1, 1]} : vector<18x18x4xbf16> to vector<16x16x4xbf16>
    %c0_15 = arith.constant 0 : index
    %c0_16 = arith.constant 0 : index
    %c24 = arith.constant 24 : index
    %17 = vector.load %arg7[%c0_15, %c0_16, %c24] : memref<16x16x36xbf16, #tpu.memory_space<vmem>>, vector<16x16x4xbf16>
    tpu.vector_store %arg7[%c0_15, %c0_16, %c24], %16 {strides = array<i32>} : memref<16x16x36xbf16, #tpu.memory_space<vmem>>, vector<16x16x4xbf16>,
    %18 = vector.extract_strided_slice %3 {offsets = [2, 1, 0], sizes = [16, 16, 4], strides = [1, 1, 1]} : vector<18x18x4xbf16> to vector<16x16x4xbf16>
    %c0_17 = arith.constant 0 : index
    %c0_18 = arith.constant 0 : index
    %c28 = arith.constant 28 : index
    %19 = vector.load %arg7[%c0_17, %c0_18, %c28] : memref<16x16x36xbf16, #tpu.memory_space<vmem>>, vector<16x16x4xbf16>
    tpu.vector_store %arg7[%c0_17, %c0_18, %c28], %18 {strides = array<i32>} : memref<16x16x36xbf16, #tpu.memory_space<vmem>>, vector<16x16x4xbf16>,
    %20 = vector.extract_strided_slice %3 {offsets = [2, 2, 0], sizes = [16, 16, 4], strides = [1, 1, 1]} : vector<18x18x4xbf16> to vector<16x16x4xbf16>
    %c0_19 = arith.constant 0 : index
    %c0_20 = arith.constant 0 : index
    %c32 = arith.constant 32 : index
    %21 = vector.load %arg7[%c0_19, %c0_20, %c32] : memref<16x16x36xbf16, #tpu.memory_space<vmem>>, vector<16x16x4xbf16>
    tpu.vector_store %arg7[%c0_19, %c0_20, %c32], %20 {strides = array<i32>} : memref<16x16x36xbf16, #tpu.memory_space<vmem>>, vector<16x16x4xbf16>,
    %c0_21 = arith.constant 0 : index
    %c0_22 = arith.constant 0 : index
    %c0_23 = arith.constant 0 : index
    %22 = vector.load %arg7[%c0_21, %c0_22, %c0_23] : memref<16x16x36xbf16, #tpu.memory_space<vmem>>, vector<16x16x36xbf16>
    %23 = vector.shape_cast %22 : vector<16x16x36xbf16> to vector<256x36xbf16>
    %c0_24 = arith.constant 0 : index
    %c0_25 = arith.constant 0 : index
    %24 = vector.load %arg3[%c0_24, %c0_25] : memref<36x32xbf16, #tpu.memory_space<vmem>>, vector<36x32xbf16>
    %cst = arith.constant dense<0.000000e+00> : vector<256x32xf32>
    %25 = tpu.matmul %23, %24, %cst {dimension_numbers = #tpu.dot_dimension_numbers<[1], [0], [0], [1], [0, 0, 1, 1], [], []>} : vector<256x36xbf16>, vector<36x32xbf16>, vector<256x32xf32> -> vector<256x32xf32>
    %c0_26 = arith.constant 0 : index
    %c0_27 = arith.constant 0 : index
    %26 = vector.load %arg4[%c0_26, %c0_27] : memref<1x32xf32, #tpu.memory_space<vmem>>, vector<1x32xf32>
    %27 = vector.broadcast %26 : vector<1x32xf32> to vector<256x32xf32>
    %28 = arith.mulf %25, %27 : vector<256x32xf32>
    %c0_28 = arith.constant 0 : index
    %c0_29 = arith.constant 0 : index
    %29 = vector.load %arg5[%c0_28, %c0_29] : memref<1x32xf32, #tpu.memory_space<vmem>>, vector<1x32xf32>
    %30 = vector.broadcast %29 : vector<1x32xf32> to vector<256x32xf32>
    %31 = arith.addf %28, %30 : vector<256x32xf32>
    %cst_30 = arith.constant 0.000000e+00 : f32
    %32 = vector.broadcast %cst_30 : f32 to vector<256x32xf32>
    %33 = arith.maximumf %31, %32 : vector<256x32xf32>
    %c0_31 = arith.constant 0 : index
    %c0_32 = arith.constant 0 : index
    %c0_33 = arith.constant 0 : index
    %34 = vector.load %arg6[%c0_31, %c0_32, %c0_33] : memref<1x256x32xf32, #tpu.memory_space<vmem>>, vector<1x256x32xf32>
    %35 = vector.shape_cast %34 : vector<1x256x32xf32> to vector<256x32xf32>
    %36 = vector.shape_cast %33 : vector<256x32xf32> to vector<1x256x32xf32>
    tpu.vector_store %arg6[%c0_31, %c0_32, %c0_33], %36 {strides = array<i32>} : memref<1x256x32xf32, #tpu.memory_space<vmem>>, vector<1x256x32xf32>,
    return
  }
  func.func @transform_0(%arg0: i32, %arg1: i32) -> (i32, i32, i32, i32) {
    %c0_i32 = arith.constant 0 : i32
    %c0_i32_0 = arith.constant 0 : i32
    %c0_i32_1 = arith.constant 0 : i32
    %c0_i32_2 = arith.constant 0 : i32
    return %arg0, %c0_i32, %c0_i32_0, %c0_i32_1 : i32, i32, i32, i32
  }
  func.func @transform_1(%arg0: i32, %arg1: i32) -> (i32, i32) {
    %c0_i32 = arith.constant 0 : i32
    %c0_i32_0 = arith.constant 0 : i32
    %c0_i32_1 = arith.constant 0 : i32
    return %c0_i32, %c0_i32_0 : i32, i32
  }
  func.func @transform_2(%arg0: i32, %arg1: i32) -> (i32, i32) {
    %c0_i32 = arith.constant 0 : i32
    %c0_i32_0 = arith.constant 0 : i32
    %c0_i32_1 = arith.constant 0 : i32
    return %c0_i32, %c0_i32_0 : i32, i32
  }
  func.func @transform_3(%arg0: i32, %arg1: i32) -> (i32, i32) {
    %c0_i32 = arith.constant 0 : i32
    %c0_i32_0 = arith.constant 0 : i32
    %c0_i32_1 = arith.constant 0 : i32
    return %c0_i32, %c0_i32_0 : i32, i32
  }
  func.func @transform_4(%arg0: i32, %arg1: i32) -> (i32, i32, i32) {
    %c0_i32 = arith.constant 0 : i32
    %c0_i32_0 = arith.constant 0 : i32
    return %arg0, %arg1, %c0_i32 : i32, i32, i32
  }
}

</mosaic_0001>

<llo_original>
// kernel: tile.18
$region0: #{tile.18}
  #allocation0 [shape = 's32[1]{0}', space=sflag, size = 0x4, scoped, tag = 'scoped memory for tile.18']
  %s0 = inlined_call_operand.vmem [shape: f32[8], index: 0, kind: input, shape index: {}]
  %s1 = inlined_call_operand.vmem [shape: f32[4,8], index: 1, kind: output, shape index: {}]
  // Predicated region
  $region2: #{tile.18} parent=0 // pred_check
    _
  $region3: #{tile.18} parent=0 // pred_check_branch
    %3 = sbr.rel (0) target = $region5
  $region4: #{tile.18} parent=0 // pred_region
    _
  $region5: #{tile.18} parent=0 // pred_fallthru
    _
  %v4 = vld [vmem:[%s0] ss:$0 sm:$0xff]
  %5 = vst [vmem:[%s1] sm:$0xf] %v4

// kernel: tile.19
$region0: #{tile.19}
  %s0 = inlined_call_operand.vmem [shape: f32[4,8], index: 0, kind: input, shape index: {}]
  %s1 = inlined_call_operand.vmem [shape: f32[1,32], index: 1, kind: output, shape index: {}]
  $region1: #{tile.19} parent=0
    #allocation0 [shape = 'u8[4096]{0}', space=vmem, size = 0x1000, scoped, tag = 'scoped mem for output reshape']
    #allocation1 [shape = 'u8[4096]{0}', space=vmem, size = 0x1000, scoped, tag = 'scoped mem for input reshape']
    %s3 = sshllo.u32 0, 4
    %v4 = vld [vmem:[%s0] sm:%s3]
    %5 = vst [vmem:[#allocation1] sm:%s3] %v4
    %v6 = vld [vmem:[#allocation1] sm:$0x1]
    %vm7 = vcmask 64512
    %8 = vst.msk [vmem:[#allocation0] sm:$0x1] %vm7, %v6
    %s9 = scalar_lea.vmem [#allocation1], 3
    %v10 = vld [vmem:[%s9] sm:$0x1]
    %11 = vrot.lane.b32.xlu0 %v10, 24
    %v12 = vpop.permute.xlu0 %11
    %vm13 = vcmask 261312
    %14 = vst.msk [vmem:[#allocation0] sm:$0x1] %vm13, %v12
    %s15 = scalar_lea.vmem [#allocation1], 2
    %v16 = vld [vmem:[%s15] sm:$0x1]
    %17 = vrot.lane.b32.xlu0 %v16, 16
    %v18 = vpop.permute.xlu0 %17
    %vm19 = vcmask 195712
    %20 = vst.msk [vmem:[#allocation0] sm:$0x1] %vm19, %v18
    %s21 = scalar_lea.vmem [#allocation1], 1
    %v22 = vld [vmem:[%s21] sm:$0x1]
    %23 = vrot.lane.b32.xlu0 %v22, 8
    %v24 = vpop.permute.xlu0 %23
    %vm25 = vcmask 130112
    %26 = vst.msk [vmem:[#allocation0] sm:$0x1] %vm25, %v24
    %s28 = sshllo.u32 0, 1
    %v30 = vld [vmem:[#allocation0] sm:%s28]
    %s31 = sshllo.u32 0, 1
    %32 = vst [vmem:[%s1] sm:%s31] %v30

// kernel: upsample_block.2
$region0: #{upsample_block.2}
  #allocation0 [shape = 'u32[]', space=smem, size = 0x4, offset = 0x4, fixed_abs, tag = 'smem constant byte address 0x4 - core index']
  #allocation1 [shape = 'u32[144,128]{1,0:T(1,128)}', space=vmem, size = 0x12000, scoped, tag = 'internal scratch']
  #allocation2 [shape = 'bf16[16,16,36]{2,1,0:T(16,128)(2,1)}', space=vmem, size = 0x10000, scoped, tag = 'scratch operand']
  %s0 = inlined_call_operand.vmem [shape: bf16[2,18,18,4], index: 0, kind: input, shape index: {}]
  %s1 = inlined_call_operand.vmem [shape: bf16[36,32], index: 1, kind: input, shape index: {}]
  %s2 = inlined_call_operand.vmem [shape: f32[2,1,8,32], index: 2, kind: output, shape index: {0}]
  %s3 = inlined_call_operand.vmem [shape: f32[2,1,8,32], index: 3, kind: output, shape index: {1}]
  %4 = xla_tuple %s2, %s3
  %s5 = sld [smem:[#allocation0]]
  $region49: #{upsample_block.2} parent=0
    _
  %s7 = ssub.s32 1, %s5
  %s8 = scalar_select 0, %s7, %s5
  loop: start=0, step=1, limit=4
  $region2: #{upsample_block.2} parent=0 // loop_pre_header
    _
  $region3: #{upsample_block.2} parent=0 // loop_header
    %s10 = sphi 0, %s14
    %p11 = scmp.ge.s32.totalorder %s10, 4
    %s17 = sphi 0, %s29
    %s18 = sphi 0, %s25
    %s19 = sphi 0, %s17
    %s20 = sphi 0, %s18
    %s21 = sphi 0, %s19
    %s22 = sphi 0, %s20
    %s32 = sphi 0, %s34
    %s35 = sphi 0, %s32
    %s36 = sphi 0, %s35
    %s52 = sphi 0, %s36
    %s56 = sphi 0, %s56
    %s58 = sphi 0, %s56
    %s59 = sphi 0, %s58
    %s73 = sphi 0, %s59
    %s81 = sphi 0, %s83
    %s84 = sphi 0, %s81
    %s85 = sphi 0, %s84
    %s101 = sphi 0, %s85
    %s109 = sphi 0, %s111
    %s112 = sphi 0, %s109
    %s113 = sphi 0, %s112
    %s129 = sphi 0, %s113
  $region4: #{upsample_block.2} parent=0 // loop_header_branch
    %13 = sbr.rel (%p11) target = $region8
  $region5: #{upsample_block.2} parent=0 // loop_body
    %s15 = ssub.s32 %s10, 1
    %s16 = ssub.s32 %s10, 2
    %s23 = sadd.s32 1, %s18
    %p24 = scmp.ge.s32.totalorder %s23, 1
    %s25 = scalar_select %p24, 0, %s23
    %s26 = sadd.s32 1, %s17
    %s27 = scalar_select %p24, %s26, %s17
    %p28 = scmp.ge.s32.totalorder %s27, 2
    %s29 = scalar_select %p28, 0, %s27
    %s30 = ssub.s32 %s17, %s29
    %p31 = scmp.eq.s32.totalorder %s30, 0
    %s33 = sadd.s32 %s32, 1
    %s34 = scalar_select %p31, %s32, %s33
    %p37 = pneg %p31
    %p38 = scmp.eq.s32.totalorder %s10, 1
    %p39 = por %p37, %p38
    %p40 = scmp.ne.s32.totalorder %s32, %s35
    %p41 = scmp.eq.s32.totalorder %s10, 0
    %p42 = por %p40, %p41
    %p43 = scmp.ne.s32.totalorder %s32, %s35
    %p44 = scmp.eq.s32.totalorder %s15, 1
    %p45 = por %p43, %p44
    %p46 = scmp.ne.s32.totalorder %s35, %s36
    %p47 = scmp.eq.s32.totalorder %s15, 0
    %p48 = por %p46, %p47
    %p49 = scmp.ne.s32.totalorder %s35, %s36
    %p50 = scmp.eq.s32.totalorder %s16, 1
    %p51 = por %p49, %p50
    %p53 = scmp.ne.s32.totalorder %s36, %s52
    %p54 = scmp.eq.s32.totalorder %s16, 0
    %p55 = por %p53, %p54
    %s57 = sadd.s32 %s56, 1
    %p60 = scmp.eq.s32.totalorder %s10, 1
    %p61 = scmp.ne.s32.totalorder %s56, %s58
    %p62 = scmp.eq.s32.totalorder %s10, 0
    %p63 = por %p61, %p62
    %p64 = scmp.ne.s32.totalorder %s56, %s58
    %p65 = scmp.eq.s32.totalorder %s15, 1
    %p66 = por %p64, %p65
    %p67 = scmp.ne.s32.totalorder %s58, %s59
    %p68 = scmp.eq.s32.totalorder %s15, 0
    %p69 = por %p67, %p68
    %p70 = scmp.ne.s32.totalorder %s58, %s59
    %p71 = scmp.eq.s32.totalorder %s16, 1
    %p72 = por %p70, %p71
    %p74 = scmp.ne.s32.totalorder %s59, %s73
    %p75 = scmp.eq.s32.totalorder %s16, 0
    %p76 = por %p74, %p75
    %s77 = ssub.s32 %s17, %s29
    %s78 = ssub.s32 %s18, %s25
    %s79 = sor.u32 %s77, %s78
    %p80 = scmp.eq.s32.totalorder %s79, 0
    %s82 = sadd.s32 %s81, 1
    %s83 = scalar_select %p80, %s81, %s82
    %p86 = pneg %p80
    %p87 = scmp.eq.s32.totalorder %s10, 1
    %p88 = por %p86, %p87
    %p89 = scmp.ne.s32.totalorder %s81, %s84
    %p90 = scmp.eq.s32.totalorder %s10, 0
    %p91 = por %p89, %p90
    %p92 = scmp.ne.s32.totalorder %s81, %s84
    %p93 = scmp.eq.s32.totalorder %s15, 1
    %p94 = por %p92, %p93
    %p95 = scmp.ne.s32.totalorder %s84, %s85
    %p96 = scmp.eq.s32.totalorder %s15, 0
    %p97 = por %p95, %p96
    %p98 = scmp.ne.s32.totalorder %s84, %s85
    %p99 = scmp.eq.s32.totalorder %s16, 1
    %p100 = por %p98, %p99
    %p102 = scmp.ne.s32.totalorder %s85, %s101
    %p103 = scmp.eq.s32.totalorder %s16, 0
    %p104 = por %p102, %p103
    %s105 = ssub.s32 %s17, %s29
    %s106 = ssub.s32 %s18, %s25
    %s107 = sor.u32 %s105, %s106
    %p108 = scmp.eq.s32.totalorder %s107, 0
    %s110 = sadd.s32 %s109, 1
    %s111 = scalar_select %p108, %s109, %s110
    %p114 = pneg %p108
    %p115 = scmp.eq.s32.totalorder %s10, 1
    %p116 = por %p114, %p115
    %p117 = scmp.ne.s32.totalorder %s109, %s112
    %p118 = scmp.eq.s32.totalorder %s10, 0
    %p119 = por %p117, %p118
    %p120 = scmp.ne.s32.totalorder %s109, %s112
    %p121 = scmp.eq.s32.totalorder %s15, 1
    %p122 = por %p120, %p121
    %p123 = scmp.ne.s32.totalorder %s112, %s113
    %p124 = scmp.eq.s32.totalorder %s15, 0
    %p125 = por %p123, %p124
    %p126 = scmp.ne.s32.totalorder %s112, %s113
    %p127 = scmp.eq.s32.totalorder %s16, 1
    %p128 = por %p126, %p127
    %p130 = scmp.ne.s32.totalorder %s113, %s129
    %p131 = scmp.eq.s32.totalorder %s16, 0
    %p132 = por %p130, %p131
    %p133 = scmp.le.s32.totalorder 1, %s10
    %p134 = scmp.lt.s32.totalorder %s10, 3
    %p135 = pnand %p133, %p134
    %p136 = pneg %p135
    // Predicated region
    $region9: #{upsample_block.2} parent=5 // pred_check
      _
    $region10: #{upsample_block.2} parent=5 // pred_check_branch
      %138 = sbr.rel (%p135) target = $region12
    $region11: #{upsample_block.2} parent=5 // pred_region
      %s139 = ssub.s32 %s10, 1
      // Predicated region
      $region13: #{upsample_block.2} parent=11 // pred_check
        %p140 = pneg %p69
      $region14: #{upsample_block.2} parent=11 // pred_check_branch
        %142 = sbr.rel (%p140) target = $region16
      $region15: #{upsample_block.2} parent=11 // pred_region
        _
      $region16: #{upsample_block.2} parent=11 // pred_fallthru
        _
    $region12: #{upsample_block.2} parent=5 // pred_fallthru
      _
    %p143 = scmp.lt.s32.totalorder %s10, 2
    // Predicated region
    $region17: #{upsample_block.2} parent=5 // pred_check
      %p144 = pneg %p143
    $region18: #{upsample_block.2} parent=5 // pred_check_branch
      %146 = sbr.rel (%p144) target = $region20
    $region19: #{upsample_block.2} parent=5 // pred_region
      // Predicated region
      $region21: #{upsample_block.2} parent=19 // pred_check
        %p147 = pneg %p42
      $region22: #{upsample_block.2} parent=19 // pred_check_branch
        %149 = sbr.rel (%p147) target = $region24
      $region23: #{upsample_block.2} parent=19 // pred_region
        %p150 = scmp.lt.s32.totalorder %s17, 1
        %s151 = scalar_select %p150, %s17, 1
        %s152 = smul.addr %s151, 54
        %s153 = smul.addr %s152, 4
        %s154 = scalar_lea.vmem %s0, %s153
      $region24: #{upsample_block.2} parent=19 // pred_fallthru
        _
    $region20: #{upsample_block.2} parent=5 // pred_fallthru
      _
    %p155 = scmp.le.s32.totalorder 1, %s10
    %p156 = scmp.lt.s32.totalorder %s10, 3
    %p157 = pnand %p155, %p156
    %p158 = pneg %p157
    // Predicated region
    $region25: #{upsample_block.2} parent=5 // pred_check
      _
    $region26: #{upsample_block.2} parent=5 // pred_check_branch
      %160 = sbr.rel (%p157) target = $region28
    $region27: #{upsample_block.2} parent=5 // pred_region
      %s161 = ssub.s32 %s10, 1
      %p162 = scmp.lt.s32.totalorder %s19, 1
      %s163 = scalar_select %p162, %s19, 1
      %s164 = smul.addr %s163, 54
      %s165 = smul.addr %s164, 4
      %s166 = scalar_lea.vmem %s0, %s165
      %p167 = pneg %p48
      %p168 = pneg %p45
      %p169 = pneg %p69
      %p170 = pneg %p66
      %p171 = pneg %p97
      %p172 = pneg %p94
      %p173 = scmp.lt.s32.totalorder %s19, 1
      %s174 = scalar_select %p173, %s19, 1
      %p175 = scmp.lt.s32.totalorder %s20, 0
      %s176 = scalar_select %p175, %s20, 0
      %s177 = sadd.s32 %s176, %s174
      %s178 = smul.addr %s177, 8
      %s179 = scalar_lea.vmem %s2, %s178
      %p180 = pneg %p125
      %p181 = pneg %p122
      %p182 = scmp.lt.s32.totalorder %s19, 1
      %s183 = scalar_select %p182, %s19, 1
      %p184 = scmp.lt.s32.totalorder %s20, 0
      %s185 = scalar_select %p184, %s20, 0
      %s186 = sadd.s32 %s185, %s183
      %s187 = smul.addr %s186, 8
      %s188 = scalar_lea.vmem %s3, %s187
      %p189 = scmp.lt.s32.totalorder %s19, 1
      %s190 = scalar_select %p189, %s19, 1
      %s191 = smul.addr %s190, 54
      %s192 = smul.addr %s191, 4
      %s193 = scalar_lea.vmem %s0, %s192
      %p194 = scmp.lt.s32.totalorder %s19, 1
      %s195 = scalar_select %p194, %s19, 1
      %p196 = scmp.lt.s32.totalorder %s20, 0
      %s197 = scalar_select %p196, %s20, 0
      %s198 = sadd.s32 %s197, %s195
      %s199 = smul.addr %s198, 8
      %s200 = scalar_lea.vmem %s2, %s199
      %p201 = scmp.lt.s32.totalorder %s19, 1
      %s202 = scalar_select %p201, %s19, 1
      %p203 = scmp.lt.s32.totalorder %s20, 0
      %s204 = scalar_select %p203, %s20, 0
      %s205 = sadd.s32 %s204, %s202
      %s206 = smul.addr %s205, 8
      %s207 = scalar_lea.vmem %s3, %s206
      %s209 = smul.u32 %s20, 16
      %s210 = smul.u32 %s209, 3
      %s211 = smul.addr %s210, 4
      %s212 = scalar_lea.vmem %s193, %s211
      %v213 = vld [vmem:[%s212] sm:$0xf]
      %v214 = vld [vmem:[%s212 + $0x4] sm:$0xf]
      %v215 = vld [vmem:[%s212 + $0x8] sm:$0x1]
      %v216 = vld [vmem:[%s212 + $0xc] sm:$0xf]
      %v217 = vld [vmem:[%s212 + $0x10] sm:$0xf]
      %v218 = vld [vmem:[%s212 + $0x14] sm:$0x1]
      %v219 = vld [vmem:[%s212 + $0x18] sm:$0xf]
      %v220 = vld [vmem:[%s212 + $0x1c] sm:$0xf]
      %v221 = vld [vmem:[%s212 + $0x20] sm:$0x1]
      %v222 = vld [vmem:[%s212 + $0x24] sm:$0xf]
      %v223 = vld [vmem:[%s212 + $0x28] sm:$0xf]
      %v224 = vld [vmem:[%s212 + $0x2c] sm:$0x1]
      %v225 = vld [vmem:[%s212 + $0x30] sm:$0xf]
      %v226 = vld [vmem:[%s212 + $0x34] sm:$0xf]
      %v227 = vld [vmem:[%s212 + $0x38] sm:$0x1]
      %v228 = vld [vmem:[%s212 + $0x3c] sm:$0xf]
      %v229 = vld [vmem:[%s212 + $0x40] sm:$0xf]
      %v230 = vld [vmem:[%s212 + $0x44] sm:$0x1]
      %v231 = vld [vmem:[%s212 + $0x48] sm:$0xf]
      %v232 = vld [vmem:[%s212 + $0x4c] sm:$0xf]
      %v233 = vld [vmem:[%s212 + $0x50] sm:$0x1]
      %v234 = vld [vmem:[%s212 + $0x54] sm:$0xf]
      %v235 = vld [vmem:[%s212 + $0x58] sm:$0xf]
      %v236 = vld [vmem:[%s212 + $0x5c] sm:$0x1]
      %v237 = vld [vmem:[%s212 + $0x60] sm:$0xf]
      %v238 = vld [vmem:[%s212 + $0x64] sm:$0xf]
      %v239 = vld [vmem:[%s212 + $0x68] sm:$0x1]
      %v240 = vld [vmem:[%s212 + $0x6c] sm:$0xf]
      %v241 = vld [vmem:[%s212 + $0x70] sm:$0xf]
      %v242 = vld [vmem:[%s212 + $0x74] sm:$0x1]
      %v243 = vld [vmem:[%s212 + $0x78] sm:$0xf]
      %v244 = vld [vmem:[%s212 + $0x7c] sm:$0xf]
      %v245 = vld [vmem:[%s212 + $0x80] sm:$0x1]
      %v246 = vld [vmem:[%s212 + $0x84] sm:$0xf]
      %v247 = vld [vmem:[%s212 + $0x88] sm:$0xf]
      %v248 = vld [vmem:[%s212 + $0x8c] sm:$0x1]
      %v249 = vld [vmem:[%s212 + $0x90] sm:$0xf]
      %v250 = vld [vmem:[%s212 + $0x94] sm:$0xf]
      %v251 = vld [vmem:[%s212 + $0x98] sm:$0x1]
      %v252 = vld [vmem:[%s212 + $0x9c] sm:$0xf]
      %v253 = vld [vmem:[%s212 + $0xa0] sm:$0xf]
      %v254 = vld [vmem:[%s212 + $0xa4] sm:$0x1]
      %v255 = vld [vmem:[%s212 + $0xa8] sm:$0xf]
      %v256 = vld [vmem:[%s212 + $0xac] sm:$0xf]
      %v257 = vld [vmem:[%s212 + $0xb0] sm:$0x1]
      %v258 = vld [vmem:[%s212 + $0xb4] sm:$0xf]
      %v259 = vld [vmem:[%s212 + $0xb8] sm:$0xf]
      %v260 = vld [vmem:[%s212 + $0xbc] sm:$0x1]
      %v261 = vld [vmem:[%s212 + $0xc0] sm:$0xf]
      %v262 = vld [vmem:[%s212 + $0xc4] sm:$0xf]
      %v263 = vld [vmem:[%s212 + $0xc8] sm:$0x1]
      %v264 = vld [vmem:[%s212 + $0xcc] sm:$0xf]
      %v265 = vld [vmem:[%s212 + $0xd0] sm:$0xf]
      %v266 = vld [vmem:[%s212 + $0xd4] sm:$0x1]
      %v299 = vunpack.c.l.b16 %v213
      %v300 = vunpack.c.l.b16 %v214
      %v301 = vunpack.c.l.b16 %v216
      %v302 = vunpack.c.l.b16 %v217
      %v303 = vunpack.c.l.b16 %v219
      %v304 = vunpack.c.l.b16 %v220
      %v305 = vunpack.c.l.b16 %v222
      %v306 = vunpack.c.l.b16 %v223
      %v307 = vunpack.c.l.b16 %v225
      %v308 = vunpack.c.l.b16 %v226
      %v309 = vunpack.c.l.b16 %v228
      %v310 = vunpack.c.l.b16 %v229
      %v311 = vunpack.c.l.b16 %v231
      %v312 = vunpack.c.l.b16 %v232
      %v313 = vunpack.c.l.b16 %v234
      %v314 = vunpack.c.l.b16 %v235
      %v315 = vunpack.c.l.b16 %v237
      %v316 = vunpack.c.l.b16 %v238
      %v317 = vunpack.c.l.b16 %v240
      %v318 = vunpack.c.l.b16 %v241
      %v319 = vunpack.c.l.b16 %v243
      %v320 = vunpack.c.l.b16 %v244
      %v321 = vunpack.c.l.b16 %v246
      %v322 = vunpack.c.l.b16 %v247
      %v323 = vunpack.c.l.b16 %v249
      %v324 = vunpack.c.l.b16 %v250
      %v325 = vunpack.c.l.b16 %v252
      %v326 = vunpack.c.l.b16 %v253
      %v327 = vunpack.c.l.b16 %v255
      %v328 = vunpack.c.l.b16 %v256
      %v329 = vunpack.c.l.b16 %v258
      %v330 = vunpack.c.l.b16 %v259
      %v331 = vpack.c.b16 %v300, %v299
      %v332 = vpack.c.b16 %v302, %v301
      %v333 = vpack.c.b16 %v304, %v303
      %v334 = vpack.c.b16 %v306, %v305
      %v335 = vpack.c.b16 %v308, %v307
      %v336 = vpack.c.b16 %v310, %v309
      %v337 = vpack.c.b16 %v312, %v311
      %v338 = vpack.c.b16 %v314, %v313
      %v339 = vpack.c.b16 %v316, %v315
      %v340 = vpack.c.b16 %v318, %v317
      %v341 = vpack.c.b16 %v320, %v319
      %v342 = vpack.c.b16 %v322, %v321
      %v343 = vpack.c.b16 %v324, %v323
      %v344 = vpack.c.b16 %v326, %v325
      %v345 = vpack.c.b16 %v328, %v327
      %v346 = vpack.c.b16 %v330, %v329
      %vm363 = vcmask 31744
      %364 = vst.msk [vmem:[#allocation2] sm:$0xff] %vm363, %v331
      %365 = vst.msk [vmem:[#allocation2 + $0x8] sm:$0xff] %vm363, %v332
      %366 = vst.msk [vmem:[#allocation2 + $0x10] sm:$0xff] %vm363, %v333
      %367 = vst.msk [vmem:[#allocation2 + $0x18] sm:$0xff] %vm363, %v334
      %368 = vst.msk [vmem:[#allocation2 + $0x20] sm:$0xff] %vm363, %v335
      %369 = vst.msk [vmem:[#allocation2 + $0x28] sm:$0xff] %vm363, %v336
      %370 = vst.msk [vmem:[#allocation2 + $0x30] sm:$0xff] %vm363, %v337
      %371 = vst.msk [vmem:[#allocation2 + $0x38] sm:$0xff] %vm363, %v338
      %372 = vst.msk [vmem:[#allocation2 + $0x40] sm:$0xff] %vm363, %v339
      %373 = vst.msk [vmem:[#allocation2 + $0x48] sm:$0xff] %vm363, %v340
      %374 = vst.msk [vmem:[#allocation2 + $0x50] sm:$0xff] %vm363, %v341
      %375 = vst.msk [vmem:[#allocation2 + $0x58] sm:$0xff] %vm363, %v342
      %376 = vst.msk [vmem:[#allocation2 + $0x60] sm:$0xff] %vm363, %v343
      %377 = vst.msk [vmem:[#allocation2 + $0x68] sm:$0xff] %vm363, %v344
      %378 = vst.msk [vmem:[#allocation2 + $0x70] sm:$0xff] %vm363, %v345
      %379 = vst.msk [vmem:[#allocation2 + $0x78] sm:$0xff] %vm363, %v346
      %v396 = vunpack.c.l.b16 %v215
      %v397 = vunpack.c.l.b16 %v218
      %v398 = vunpack.c.l.b16 %v221
      %v399 = vunpack.c.l.b16 %v224
      %v400 = vunpack.c.l.b16 %v227
      %v401 = vunpack.c.l.b16 %v230
      %v402 = vunpack.c.l.b16 %v233
      %v403 = vunpack.c.l.b16 %v236
      %v404 = vunpack.c.l.b16 %v239
      %v405 = vunpack.c.l.b16 %v242
      %v406 = vunpack.c.l.b16 %v245
      %v407 = vunpack.c.l.b16 %v248
      %v408 = vunpack.c.l.b16 %v251
      %v409 = vunpack.c.l.b16 %v254
      %v410 = vunpack.c.l.b16 %v257
      %v411 = vunpack.c.l.b16 %v260
      %v412 = vpack.c.b16 %v396, %v396
      %v413 = vpack.c.b16 %v397, %v397
      %v414 = vpack.c.b16 %v398, %v398
      %v415 = vpack.c.b16 %v399, %v399
      %v416 = vpack.c.b16 %v400, %v400
      %v417 = vpack.c.b16 %v401, %v401
      %v418 = vpack.c.b16 %v402, %v402
      %v419 = vpack.c.b16 %v403, %v403
      %v420 = vpack.c.b16 %v404, %v404
      %v421 = vpack.c.b16 %v405, %v405
      %v422 = vpack.c.b16 %v406, %v406
      %v423 = vpack.c.b16 %v407, %v407
      %v424 = vpack.c.b16 %v408, %v408
      %v425 = vpack.c.b16 %v409, %v409
      %v426 = vpack.c.b16 %v410, %v410
      %v427 = vpack.c.b16 %v411, %v411
      %vm428 = vsmask.f32 7424
      %v430 = vshrl.u32 %v331, 16
      %v432 = vshll.u32 %v331, 16
      %v434 = vrot.slane %v432, 1
      %v435 = vor.u32 %v430, %v434
      %v437 = vshll.u32 %v412, 16
      %v439 = vrot.slane %v437, 1
      %v440 = vsel %vm428, %v435, %v439
      %v442 = vshrl.u32 %v332, 16
      %v444 = vshll.u32 %v332, 16
      %v446 = vrot.slane %v444, 1
      %v447 = vor.u32 %v442, %v446
      %v449 = vshll.u32 %v413, 16
      %v451 = vrot.slane %v449, 1
      %v452 = vsel %vm428, %v447, %v451
      %v454 = vshrl.u32 %v333, 16
      %v456 = vshll.u32 %v333, 16
      %v458 = vrot.slane %v456, 1
      %v459 = vor.u32 %v454, %v458
      %v461 = vshll.u32 %v414, 16
      %v463 = vrot.slane %v461, 1
      %v464 = vsel %vm428, %v459, %v463
      %v466 = vshrl.u32 %v334, 16
      %v468 = vshll.u32 %v334, 16
      %v470 = vrot.slane %v468, 1
      %v471 = vor.u32 %v466, %v470
      %v473 = vshll.u32 %v415, 16
      %v475 = vrot.slane %v473, 1
      %v476 = vsel %vm428, %v471, %v475
      %v478 = vshrl.u32 %v335, 16
      %v480 = vshll.u32 %v335, 16
      %v482 = vrot.slane %v480, 1
      %v483 = vor.u32 %v478, %v482
      %v485 = vshll.u32 %v416, 16
      %v487 = vrot.slane %v485, 1
      %v488 = vsel %vm428, %v483, %v487
      %v490 = vshrl.u32 %v336, 16
      %v492 = vshll.u32 %v336, 16
      %v494 = vrot.slane %v492, 1
      %v495 = vor.u32 %v490, %v494
      %v497 = vshll.u32 %v417, 16
      %v499 = vrot.slane %v497, 1
      %v500 = vsel %vm428, %v495, %v499
      %v502 = vshrl.u32 %v337, 16
      %v504 = vshll.u32 %v337, 16
      %v506 = vrot.slane %v504, 1
      %v507 = vor.u32 %v502, %v506
      %v509 = vshll.u32 %v418, 16
      %v511 = vrot.slane %v509, 1
      %v512 = vsel %vm428, %v507, %v511
      %v514 = vshrl.u32 %v338, 16
      %v516 = vshll.u32 %v338, 16
      %v518 = vrot.slane %v516, 1
      %v519 = vor.u32 %v514, %v518
      %v521 = vshll.u32 %v419, 16
      %v523 = vrot.slane %v521, 1
      %v524 = vsel %vm428, %v519, %v523
      %v526 = vshrl.u32 %v339, 16
      %v528 = vshll.u32 %v339, 16
      %v530 = vrot.slane %v528, 1
      %v531 = vor.u32 %v526, %v530
      %v533 = vshll.u32 %v420, 16
      %v535 = vrot.slane %v533, 1
      %v536 = vsel %vm428, %v531, %v535
      %v538 = vshrl.u32 %v340, 16
      %v540 = vshll.u32 %v340, 16
      %v542 = vrot.slane %v540, 1
      %v543 = vor.u32 %v538, %v542
      %v545 = vshll.u32 %v421, 16
      %v547 = vrot.slane %v545, 1
      %v548 = vsel %vm428, %v543, %v547
      %v550 = vshrl.u32 %v341, 16
      %v552 = vshll.u32 %v341, 16
      %v554 = vrot.slane %v552, 1
      %v555 = vor.u32 %v550, %v554
      %v557 = vshll.u32 %v422, 16
      %v559 = vrot.slane %v557, 1
      %v560 = vsel %vm428, %v555, %v559
      %v562 = vshrl.u32 %v342, 16
      %v564 = vshll.u32 %v342, 16
      %v566 = vrot.slane %v564, 1
      %v567 = vor.u32 %v562, %v566
      %v569 = vshll.u32 %v423, 16
      %v571 = vrot.slane %v569, 1
      %v572 = vsel %vm428, %v567, %v571
      %v574 = vshrl.u32 %v343, 16
      %v576 = vshll.u32 %v343, 16
      %v578 = vrot.slane %v576, 1
      %v579 = vor.u32 %v574, %v578
      %v581 = vshll.u32 %v424, 16
      %v583 = vrot.slane %v581, 1
      %v584 = vsel %vm428, %v579, %v583
      %v586 = vshrl.u32 %v344, 16
      %v588 = vshll.u32 %v344, 16
      %v590 = vrot.slane %v588, 1
      %v591 = vor.u32 %v586, %v590
      %v593 = vshll.u32 %v425, 16
      %v595 = vrot.slane %v593, 1
      %v596 = vsel %vm428, %v591, %v595
      %v598 = vshrl.u32 %v345, 16
      %v600 = vshll.u32 %v345, 16
      %v602 = vrot.slane %v600, 1
      %v603 = vor.u32 %v598, %v602
      %v605 = vshll.u32 %v426, 16
      %v607 = vrot.slane %v605, 1
      %v608 = vsel %vm428, %v603, %v607
      %v610 = vshrl.u32 %v346, 16
      %v612 = vshll.u32 %v346, 16
      %v614 = vrot.slane %v612, 1
      %v615 = vor.u32 %v610, %v614
      %v617 = vshll.u32 %v427, 16
      %v619 = vrot.slane %v617, 1
      %v620 = vsel %vm428, %v615, %v619
      %621 = vrot.lane.b32.xlu0 %v440, 4
      %v622 = vpop.permute.xlu0 %621
      %623 = vrot.lane.b32.xlu0 %v452, 4
      %v624 = vpop.permute.xlu0 %623
      %625 = vrot.lane.b32.xlu0 %v464, 4
      %v626 = vpop.permute.xlu0 %625
      %627 = vrot.lane.b32.xlu0 %v476, 4
      %v628 = vpop.permute.xlu0 %627
      %629 = vrot.lane.b32.xlu0 %v488, 4
      %v630 = vpop.permute.xlu0 %629
      %631 = vrot.lane.b32.xlu0 %v500, 4
      %v632 = vpop.permute.xlu0 %631
      %633 = vrot.lane.b32.xlu0 %v512, 4
      %v634 = vpop.permute.xlu0 %633
      %635 = vrot.lane.b32.xlu0 %v524, 4
      %v636 = vpop.permute.xlu0 %635
      %637 = vrot.lane.b32.xlu0 %v536, 4
      %v638 = vpop.permute.xlu0 %637
      %639 = vrot.lane.b32.xlu0 %v548, 4
      %v640 = vpop.permute.xlu0 %639
      %641 = vrot.lane.b32.xlu0 %v560, 4
      %v642 = vpop.permute.xlu0 %641
      %643 = vrot.lane.b32.xlu0 %v572, 4
      %v644 = vpop.permute.xlu0 %643
      %645 = vrot.lane.b32.xlu0 %v584, 4
      %v646 = vpop.permute.xlu0 %645
      %647 = vrot.lane.b32.xlu0 %v596, 4
      %v648 = vpop.permute.xlu0 %647
      %649 = vrot.lane.b32.xlu0 %v608, 4
      %v650 = vpop.permute.xlu0 %649
      %651 = vrot.lane.b32.xlu0 %v620, 4
      %v652 = vpop.permute.xlu0 %651
      %vm669 = vcmask 64544
      %670 = vst.msk [vmem:[#allocation2] sm:$0xff] %vm669, %v622
      %671 = vst.msk [vmem:[#allocation2 + $0x8] sm:$0xff] %vm669, %v624
      %672 = vst.msk [vmem:[#allocation2 + $0x10] sm:$0xff] %vm669, %v626
      %673 = vst.msk [vmem:[#allocation2 + $0x18] sm:$0xff] %vm669, %v628
      %674 = vst.msk [vmem:[#allocation2 + $0x20] sm:$0xff] %vm669, %v630
      %675 = vst.msk [vmem:[#allocation2 + $0x28] sm:$0xff] %vm669, %v632
      %676 = vst.msk [vmem:[#allocation2 + $0x30] sm:$0xff] %vm669, %v634
      %677 = vst.msk [vmem:[#allocation2 + $0x38] sm:$0xff] %vm669, %v636
      %678 = vst.msk [vmem:[#allocation2 + $0x40] sm:$0xff] %vm669, %v638
      %679 = vst.msk [vmem:[#allocation2 + $0x48] sm:$0xff] %vm669, %v640
      %680 = vst.msk [vmem:[#allocation2 + $0x50] sm:$0xff] %vm669, %v642
      %681 = vst.msk [vmem:[#allocation2 + $0x58] sm:$0xff] %vm669, %v644
      %682 = vst.msk [vmem:[#allocation2 + $0x60] sm:$0xff] %vm669, %v646
      %683 = vst.msk [vmem:[#allocation2 + $0x68] sm:$0xff] %vm669, %v648
      %684 = vst.msk [vmem:[#allocation2 + $0x70] sm:$0xff] %vm669, %v650
      %685 = vst.msk [vmem:[#allocation2 + $0x78] sm:$0xff] %vm669, %v652
      %vm686 = vcmask 1046528
      %v687 = vrot.slane %v331, 1
      %v688 = vrot.slane %v412, 1
      %v689 = vsel %vm686, %v687, %v688
      %v690 = vrot.slane %v332, 1
      %v691 = vrot.slane %v413, 1
      %v692 = vsel %vm686, %v690, %v691
      %v693 = vrot.slane %v333, 1
      %v694 = vrot.slane %v414, 1
      %v695 = vsel %vm686, %v693, %v694
      %v696 = vrot.slane %v334, 1
      %v697 = vrot.slane %v415, 1
      %v698 = vsel %vm686, %v696, %v697
      %v699 = vrot.slane %v335, 1
      %v700 = vrot.slane %v416, 1
      %v701 = vsel %vm686, %v699, %v700
      %v702 = vrot.slane %v336, 1
      %v703 = vrot.slane %v417, 1
      %v704 = vsel %vm686, %v702, %v703
      %v705 = vrot.slane %v337, 1
      %v706 = vrot.slane %v418, 1
      %v707 = vsel %vm686, %v705, %v706
      %v708 = vrot.slane %v338, 1
      %v709 = vrot.slane %v419, 1
      %v710 = vsel %vm686, %v708, %v709
      %v711 = vrot.slane %v339, 1
      %v712 = vrot.slane %v420, 1
      %v713 = vsel %vm686, %v711, %v712
      %v714 = vrot.slane %v340, 1
      %v715 = vrot.slane %v421, 1
      %v716 = vsel %vm686, %v714, %v715
      %v717 = vrot.slane %v341, 1
      %v718 = vrot.slane %v422, 1
      %v719 = vsel %vm686, %v717, %v718
      %v720 = vrot.slane %v342, 1
      %v721 = vrot.slane %v423, 1
      %v722 = vsel %vm686, %v720, %v721
      %v723 = vrot.slane %v343, 1
      %v724 = vrot.slane %v424, 1
      %v725 = vsel %vm686, %v723, %v724
      %v726 = vrot.slane %v344, 1
      %v727 = vrot.slane %v425, 1
      %v728 = vsel %vm686, %v726, %v727
      %v729 = vrot.slane %v345, 1
      %v730 = vrot.slane %v426, 1
      %v731 = vsel %vm686, %v729, %v730
      %v732 = vrot.slane %v346, 1
      %v733 = vrot.slane %v427, 1
      %v734 = vsel %vm686, %v732, %v733
      %735 = vrot.lane.b32.xlu0 %v689, 8
      %v736 = vpop.permute.xlu0 %735
      %737 = vrot.lane.b32.xlu0 %v692, 8
      %v738 = vpop.permute.xlu0 %737
      %739 = vrot.lane.b32.xlu0 %v695, 8
      %v740 = vpop.permute.xlu0 %739
      %741 = vrot.lane.b32.xlu0 %v698, 8
      %v742 = vpop.permute.xlu0 %741
      %743 = vrot.lane.b32.xlu0 %v701, 8
      %v744 = vpop.permute.xlu0 %743
      %745 = vrot.lane.b32.xlu0 %v704, 8
      %v746 = vpop.permute.xlu0 %745
      %747 = vrot.lane.b32.xlu0 %v707, 8
      %v748 = vpop.permute.xlu0 %747
      %749 = vrot.lane.b32.xlu0 %v710, 8
      %v750 = vpop.permute.xlu0 %749
      %751 = vrot.lane.b32.xlu0 %v713, 8
      %v752 = vpop.permute.xlu0 %751
      %753 = vrot.lane.b32.xlu0 %v716, 8
      %v754 = vpop.permute.xlu0 %753
      %755 = vrot.lane.b32.xlu0 %v719, 8
      %v756 = vpop.permute.xlu0 %755
      %757 = vrot.lane.b32.xlu0 %v722, 8
      %v758 = vpop.permute.xlu0 %757
      %759 = vrot.lane.b32.xlu0 %v725, 8
      %v760 = vpop.permute.xlu0 %759
      %761 = vrot.lane.b32.xlu0 %v728, 8
      %v762 = vpop.permute.xlu0 %761
      %763 = vrot.lane.b32.xlu0 %v731, 8
      %v764 = vpop.permute.xlu0 %763
      %765 = vrot.lane.b32.xlu0 %v734, 8
      %v766 = vpop.permute.xlu0 %765
      %vm783 = vcmask 97344
      %784 = vst.msk [vmem:[#allocation2] sm:$0xff] %vm783, %v736
      %785 = vst.msk [vmem:[#allocation2 + $0x8] sm:$0xff] %vm783, %v738
      %786 = vst.msk [vmem:[#allocation2 + $0x10] sm:$0xff] %vm783, %v740
      %787 = vst.msk [vmem:[#allocation2 + $0x18] sm:$0xff] %vm783, %v742
      %788 = vst.msk [vmem:[#allocation2 + $0x20] sm:$0xff] %vm783, %v744
      %789 = vst.msk [vmem:[#allocation2 + $0x28] sm:$0xff] %vm783, %v746
      %790 = vst.msk [vmem:[#allocation2 + $0x30] sm:$0xff] %vm783, %v748
      %791 = vst.msk [vmem:[#allocation2 + $0x38] sm:$0xff] %vm783, %v750
      %792 = vst.msk [vmem:[#allocation2 + $0x40] sm:$0xff] %vm783, %v752
      %793 = vst.msk [vmem:[#allocation2 + $0x48] sm:$0xff] %vm783, %v754
      %794 = vst.msk [vmem:[#allocation2 + $0x50] sm:$0xff] %vm783, %v756
      %795 = vst.msk [vmem:[#allocation2 + $0x58] sm:$0xff] %vm783, %v758
      %796 = vst.msk [vmem:[#allocation2 + $0x60] sm:$0xff] %vm783, %v760
      %797 = vst.msk [vmem:[#allocation2 + $0x68] sm:$0xff] %vm783, %v762
      %798 = vst.msk [vmem:[#allocation2 + $0x70] sm:$0xff] %vm783, %v764
      %799 = vst.msk [vmem:[#allocation2 + $0x78] sm:$0xff] %vm783, %v766
      %v802 = vunpack.c.l.b16 %v261
      %v803 = vunpack.c.l.b16 %v262
      %v804 = vpack.c.b16 %v803, %v802
      %805 = vrot.lane.b32.xlu0 %v332, 12
      %v806 = vpop.permute.xlu0 %805
      %807 = vrot.lane.b32.xlu0 %v333, 12
      %v808 = vpop.permute.xlu0 %807
      %809 = vrot.lane.b32.xlu0 %v334, 12
      %v810 = vpop.permute.xlu0 %809
      %811 = vrot.lane.b32.xlu0 %v335, 12
      %v812 = vpop.permute.xlu0 %811
      %813 = vrot.lane.b32.xlu0 %v336, 12
      %v814 = vpop.permute.xlu0 %813
      %815 = vrot.lane.b32.xlu0 %v337, 12
      %v816 = vpop.permute.xlu0 %815
      %817 = vrot.lane.b32.xlu0 %v338, 12
      %v818 = vpop.permute.xlu0 %817
      %819 = vrot.lane.b32.xlu0 %v339, 12
      %v820 = vpop.permute.xlu0 %819
      %821 = vrot.lane.b32.xlu0 %v340, 12
      %v822 = vpop.permute.xlu0 %821
      %823 = vrot.lane.b32.xlu0 %v341, 12
      %v824 = vpop.permute.xlu0 %823
      %825 = vrot.lane.b32.xlu0 %v342, 12
      %v826 = vpop.permute.xlu0 %825
      %827 = vrot.lane.b32.xlu0 %v343, 12
      %v828 = vpop.permute.xlu0 %827
      %829 = vrot.lane.b32.xlu0 %v344, 12
      %v830 = vpop.permute.xlu0 %829
      %831 = vrot.lane.b32.xlu0 %v345, 12
      %v832 = vpop.permute.xlu0 %831
      %833 = vrot.lane.b32.xlu0 %v346, 12
      %v834 = vpop.permute.xlu0 %833
      %835 = vrot.lane.b32.xlu0 %v804, 12
      %v836 = vpop.permute.xlu0 %835
      %vm853 = vcmask 130144
      %854 = vst.msk [vmem:[#allocation2] sm:$0xff] %vm853, %v806
      %855 = vst.msk [vmem:[#allocation2 + $0x8] sm:$0xff] %vm853, %v808
      %856 = vst.msk [vmem:[#allocation2 + $0x10] sm:$0xff] %vm853, %v810
      %857 = vst.msk [vmem:[#allocation2 + $0x18] sm:$0xff] %vm853, %v812
      %858 = vst.msk [vmem:[#allocation2 + $0x20] sm:$0xff] %vm853, %v814
      %859 = vst.msk [vmem:[#allocation2 + $0x28] sm:$0xff] %vm853, %v816
      %860 = vst.msk [vmem:[#allocation2 + $0x30] sm:$0xff] %vm853, %v818
      %861 = vst.msk [vmem:[#allocation2 + $0x38] sm:$0xff] %vm853, %v820
      %862 = vst.msk [vmem:[#allocation2 + $0x40] sm:$0xff] %vm853, %v822
      %863 = vst.msk [vmem:[#allocation2 + $0x48] sm:$0xff] %vm853, %v824
      %864 = vst.msk [vmem:[#allocation2 + $0x50] sm:$0xff] %vm853, %v826
      %865 = vst.msk [vmem:[#allocation2 + $0x58] sm:$0xff] %vm853, %v828
      %866 = vst.msk [vmem:[#allocation2 + $0x60] sm:$0xff] %vm853, %v830
      %867 = vst.msk [vmem:[#allocation2 + $0x68] sm:$0xff] %vm853, %v832
      %868 = vst.msk [vmem:[#allocation2 + $0x70] sm:$0xff] %vm853, %v834
      %869 = vst.msk [vmem:[#allocation2 + $0x78] sm:$0xff] %vm853, %v836
      %v871 = vunpack.c.l.b16 %v263
      %v872 = vpack.c.b16 %v871, %v871
      %v874 = vshrl.u32 %v804, 16
      %v876 = vshll.u32 %v804, 16
      %v878 = vrot.slane %v876, 1
      %v879 = vor.u32 %v874, %v878
      %v881 = vshll.u32 %v872, 16
      %v883 = vrot.slane %v881, 1
      %v884 = vsel %vm428, %v879, %v883
      %885 = vrot.lane.b32.xlu0 %v452, 16
      %v886 = vpop.permute.xlu0 %885
      %887 = vrot.lane.b32.xlu0 %v464, 16
      %v888 = vpop.permute.xlu0 %887
      %889 = vrot.lane.b32.xlu0 %v476, 16
      %v890 = vpop.permute.xlu0 %889
      %891 = vrot.lane.b32.xlu0 %v488, 16
      %v892 = vpop.permute.xlu0 %891
      %893 = vrot.lane.b32.xlu0 %v500, 16
      %v894 = vpop.permute.xlu0 %893
      %895 = vrot.lane.b32.xlu0 %v512, 16
      %v896 = vpop.permute.xlu0 %895
      %897 = vrot.lane.b32.xlu0 %v524, 16
      %v898 = vpop.permute.xlu0 %897
      %899 = vrot.lane.b32.xlu0 %v536, 16
      %v900 = vpop.permute.xlu0 %899
      %901 = vrot.lane.b32.xlu0 %v548, 16
      %v902 = vpop.permute.xlu0 %901
      %903 = vrot.lane.b32.xlu0 %v560, 16
      %v904 = vpop.permute.xlu0 %903
      %905 = vrot.lane.b32.xlu0 %v572, 16
      %v906 = vpop.permute.xlu0 %905
      %907 = vrot.lane.b32.xlu0 %v584, 16
      %v908 = vpop.permute.xlu0 %907
      %909 = vrot.lane.b32.xlu0 %v596, 16
      %v910 = vpop.permute.xlu0 %909
      %911 = vrot.lane.b32.xlu0 %v608, 16
      %v912 = vpop.permute.xlu0 %911
      %913 = vrot.lane.b32.xlu0 %v620, 16
      %v914 = vpop.permute.xlu0 %913
      %915 = vrot.lane.b32.xlu0 %v884, 16
      %v916 = vpop.permute.xlu0 %915
      %vm933 = vcmask 162944
      %934 = vst.msk [vmem:[#allocation2] sm:$0xff] %vm933, %v886
      %935 = vst.msk [vmem:[#allocation2 + $0x8] sm:$0xff] %vm933, %v888
      %936 = vst.msk [vmem:[#allocation2 + $0x10] sm:$0xff] %vm933, %v890
      %937 = vst.msk [vmem:[#allocation2 + $0x18] sm:$0xff] %vm933, %v892
      %938 = vst.msk [vmem:[#allocation2 + $0x20] sm:$0xff] %vm933, %v894
      %939 = vst.msk [vmem:[#allocation2 + $0x28] sm:$0xff] %vm933, %v896
      %940 = vst.msk [vmem:[#allocation2 + $0x30] sm:$0xff] %vm933, %v898
      %941 = vst.msk [vmem:[#allocation2 + $0x38] sm:$0xff] %vm933, %v900
      %942 = vst.msk [vmem:[#allocation2 + $0x40] sm:$0xff] %vm933, %v902
      %943 = vst.msk [vmem:[#allocation2 + $0x48] sm:$0xff] %vm933, %v904
      %944 = vst.msk [vmem:[#allocation2 + $0x50] sm:$0xff] %vm933, %v906
      %945 = vst.msk [vmem:[#allocation2 + $0x58] sm:$0xff] %vm933, %v908
      %946 = vst.msk [vmem:[#allocation2 + $0x60] sm:$0xff] %vm933, %v910
      %947 = vst.msk [vmem:[#allocation2 + $0x68] sm:$0xff] %vm933, %v912
      %948 = vst.msk [vmem:[#allocation2 + $0x70] sm:$0xff] %vm933, %v914
      %949 = vst.msk [vmem:[#allocation2 + $0x78] sm:$0xff] %vm933, %v916
      %v950 = vrot.slane %v804, 1
      %v951 = vrot.slane %v872, 1
      %v952 = vsel %vm686, %v950, %v951
      %953 = vrot.lane.b32.xlu0 %v692, 20
      %v954 = vpop.permute.xlu0 %953
      %955 = vrot.lane.b32.xlu0 %v695, 20
      %v956 = vpop.permute.xlu0 %955
      %957 = vrot.lane.b32.xlu0 %v698, 20
      %v958 = vpop.permute.xlu0 %957
      %959 = vrot.lane.b32.xlu0 %v701, 20
      %v960 = vpop.permute.xlu0 %959
      %961 = vrot.lane.b32.xlu0 %v704, 20
      %v962 = vpop.permute.xlu0 %961
      %963 = vrot.lane.b32.xlu0 %v707, 20
      %v964 = vpop.permute.xlu0 %963
      %965 = vrot.lane.b32.xlu0 %v710, 20
      %v966 = vpop.permute.xlu0 %965
      %967 = vrot.lane.b32.xlu0 %v713, 20
      %v968 = vpop.permute.xlu0 %967
      %969 = vrot.lane.b32.xlu0 %v716, 20
      %v970 = vpop.permute.xlu0 %969
      %971 = vrot.lane.b32.xlu0 %v719, 20
      %v972 = vpop.permute.xlu0 %971
      %973 = vrot.lane.b32.xlu0 %v722, 20
      %v974 = vpop.permute.xlu0 %973
      %975 = vrot.lane.b32.xlu0 %v725, 20
      %v976 = vpop.permute.xlu0 %975
      %977 = vrot.lane.b32.xlu0 %v728, 20
      %v978 = vpop.permute.xlu0 %977
      %979 = vrot.lane.b32.xlu0 %v731, 20
      %v980 = vpop.permute.xlu0 %979
      %981 = vrot.lane.b32.xlu0 %v734, 20
      %v982 = vpop.permute.xlu0 %981
      %983 = vrot.lane.b32.xlu0 %v952, 20
      %v984 = vpop.permute.xlu0 %983
      %vm1001 = vcmask 195744
      %1002 = vst.msk [vmem:[#allocation2] sm:$0xff] %vm1001, %v954
      %1003 = vst.msk [vmem:[#allocation2 + $0x8] sm:$0xff] %vm1001, %v956
      %1004 = vst.msk [vmem:[#allocation2 + $0x10] sm:$0xff] %vm1001, %v958
      %1005 = vst.msk [vmem:[#allocation2 + $0x18] sm:$0xff] %vm1001, %v960
      %1006 = vst.msk [vmem:[#allocation2 + $0x20] sm:$0xff] %vm1001, %v962
      %1007 = vst.msk [vmem:[#allocation2 + $0x28] sm:$0xff] %vm1001, %v964
      %1008 = vst.msk [vmem:[#allocation2 + $0x30] sm:$0xff] %vm1001, %v966
      %1009 = vst.msk [vmem:[#allocation2 + $0x38] sm:$0xff] %vm1001, %v968
      %1010 = vst.msk [vmem:[#allocation2 + $0x40] sm:$0xff] %vm1001, %v970
      %1011 = vst.msk [vmem:[#allocation2 + $0x48] sm:$0xff] %vm1001, %v972
      %1012 = vst.msk [vmem:[#allocation2 + $0x50] sm:$0xff] %vm1001, %v974
      %1013 = vst.msk [vmem:[#allocation2 + $0x58] sm:$0xff] %vm1001, %v976
      %1014 = vst.msk [vmem:[#allocation2 + $0x60] sm:$0xff] %vm1001, %v978
      %1015 = vst.msk [vmem:[#allocation2 + $0x68] sm:$0xff] %vm1001, %v980
      %1016 = vst.msk [vmem:[#allocation2 + $0x70] sm:$0xff] %vm1001, %v982
      %1017 = vst.msk [vmem:[#allocation2 + $0x78] sm:$0xff] %vm1001, %v984
      %v1020 = vunpack.c.l.b16 %v264
      %v1021 = vunpack.c.l.b16 %v265
      %v1022 = vpack.c.b16 %v1021, %v1020
      %1023 = vrot.lane.b32.xlu0 %v333, 24
      %v1024 = vpop.permute.xlu0 %1023
      %1025 = vrot.lane.b32.xlu0 %v334, 24
      %v1026 = vpop.permute.xlu0 %1025
      %1027 = vrot.lane.b32.xlu0 %v335, 24
      %v1028 = vpop.permute.xlu0 %1027
      %1029 = vrot.lane.b32.xlu0 %v336, 24
      %v1030 = vpop.permute.xlu0 %1029
      %1031 = vrot.lane.b32.xlu0 %v337, 24
      %v1032 = vpop.permute.xlu0 %1031
      %1033 = vrot.lane.b32.xlu0 %v338, 24
      %v1034 = vpop.permute.xlu0 %1033
      %1035 = vrot.lane.b32.xlu0 %v339, 24
      %v1036 = vpop.permute.xlu0 %1035
      %1037 = vrot.lane.b32.xlu0 %v340, 24
      %v1038 = vpop.permute.xlu0 %1037
      %1039 = vrot.lane.b32.xlu0 %v341, 24
      %v1040 = vpop.permute.xlu0 %1039
      %1041 = vrot.lane.b32.xlu0 %v342, 24
      %v1042 = vpop.permute.xlu0 %1041
      %1043 = vrot.lane.b32.xlu0 %v343, 24
      %v1044 = vpop.permute.xlu0 %1043
      %1045 = vrot.lane.b32.xlu0 %v344, 24
      %v1046 = vpop.permute.xlu0 %1045
      %1047 = vrot.lane.b32.xlu0 %v345, 24
      %v1048 = vpop.permute.xlu0 %1047
      %1049 = vrot.lane.b32.xlu0 %v346, 24
      %v1050 = vpop.permute.xlu0 %1049
      %1051 = vrot.lane.b32.xlu0 %v804, 24
      %v1052 = vpop.permute.xlu0 %1051
      %1053 = vrot.lane.b32.xlu0 %v1022, 24
      %v1054 = vpop.permute.xlu0 %1053
      %vm1071 = vcmask 228544
      %1072 = vst.msk [vmem:[#allocation2] sm:$0xff] %vm1071, %v1024
      %1073 = vst.msk [vmem:[#allocation2 + $0x8] sm:$0xff] %vm1071, %v1026
      %1074 = vst.msk [vmem:[#allocation2 + $0x10] sm:$0xff] %vm1071, %v1028
      %1075 = vst.msk [vmem:[#allocation2 + $0x18] sm:$0xff] %vm1071, %v1030
      %1076 = vst.msk [vmem:[#allocation2 + $0x20] sm:$0xff] %vm1071, %v1032
      %1077 = vst.msk [vmem:[#allocation2 + $0x28] sm:$0xff] %vm1071, %v1034
      %1078 = vst.msk [vmem:[#allocation2 + $0x30] sm:$0xff] %vm1071, %v1036
      %1079 = vst.msk [vmem:[#allocation2 + $0x38] sm:$0xff] %vm1071, %v1038
      %1080 = vst.msk [vmem:[#allocation2 + $0x40] sm:$0xff] %vm1071, %v1040
      %1081 = vst.msk [vmem:[#allocation2 + $0x48] sm:$0xff] %vm1071, %v1042
      %1082 = vst.msk [vmem:[#allocation2 + $0x50] sm:$0xff] %vm1071, %v1044
      %1083 = vst.msk [vmem:[#allocation2 + $0x58] sm:$0xff] %vm1071, %v1046
      %1084 = vst.msk [vmem:[#allocation2 + $0x60] sm:$0xff] %vm1071, %v1048
      %1085 = vst.msk [vmem:[#allocation2 + $0x68] sm:$0xff] %vm1071, %v1050
      %1086 = vst.msk [vmem:[#allocation2 + $0x70] sm:$0xff] %vm1071, %v1052
      %1087 = vst.msk [vmem:[#allocation2 + $0x78] sm:$0xff] %vm1071, %v1054
      %v1089 = vunpack.c.l.b16 %v266
      %v1090 = vpack.c.b16 %v1089, %v1089
      %v1092 = vshrl.u32 %v1022, 16
      %v1094 = vshll.u32 %v1022, 16
      %v1096 = vrot.slane %v1094, 1
      %v1097 = vor.u32 %v1092, %v1096
      %v1099 = vshll.u32 %v1090, 16
      %v1101 = vrot.slane %v1099, 1
      %v1102 = vsel %vm428, %v1097, %v1101
      %1103 = vrot.lane.b32.xlu0 %v464, 28
      %v1104 = vpop.permute.xlu0 %1103
      %1105 = vrot.lane.b32.xlu0 %v476, 28
      %v1106 = vpop.permute.xlu0 %1105
      %1107 = vrot.lane.b32.xlu0 %v488, 28
      %v1108 = vpop.permute.xlu0 %1107
      %1109 = vrot.lane.b32.xlu0 %v500, 28
      %v1110 = vpop.permute.xlu0 %1109
      %1111 = vrot.lane.b32.xlu0 %v512, 28
      %v1112 = vpop.permute.xlu0 %1111
      %1113 = vrot.lane.b32.xlu0 %v524, 28
      %v1114 = vpop.permute.xlu0 %1113
      %1115 = vrot.lane.b32.xlu0 %v536, 28
      %v1116 = vpop.permute.xlu0 %1115
      %1117 = vrot.lane.b32.xlu0 %v548, 28
      %v1118 = vpop.permute.xlu0 %1117
      %1119 = vrot.lane.b32.xlu0 %v560, 28
      %v1120 = vpop.permute.xlu0 %1119
      %1121 = vrot.lane.b32.xlu0 %v572, 28
      %v1122 = vpop.permute.xlu0 %1121
      %1123 = vrot.lane.b32.xlu0 %v584, 28
      %v1124 = vpop.permute.xlu0 %1123
      %1125 = vrot.lane.b32.xlu0 %v596, 28
      %v1126 = vpop.permute.xlu0 %1125
      %1127 = vrot.lane.b32.xlu0 %v608, 28
      %v1128 = vpop.permute.xlu0 %1127
      %1129 = vrot.lane.b32.xlu0 %v620, 28
      %v1130 = vpop.permute.xlu0 %1129
      %1131 = vrot.lane.b32.xlu0 %v884, 28
      %v1132 = vpop.permute.xlu0 %1131
      %1133 = vrot.lane.b32.xlu0 %v1102, 28
      %v1134 = vpop.permute.xlu0 %1133
      %vm1151 = vcmask 261344
      %1152 = vst.msk [vmem:[#allocation2] sm:$0xff] %vm1151, %v1104
      %1153 = vst.msk [vmem:[#allocation2 + $0x8] sm:$0xff] %vm1151, %v1106
      %1154 = vst.msk [vmem:[#allocation2 + $0x10] sm:$0xff] %vm1151, %v1108
      %1155 = vst.msk [vmem:[#allocation2 + $0x18] sm:$0xff] %vm1151, %v1110
      %1156 = vst.msk [vmem:[#allocation2 + $0x20] sm:$0xff] %vm1151, %v1112
      %1157 = vst.msk [vmem:[#allocation2 + $0x28] sm:$0xff] %vm1151, %v1114
      %1158 = vst.msk [vmem:[#allocation2 + $0x30] sm:$0xff] %vm1151, %v1116
      %1159 = vst.msk [vmem:[#allocation2 + $0x38] sm:$0xff] %vm1151, %v1118
      %1160 = vst.msk [vmem:[#allocation2 + $0x40] sm:$0xff] %vm1151, %v1120
      %1161 = vst.msk [vmem:[#allocation2 + $0x48] sm:$0xff] %vm1151, %v1122
      %1162 = vst.msk [vmem:[#allocation2 + $0x50] sm:$0xff] %vm1151, %v1124
      %1163 = vst.msk [vmem:[#allocation2 + $0x58] sm:$0xff] %vm1151, %v1126
      %1164 = vst.msk [vmem:[#allocation2 + $0x60] sm:$0xff] %vm1151, %v1128
      %1165 = vst.msk [vmem:[#allocation2 + $0x68] sm:$0xff] %vm1151, %v1130
      %1166 = vst.msk [vmem:[#allocation2 + $0x70] sm:$0xff] %vm1151, %v1132
      %1167 = vst.msk [vmem:[#allocation2 + $0x78] sm:$0xff] %vm1151, %v1134
      %v1168 = vrot.slane %v1022, 1
      %v1169 = vrot.slane %v1090, 1
      %v1170 = vsel %vm686, %v1168, %v1169
      %1171 = vrot.lane.b32.xlu0 %v695, 32
      %v1172 = vpop.permute.xlu0 %1171
      %1173 = vrot.lane.b32.xlu0 %v698, 32
      %v1174 = vpop.permute.xlu0 %1173
      %1175 = vrot.lane.b32.xlu0 %v701, 32
      %v1176 = vpop.permute.xlu0 %1175
      %1177 = vrot.lane.b32.xlu0 %v704, 32
      %v1178 = vpop.permute.xlu0 %1177
      %1179 = vrot.lane.b32.xlu0 %v707, 32
      %v1180 = vpop.permute.xlu0 %1179
      %1181 = vrot.lane.b32.xlu0 %v710, 32
      %v1182 = vpop.permute.xlu0 %1181
      %1183 = vrot.lane.b32.xlu0 %v713, 32
      %v1184 = vpop.permute.xlu0 %1183
      %1185 = vrot.lane.b32.xlu0 %v716, 32
      %v1186 = vpop.permute.xlu0 %1185
      %1187 = vrot.lane.b32.xlu0 %v719, 32
      %v1188 = vpop.permute.xlu0 %1187
      %1189 = vrot.lane.b32.xlu0 %v722, 32
      %v1190 = vpop.permute.xlu0 %1189
      %1191 = vrot.lane.b32.xlu0 %v725, 32
      %v1192 = vpop.permute.xlu0 %1191
      %1193 = vrot.lane.b32.xlu0 %v728, 32
      %v1194 = vpop.permute.xlu0 %1193
      %1195 = vrot.lane.b32.xlu0 %v731, 32
      %v1196 = vpop.permute.xlu0 %1195
      %1197 = vrot.lane.b32.xlu0 %v734, 32
      %v1198 = vpop.permute.xlu0 %1197
      %1199 = vrot.lane.b32.xlu0 %v952, 32
      %v1200 = vpop.permute.xlu0 %1199
      %1201 = vrot.lane.b32.xlu0 %v1170, 32
      %v1202 = vpop.permute.xlu0 %1201
      %vm1219 = vcmask 294144
      %1220 = vst.msk [vmem:[#allocation2] sm:$0xff] %vm1219, %v1172
      %1221 = vst.msk [vmem:[#allocation2 + $0x8] sm:$0xff] %vm1219, %v1174
      %1222 = vst.msk [vmem:[#allocation2 + $0x10] sm:$0xff] %vm1219, %v1176
      %1223 = vst.msk [vmem:[#allocation2 + $0x18] sm:$0xff] %vm1219, %v1178
      %1224 = vst.msk [vmem:[#allocation2 + $0x20] sm:$0xff] %vm1219, %v1180
      %1225 = vst.msk [vmem:[#allocation2 + $0x28] sm:$0xff] %vm1219, %v1182
      %1226 = vst.msk [vmem:[#allocation2 + $0x30] sm:$0xff] %vm1219, %v1184
      %1227 = vst.msk [vmem:[#allocation2 + $0x38] sm:$0xff] %vm1219, %v1186
      %1228 = vst.msk [vmem:[#allocation2 + $0x40] sm:$0xff] %vm1219, %v1188
      %1229 = vst.msk [vmem:[#allocation2 + $0x48] sm:$0xff] %vm1219, %v1190
      %1230 = vst.msk [vmem:[#allocation2 + $0x50] sm:$0xff] %vm1219, %v1192
      %1231 = vst.msk [vmem:[#allocation2 + $0x58] sm:$0xff] %vm1219, %v1194
      %1232 = vst.msk [vmem:[#allocation2 + $0x60] sm:$0xff] %vm1219, %v1196
      %1233 = vst.msk [vmem:[#allocation2 + $0x68] sm:$0xff] %vm1219, %v1198
      %1234 = vst.msk [vmem:[#allocation2 + $0x70] sm:$0xff] %vm1219, %v1200
      %1235 = vst.msk [vmem:[#allocation2 + $0x78] sm:$0xff] %vm1219, %v1202
      %v1236 = vld [vmem:[#allocation2] sm:$0xff]
      %v1237 = vld [vmem:[#allocation2 + $0x8] sm:$0xff]
      %v1238 = vld [vmem:[#allocation2 + $0x10] sm:$0xff]
      %v1239 = vld [vmem:[#allocation2 + $0x18] sm:$0xff]
      %v1240 = vld [vmem:[#allocation2 + $0x20] sm:$0xff]
      %v1241 = vld [vmem:[#allocation2 + $0x28] sm:$0xff]
      %v1242 = vld [vmem:[#allocation2 + $0x30] sm:$0xff]
      %v1243 = vld [vmem:[#allocation2 + $0x38] sm:$0xff]
      %v1244 = vld [vmem:[#allocation2 + $0x40] sm:$0xff]
      %v1245 = vld [vmem:[#allocation2 + $0x48] sm:$0xff]
      %v1246 = vld [vmem:[#allocation2 + $0x50] sm:$0xff]
      %v1247 = vld [vmem:[#allocation2 + $0x58] sm:$0xff]
      %v1248 = vld [vmem:[#allocation2 + $0x60] sm:$0xff]
      %v1249 = vld [vmem:[#allocation2 + $0x68] sm:$0xff]
      %v1250 = vld [vmem:[#allocation2 + $0x70] sm:$0xff]
      %v1251 = vld [vmem:[#allocation2 + $0x78] sm:$0xff]
      %v1252 = vld [vmem:[%s1] sm:$0xf]
      %v1253 = vld [vmem:[%s1 + $0x4] sm:$0xf]
      %v1254 = vld [vmem:[%s1 + $0x8] sm:$0xf]
      %v1255 = vld [vmem:[%s1 + $0xc] sm:$0xf]
      %v1256 = vld [vmem:[%s1 + $0x10] sm:$0x3]
      %v1262 = vunpack.c.l.b16 %v1252
      %v1263 = vunpack.c.l.b16 %v1253
      %v1264 = vunpack.c.l.b16 %v1254
      %v1265 = vunpack.c.l.b16 %v1255
      %v1266 = vunpack.c.l.b16 %v1256
      %v1267 = vpack.c.b16 %v1263, %v1262
      %v1268 = vpack.c.b16 %v1265, %v1264
      %v1269 = vpack.c.b16 %v1266, %v1266
      %vm1272 = vcmask 293888
      %v1274 = vsel %vm1272, %v1236, 0
      %v1277 = vsel %vm1272, %v1237, 0
      %v1280 = vsel %vm1272, %v1238, 0
      %v1283 = vsel %vm1272, %v1239, 0
      %v1286 = vsel %vm1272, %v1240, 0
      %v1289 = vsel %vm1272, %v1241, 0
      %v1292 = vsel %vm1272, %v1242, 0
      %v1295 = vsel %vm1272, %v1243, 0
      %v1298 = vsel %vm1272, %v1244, 0
      %v1301 = vsel %vm1272, %v1245, 0
      %v1304 = vsel %vm1272, %v1246, 0
      %v1307 = vsel %vm1272, %v1247, 0
      %v1310 = vsel %vm1272, %v1248, 0
      %v1313 = vsel %vm1272, %v1249, 0
      %v1316 = vsel %vm1272, %v1250, 0
      %v1319 = vsel %vm1272, %v1251, 0
      %vm1321 = vcmask 1041408
      %v1323 = vsel %vm1321, %v1269, 0
      %1325 = vmatprep.subr.bf16.mxu0 0
      %1326 = vmatpush1.bf16.msra.mxu0 %v1267
      %1327 = vmatprep.subr.bf16.mxu0 0
      %1328 = vmatpush1.bf16.msra.mxu0 %v1268
      %1329 = vmatprep.subr.bf16.mxu0 0
      %1330 = vmatpush1.bf16.msra.mxu0 %v1323
      %1331 = vmatprep.subr.bf16.mxu0 0
      %1332 = vmatpush1.bf16.msra.mxu0 0
      %1333 = vmatprep.subr.bf16.mxu0 0
      %1334 = vmatpush1.bf16.msra.mxu0 0
      %1335 = vmatprep.subr.bf16.mxu0 0
      %1336 = vmatpush1.bf16.msra.mxu0 0
      %1337 = vmatprep.subr.bf16.mxu0 0
      %1338 = vmatpush1.bf16.msra.mxu0 0
      %1339 = vmatprep.subr.bf16.mxu0 0
      %1340 = vmatpush1.bf16.msra.mxu0 0
      %1341 = vmatprep.subr.bf16.mxu0 0
      %1342 = vmatpush1.bf16.msra.mxu0 0
      %1343 = vmatprep.subr.bf16.mxu0 0
      %1344 = vmatpush1.bf16.msra.mxu0 0
      %1345 = vmatprep.subr.bf16.mxu0 0
      %1346 = vmatpush1.bf16.msra.mxu0 0
      %1347 = vmatprep.subr.bf16.mxu0 0
      %1348 = vmatpush1.bf16.msra.mxu0 0
      %1349 = vmatprep.subr.bf16.mxu0 0
      %1350 = vmatpush1.bf16.msra.mxu0 0
      %1351 = vmatprep.subr.bf16.mxu0 0
      %1352 = vmatpush1.bf16.msra.mxu0 0
      %1353 = vmatprep.subr.bf16.mxu0 0
      %1354 = vmatpush1.bf16.msra.mxu0 0
      %1355 = vmatprep.subr.bf16.mxu0 0
      %1356 = vmatpush1.bf16.msra.mxu0 0
      %1357 = vmatprep.mubr.bf16.mxu0 0
      %1358 = vmatmul.mubr.bf16.gmra.mrb[0].mxu0 %v1274
      %v1359 = vpop.f32.mrb[0].mxu0
      %v1360 = vadd.f32 0.0, %v1359
      %v1361 = vpop.f32.mrb[0].mxu0
      %v1362 = vpop.f32.mrb[0].mxu0
      %v1363 = vadd.f32 0.0, %v1362
      %v1364 = vpop.f32.mrb[0].mxu0
      %1365 = vmatprep.mubr.bf16.mxu0 0
      %1366 = vmatmul.mubr.bf16.gmra.mrb[0].mxu0 %v1277
      %v1367 = vpop.f32.mrb[0].mxu0
      %v1368 = vadd.f32 0.0, %v1367
      %v1369 = vpop.f32.mrb[0].mxu0
      %v1370 = vpop.f32.mrb[0].mxu0
      %v1371 = vadd.f32 0.0, %v1370
      %v1372 = vpop.f32.mrb[0].mxu0
      %1373 = vmatprep.mubr.bf16.mxu0 0
      %1374 = vmatmul.mubr.bf16.gmra.mrb[0].mxu0 %v1280
      %v1375 = vpop.f32.mrb[0].mxu0
      %v1376 = vadd.f32 0.0, %v1375
      %v1377 = vpop.f32.mrb[0].mxu0
      %v1378 = vpop.f32.mrb[0].mxu0
      %v1379 = vadd.f32 0.0, %v1378
      %v1380 = vpop.f32.mrb[0].mxu0
      %1381 = vmatprep.mubr.bf16.mxu0 0
      %1382 = vmatmul.mubr.bf16.gmra.mrb[0].mxu0 %v1283
      %v1383 = vpop.f32.mrb[0].mxu0
      %v1384 = vadd.f32 0.0, %v1383
      %v1385 = vpop.f32.mrb[0].mxu0
      %v1386 = vpop.f32.mrb[0].mxu0
      %v1387 = vadd.f32 0.0, %v1386
      %v1388 = vpop.f32.mrb[0].mxu0
      %1389 = vmatprep.mubr.bf16.mxu0 0
      %1390 = vmatmul.mubr.bf16.gmra.mrb[0].mxu0 %v1286
      %v1391 = vpop.f32.mrb[0].mxu0
      %v1392 = vadd.f32 0.0, %v1391
      %v1393 = vpop.f32.mrb[0].mxu0
      %v1394 = vpop.f32.mrb[0].mxu0
      %v1395 = vadd.f32 0.0, %v1394
      %v1396 = vpop.f32.mrb[0].mxu0
      %1397 = vmatprep.mubr.bf16.mxu0 0
      %1398 = vmatmul.mubr.bf16.gmra.mrb[0].mxu0 %v1289
      %v1399 = vpop.f32.mrb[0].mxu0
      %v1400 = vadd.f32 0.0, %v1399
      %v1401 = vpop.f32.mrb[0].mxu0
      %v1402 = vpop.f32.mrb[0].mxu0
      %v1403 = vadd.f32 0.0, %v1402
      %v1404 = vpop.f32.mrb[0].mxu0
      %1405 = vmatprep.mubr.bf16.mxu0 0
      %1406 = vmatmul.mubr.bf16.gmra.mrb[0].mxu0 %v1292
      %v1407 = vpop.f32.mrb[0].mxu0
      %v1408 = vadd.f32 0.0, %v1407
      %v1409 = vpop.f32.mrb[0].mxu0
      %v1410 = vpop.f32.mrb[0].mxu0
      %v1411 = vadd.f32 0.0, %v1410
      %v1412 = vpop.f32.mrb[0].mxu0
      %1413 = vmatprep.mubr.bf16.mxu0 0
      %1414 = vmatmul.mubr.bf16.gmra.mrb[0].mxu0 %v1295
      %v1415 = vpop.f32.mrb[0].mxu0
      %v1416 = vadd.f32 0.0, %v1415
      %v1417 = vpop.f32.mrb[0].mxu0
      %v1418 = vpop.f32.mrb[0].mxu0
      %v1419 = vadd.f32 0.0, %v1418
      %v1420 = vpop.f32.mrb[0].mxu0
      %1421 = vmatprep.mubr.bf16.mxu0 0
      %1422 = vmatmul.mubr.bf16.gmra.mrb[0].mxu0 %v1298
      %v1423 = vpop.f32.mrb[0].mxu0
      %v1424 = vadd.f32 0.0, %v1423
      %v1425 = vpop.f32.mrb[0].mxu0
      %v1426 = vpop.f32.mrb[0].mxu0
      %v1427 = vadd.f32 0.0, %v1426
      %v1428 = vpop.f32.mrb[0].mxu0
      %1429 = vmatprep.mubr.bf16.mxu0 0
      %1430 = vmatmul.mubr.bf16.gmra.mrb[0].mxu0 %v1301
      %v1431 = vpop.f32.mrb[0].mxu0
      %v1432 = vadd.f32 0.0, %v1431
      %v1433 = vpop.f32.mrb[0].mxu0
      %v1434 = vpop.f32.mrb[0].mxu0
      %v1435 = vadd.f32 0.0, %v1434
      %v1436 = vpop.f32.mrb[0].mxu0
      %1437 = vmatprep.mubr.bf16.mxu0 0
      %1438 = vmatmul.mubr.bf16.gmra.mrb[0].mxu0 %v1304
      %v1439 = vpop.f32.mrb[0].mxu0
      %v1440 = vadd.f32 0.0, %v1439
      %v1441 = vpop.f32.mrb[0].mxu0
      %v1442 = vpop.f32.mrb[0].mxu0
      %v1443 = vadd.f32 0.0, %v1442
      %v1444 = vpop.f32.mrb[0].mxu0
      %1445 = vmatprep.mubr.bf16.mxu0 0
      %1446 = vmatmul.mubr.bf16.gmra.mrb[0].mxu0 %v1307
      %v1447 = vpop.f32.mrb[0].mxu0
      %v1448 = vadd.f32 0.0, %v1447
      %v1449 = vpop.f32.mrb[0].mxu0
      %v1450 = vpop.f32.mrb[0].mxu0
      %v1451 = vadd.f32 0.0, %v1450
      %v1452 = vpop.f32.mrb[0].mxu0
      %1453 = vmatprep.mubr.bf16.mxu0 0
      %1454 = vmatmul.mubr.bf16.gmra.mrb[0].mxu0 %v1310
      %v1455 = vpop.f32.mrb[0].mxu0
      %v1456 = vadd.f32 0.0, %v1455
      %v1457 = vpop.f32.mrb[0].mxu0
      %v1458 = vpop.f32.mrb[0].mxu0
      %v1459 = vadd.f32 0.0, %v1458
      %v1460 = vpop.f32.mrb[0].mxu0
      %1461 = vmatprep.mubr.bf16.mxu0 0
      %1462 = vmatmul.mubr.bf16.gmra.mrb[0].mxu0 %v1313
      %v1463 = vpop.f32.mrb[0].mxu0
      %v1464 = vadd.f32 0.0, %v1463
      %v1465 = vpop.f32.mrb[0].mxu0
      %v1466 = vpop.f32.mrb[0].mxu0
      %v1467 = vadd.f32 0.0, %v1466
      %v1468 = vpop.f32.mrb[0].mxu0
      %1469 = vmatprep.mubr.bf16.mxu0 0
      %1470 = vmatmul.mubr.bf16.gmra.mrb[0].mxu0 %v1316
      %v1471 = vpop.f32.mrb[0].mxu0
      %v1472 = vadd.f32 0.0, %v1471
      %v1473 = vpop.f32.mrb[0].mxu0
      %v1474 = vpop.f32.mrb[0].mxu0
      %v1475 = vadd.f32 0.0, %v1474
      %v1476 = vpop.f32.mrb[0].mxu0
      %1477 = vmatprep.mubr.bf16.mxu0 0
      %1478 = vmatmul.mubr.bf16.gmra.mrb[0].mxu0 %v1319
      %v1479 = vpop.f32.mrb[0].mxu0
      %v1480 = vadd.f32 0.0, %v1479
      %v1481 = vpop.f32.mrb[0].mxu0
      %v1482 = vpop.f32.mrb[0].mxu0
      %v1483 = vadd.f32 0.0, %v1482
      %v1484 = vpop.f32.mrb[0].mxu0
      %1485 = vdwg.mxu0
      %vm1486 = vcmask 261120
      %v1487 = vsel %vm1486, %v1360, 0.0
      %v1488 = vsel %vm1486, %v1363, 0.0
      %v1489 = vadd.f32 %v1487, %v1488
      %v1490 = vsel %vm1486, %v1368, 0.0
      %v1491 = vadd.f32 %v1489, %v1490
      %v1492 = vsel %vm1486, %v1371, 0.0
      %v1493 = vadd.f32 %v1491, %v1492
      %v1494 = vsel %vm1486, %v1376, 0.0
      %v1495 = vadd.f32 %v1493, %v1494
      %v1496 = vsel %vm1486, %v1379, 0.0
      %v1497 = vadd.f32 %v1495, %v1496
      %v1498 = vsel %vm1486, %v1384, 0.0
      %v1499 = vadd.f32 %v1497, %v1498
      %v1500 = vsel %vm1486, %v1387, 0.0
      %v1501 = vadd.f32 %v1499, %v1500
      %v1502 = vsel %vm1486, %v1392, 0.0
      %v1503 = vadd.f32 %v1501, %v1502
      %v1504 = vsel %vm1486, %v1395, 0.0
      %v1505 = vadd.f32 %v1503, %v1504
      %v1506 = vsel %vm1486, %v1400, 0.0
      %v1507 = vadd.f32 %v1505, %v1506
      %v1508 = vsel %vm1486, %v1403, 0.0
      %v1509 = vadd.f32 %v1507, %v1508
      %v1510 = vsel %vm1486, %v1408, 0.0
      %v1511 = vadd.f32 %v1509, %v1510
      %v1512 = vsel %vm1486, %v1411, 0.0
      %v1513 = vadd.f32 %v1511, %v1512
      %v1514 = vsel %vm1486, %v1416, 0.0
      %v1515 = vadd.f32 %v1513, %v1514
      %v1516 = vsel %vm1486, %v1419, 0.0
      %v1517 = vadd.f32 %v1515, %v1516
      %v1518 = vsel %vm1486, %v1424, 0.0
      %v1519 = vadd.f32 %v1517, %v1518
      %v1520 = vsel %vm1486, %v1427, 0.0
      %v1521 = vadd.f32 %v1519, %v1520
      %v1522 = vsel %vm1486, %v1432, 0.0
      %v1523 = vadd.f32 %v1521, %v1522
      %v1524 = vsel %vm1486, %v1435, 0.0
      %v1525 = vadd.f32 %v1523, %v1524
      %v1526 = vsel %vm1486, %v1440, 0.0
      %v1527 = vadd.f32 %v1525, %v1526
      %v1528 = vsel %vm1486, %v1443, 0.0
      %v1529 = vadd.f32 %v1527, %v1528
      %v1530 = vsel %vm1486, %v1448, 0.0
      %v1531 = vadd.f32 %v1529, %v1530
      %v1532 = vsel %vm1486, %v1451, 0.0
      %v1533 = vadd.f32 %v1531, %v1532
      %v1534 = vsel %vm1486, %v1456, 0.0
      %v1535 = vadd.f32 %v1533, %v1534
      %v1536 = vsel %vm1486, %v1459, 0.0
      %v1537 = vadd.f32 %v1535, %v1536
      %v1538 = vsel %vm1486, %v1464, 0.0
      %v1539 = vadd.f32 %v1537, %v1538
      %v1540 = vsel %vm1486, %v1467, 0.0
      %v1541 = vadd.f32 %v1539, %v1540
      %v1542 = vsel %vm1486, %v1472, 0.0
      %v1543 = vadd.f32 %v1541, %v1542
      %v1544 = vsel %vm1486, %v1475, 0.0
      %v1545 = vadd.f32 %v1543, %v1544
      %v1546 = vsel %vm1486, %v1480, 0.0
      %v1547 = vadd.f32 %v1545, %v1546
      %v1548 = vsel %vm1486, %v1483, 0.0
      %v1549 = vadd.f32 %v1547, %v1548
      %1550 = vst.msk [vmem:[%s200] sm:$0xff] %vm1486, %v1549
      %v1551 = vmul.f32 %v1360, %v1360
      %v1552 = vmul.f32 %v1363, %v1363
      %v1553 = vmul.f32 %v1368, %v1368
      %v1554 = vmul.f32 %v1371, %v1371
      %v1555 = vmul.f32 %v1376, %v1376
      %v1556 = vmul.f32 %v1379, %v1379
      %v1557 = vmul.f32 %v1384, %v1384
      %v1558 = vmul.f32 %v1387, %v1387
      %v1559 = vmul.f32 %v1392, %v1392
      %v1560 = vmul.f32 %v1395, %v1395
      %v1561 = vmul.f32 %v1400, %v1400
      %v1562 = vmul.f32 %v1403, %v1403
      %v1563 = vmul.f32 %v1408, %v1408
      %v1564 = vmul.f32 %v1411, %v1411
      %v1565 = vmul.f32 %v1416, %v1416
      %v1566 = vmul.f32 %v1419, %v1419
      %v1567 = vmul.f32 %v1424, %v1424
      %v1568 = vmul.f32 %v1427, %v1427
      %v1569 = vmul.f32 %v1432, %v1432
      %v1570 = vmul.f32 %v1435, %v1435
      %v1571 = vmul.f32 %v1440, %v1440
      %v1572 = vmul.f32 %v1443, %v1443
      %v1573 = vmul.f32 %v1448, %v1448
      %v1574 = vmul.f32 %v1451, %v1451
      %v1575 = vmul.f32 %v1456, %v1456
      %v1576 = vmul.f32 %v1459, %v1459
      %v1577 = vmul.f32 %v1464, %v1464
      %v1578 = vmul.f32 %v1467, %v1467
      %v1579 = vmul.f32 %v1472, %v1472
      %v1580 = vmul.f32 %v1475, %v1475
      %v1581 = vmul.f32 %v1480, %v1480
      %v1582 = vmul.f32 %v1483, %v1483
      %v1583 = vsel %vm1486, %v1551, 0.0
      %v1584 = vsel %vm1486, %v1552, 0.0
      %v1585 = vadd.f32 %v1583, %v1584
      %v1586 = vsel %vm1486, %v1553, 0.0
      %v1587 = vadd.f32 %v1585, %v1586
      %v1588 = vsel %vm1486, %v1554, 0.0
      %v1589 = vadd.f32 %v1587, %v1588
      %v1590 = vsel %vm1486, %v1555, 0.0
      %v1591 = vadd.f32 %v1589, %v1590
      %v1592 = vsel %vm1486, %v1556, 0.0
      %v1593 = vadd.f32 %v1591, %v1592
      %v1594 = vsel %vm1486, %v1557, 0.0
      %v1595 = vadd.f32 %v1593, %v1594
      %v1596 = vsel %vm1486, %v1558, 0.0
      %v1597 = vadd.f32 %v1595, %v1596
      %v1598 = vsel %vm1486, %v1559, 0.0
      %v1599 = vadd.f32 %v1597, %v1598
      %v1600 = vsel %vm1486, %v1560, 0.0
      %v1601 = vadd.f32 %v1599, %v1600
      %v1602 = vsel %vm1486, %v1561, 0.0
      %v1603 = vadd.f32 %v1601, %v1602
      %v1604 = vsel %vm1486, %v1562, 0.0
      %v1605 = vadd.f32 %v1603, %v1604
      %v1606 = vsel %vm1486, %v1563, 0.0
      %v1607 = vadd.f32 %v1605, %v1606
      %v1608 = vsel %vm1486, %v1564, 0.0
      %v1609 = vadd.f32 %v1607, %v1608
      %v1610 = vsel %vm1486, %v1565, 0.0
      %v1611 = vadd.f32 %v1609, %v1610
      %v1612 = vsel %vm1486, %v1566, 0.0
      %v1613 = vadd.f32 %v1611, %v1612
      %v1614 = vsel %vm1486, %v1567, 0.0
      %v1615 = vadd.f32 %v1613, %v1614
      %v1616 = vsel %vm1486, %v1568, 0.0
      %v1617 = vadd.f32 %v1615, %v1616
      %v1618 = vsel %vm1486, %v1569, 0.0
      %v1619 = vadd.f32 %v1617, %v1618
      %v1620 = vsel %vm1486, %v1570, 0.0
      %v1621 = vadd.f32 %v1619, %v1620
      %v1622 = vsel %vm1486, %v1571, 0.0
      %v1623 = vadd.f32 %v1621, %v1622
      %v1624 = vsel %vm1486, %v1572, 0.0
      %v1625 = vadd.f32 %v1623, %v1624
      %v1626 = vsel %vm1486, %v1573, 0.0
      %v1627 = vadd.f32 %v1625, %v1626
      %v1628 = vsel %vm1486, %v1574, 0.0
      %v1629 = vadd.f32 %v1627, %v1628
      %v1630 = vsel %vm1486, %v1575, 0.0
      %v1631 = vadd.f32 %v1629, %v1630
      %v1632 = vsel %vm1486, %v1576, 0.0
      %v1633 = vadd.f32 %v1631, %v1632
      %v1634 = vsel %vm1486, %v1577, 0.0
      %v1635 = vadd.f32 %v1633, %v1634
      %v1636 = vsel %vm1486, %v1578, 0.0
      %v1637 = vadd.f32 %v1635, %v1636
      %v1638 = vsel %vm1486, %v1579, 0.0
      %v1639 = vadd.f32 %v1637, %v1638
      %v1640 = vsel %vm1486, %v1580, 0.0
      %v1641 = vadd.f32 %v1639, %v1640
      %v1642 = vsel %vm1486, %v1581, 0.0
      %v1643 = vadd.f32 %v1641, %v1642
      %v1644 = vsel %vm1486, %v1582, 0.0
      %v1645 = vadd.f32 %v1643, %v1644
      %1646 = vst.msk [vmem:[%s207] sm:$0xff] %vm1486, %v1645
      %p1647 = scmp.lt.s32.totalorder %s19, 1
      %s1648 = scalar_select %p1647, %s19, 1
      %p1649 = scmp.lt.s32.totalorder %s20, 0
      %s1650 = scalar_select %p1649, %s20, 0
      %s1651 = sadd.s32 %s1650, %s1648
      %s1652 = smul.addr %s1651, 8
      %s1653 = scalar_lea.vmem %s2, %s1652
      %p1654 = scmp.lt.s32.totalorder %s19, 1
      %s1655 = scalar_select %p1654, %s19, 1
      %p1656 = scmp.lt.s32.totalorder %s20, 0
      %s1657 = scalar_select %p1656, %s20, 0
      %s1658 = sadd.s32 %s1657, %s1655
      %s1659 = smul.addr %s1658, 8
      %s1660 = scalar_lea.vmem %s3, %s1659
      // Predicated region
      $region29: #{upsample_block.2} parent=27 // pred_check
        %p1661 = pneg %p94
      $region30: #{upsample_block.2} parent=27 // pred_check_branch
        %1663 = sbr.rel (%p1661) target = $region32
      $region31: #{upsample_block.2} parent=27 // pred_region
        _
      $region32: #{upsample_block.2} parent=27 // pred_fallthru
        _
      // Predicated region
      $region33: #{upsample_block.2} parent=27 // pred_check
        %p1664 = pneg %p122
      $region34: #{upsample_block.2} parent=27 // pred_check_branch
        %1666 = sbr.rel (%p1664) target = $region36
      $region35: #{upsample_block.2} parent=27 // pred_region
        _
      $region36: #{upsample_block.2} parent=27 // pred_fallthru
        _
    $region28: #{upsample_block.2} parent=5 // pred_fallthru
      _
    %p1667 = scmp.le.s32.totalorder 2, %s10
    // Predicated region
    $region37: #{upsample_block.2} parent=5 // pred_check
      %p1668 = pneg %p1667
    $region38: #{upsample_block.2} parent=5 // pred_check_branch
      %1670 = sbr.rel (%p1668) target = $region40
    $region39: #{upsample_block.2} parent=5 // pred_region
      %s1671 = ssub.s32 %s10, 2
      // Predicated region
      $region41: #{upsample_block.2} parent=39 // pred_check
        %p1672 = pneg %p100
      $region42: #{upsample_block.2} parent=39 // pred_check_branch
        %1674 = sbr.rel (%p1672) target = $region44
      $region43: #{upsample_block.2} parent=39 // pred_region
        %p1675 = scmp.lt.s32.totalorder %s21, 1
        %s1676 = scalar_select %p1675, %s21, 1
        %p1677 = scmp.lt.s32.totalorder %s22, 0
        %s1678 = scalar_select %p1677, %s22, 0
        %s1679 = sadd.s32 %s1678, %s1676
        %s1680 = smul.addr %s1679, 8
        %s1681 = scalar_lea.vmem %s2, %s1680
      $region44: #{upsample_block.2} parent=39 // pred_fallthru
        _
      // Predicated region
      $region45: #{upsample_block.2} parent=39 // pred_check
        %p1682 = pneg %p128
      $region46: #{upsample_block.2} parent=39 // pred_check_branch
        %1684 = sbr.rel (%p1682) target = $region48
      $region47: #{upsample_block.2} parent=39 // pred_region
        %p1685 = scmp.lt.s32.totalorder %s21, 1
        %s1686 = scalar_select %p1685, %s21, 1
        %p1687 = scmp.lt.s32.totalorder %s22, 0
        %s1688 = scalar_select %p1687, %s22, 0
        %s1689 = sadd.s32 %s1688, %s1686
        %s1690 = smul.addr %s1689, 8
        %s1691 = scalar_lea.vmem %s3, %s1690
      $region48: #{upsample_block.2} parent=39 // pred_fallthru
        _
    $region40: #{upsample_block.2} parent=5 // pred_fallthru
      _
  $region6: #{upsample_block.2} parent=0 // loop_footer
    %s14 = sadd.s32 1, %s10
  $region7: #{upsample_block.2} parent=0 // loop_footer_branch
    %9 = sbr.rel target = $region3
  $region8: #{upsample_block.2} parent=0 // loop_exit
    _

// kernel: upsample_block.3
$region0: #{upsample_block.3}
  #allocation0 [shape = 'u32[]', space=smem, size = 0x4, offset = 0x4, fixed_abs, tag = 'smem constant byte address 0x4 - core index']
  #allocation1 [shape = 'u32[144,128]{1,0:T(1,128)}', space=vmem, size = 0x12000, scoped, tag = 'internal scratch']
  #allocation2 [shape = 'bf16[16,16,36]{2,1,0:T(16,128)(2,1)}', space=vmem, size = 0x10000, scoped, tag = 'scratch operand']
  %s0 = inlined_call_operand.vmem [shape: bf16[2,18,18,4], index: 0, kind: input, shape index: {}]
  %s1 = inlined_call_operand.vmem [shape: bf16[36,32], index: 1, kind: input, shape index: {}]
  %s2 = inlined_call_operand.vmem [shape: f32[1,32], index: 2, kind: input, shape index: {}]
  %s3 = inlined_call_operand.vmem [shape: f32[1,32], index: 3, kind: input, shape index: {}]
  %s4 = inlined_call_operand.vmem [shape: f32[2,256,32], index: 4, kind: output, shape index: {}]
  %s5 = sld [smem:[#allocation0]]
  $region49: #{upsample_block.3} parent=0
    _
  %s7 = ssub.s32 1, %s5
  %s8 = scalar_select 0, %s7, %s5
  loop: start=0, step=1, limit=4
  $region2: #{upsample_block.3} parent=0 // loop_pre_header
    _
  $region3: #{upsample_block.3} parent=0 // loop_header
    %s10 = sphi 0, %s14
    %p11 = scmp.ge.s32.totalorder %s10, 4
    %s17 = sphi 0, %s29
    %s18 = sphi 0, %s25
    %s19 = sphi 0, %s17
    %s20 = sphi 0, %s18
    %s21 = sphi 0, %s19
    %s22 = sphi 0, %s20
    %s32 = sphi 0, %s34
    %s35 = sphi 0, %s32
    %s36 = sphi 0, %s35
    %s52 = sphi 0, %s36
    %s56 = sphi 0, %s56
    %s58 = sphi 0, %s56
    %s59 = sphi 0, %s58
    %s73 = sphi 0, %s59
    %s77 = sphi 0, %s77
    %s79 = sphi 0, %s77
    %s80 = sphi 0, %s79
    %s94 = sphi 0, %s80
    %s98 = sphi 0, %s98
    %s100 = sphi 0, %s98
    %s101 = sphi 0, %s100
    %s115 = sphi 0, %s101
    %s123 = sphi 0, %s125
    %s126 = sphi 0, %s123
    %s127 = sphi 0, %s126
    %s143 = sphi 0, %s127
  $region4: #{upsample_block.3} parent=0 // loop_header_branch
    %13 = sbr.rel (%p11) target = $region8
  $region5: #{upsample_block.3} parent=0 // loop_body
    %s15 = ssub.s32 %s10, 1
    %s16 = ssub.s32 %s10, 2
    %s23 = sadd.s32 1, %s18
    %p24 = scmp.ge.s32.totalorder %s23, 1
    %s25 = scalar_select %p24, 0, %s23
    %s26 = sadd.s32 1, %s17
    %s27 = scalar_select %p24, %s26, %s17
    %p28 = scmp.ge.s32.totalorder %s27, 2
    %s29 = scalar_select %p28, 0, %s27
    %s30 = ssub.s32 %s17, %s29
    %p31 = scmp.eq.s32.totalorder %s30, 0
    %s33 = sadd.s32 %s32, 1
    %s34 = scalar_select %p31, %s32, %s33
    %p37 = pneg %p31
    %p38 = scmp.eq.s32.totalorder %s10, 1
    %p39 = por %p37, %p38
    %p40 = scmp.ne.s32.totalorder %s32, %s35
    %p41 = scmp.eq.s32.totalorder %s10, 0
    %p42 = por %p40, %p41
    %p43 = scmp.ne.s32.totalorder %s32, %s35
    %p44 = scmp.eq.s32.totalorder %s15, 1
    %p45 = por %p43, %p44
    %p46 = scmp.ne.s32.totalorder %s35, %s36
    %p47 = scmp.eq.s32.totalorder %s15, 0
    %p48 = por %p46, %p47
    %p49 = scmp.ne.s32.totalorder %s35, %s36
    %p50 = scmp.eq.s32.totalorder %s16, 1
    %p51 = por %p49, %p50
    %p53 = scmp.ne.s32.totalorder %s36, %s52
    %p54 = scmp.eq.s32.totalorder %s16, 0
    %p55 = por %p53, %p54
    %s57 = sadd.s32 %s56, 1
    %p60 = scmp.eq.s32.totalorder %s10, 1
    %p61 = scmp.ne.s32.totalorder %s56, %s58
    %p62 = scmp.eq.s32.totalorder %s10, 0
    %p63 = por %p61, %p62
    %p64 = scmp.ne.s32.totalorder %s56, %s58
    %p65 = scmp.eq.s32.totalorder %s15, 1
    %p66 = por %p64, %p65
    %p67 = scmp.ne.s32.totalorder %s58, %s59
    %p68 = scmp.eq.s32.totalorder %s15, 0
    %p69 = por %p67, %p68
    %p70 = scmp.ne.s32.totalorder %s58, %s59
    %p71 = scmp.eq.s32.totalorder %s16, 1
    %p72 = por %p70, %p71
    %p74 = scmp.ne.s32.totalorder %s59, %s73
    %p75 = scmp.eq.s32.totalorder %s16, 0
    %p76 = por %p74, %p75
    %s78 = sadd.s32 %s77, 1
    %p81 = scmp.eq.s32.totalorder %s10, 1
    %p82 = scmp.ne.s32.totalorder %s77, %s79
    %p83 = scmp.eq.s32.totalorder %s10, 0
    %p84 = por %p82, %p83
    %p85 = scmp.ne.s32.totalorder %s77, %s79
    %p86 = scmp.eq.s32.totalorder %s15, 1
    %p87 = por %p85, %p86
    %p88 = scmp.ne.s32.totalorder %s79, %s80
    %p89 = scmp.eq.s32.totalorder %s15, 0
    %p90 = por %p88, %p89
    %p91 = scmp.ne.s32.totalorder %s79, %s80
    %p92 = scmp.eq.s32.totalorder %s16, 1
    %p93 = por %p91, %p92
    %p95 = scmp.ne.s32.totalorder %s80, %s94
    %p96 = scmp.eq.s32.totalorder %s16, 0
    %p97 = por %p95, %p96
    %s99 = sadd.s32 %s98, 1
    %p102 = scmp.eq.s32.totalorder %s10, 1
    %p103 = scmp.ne.s32.totalorder %s98, %s100
    %p104 = scmp.eq.s32.totalorder %s10, 0
    %p105 = por %p103, %p104
    %p106 = scmp.ne.s32.totalorder %s98, %s100
    %p107 = scmp.eq.s32.totalorder %s15, 1
    %p108 = por %p106, %p107
    %p109 = scmp.ne.s32.totalorder %s100, %s101
    %p110 = scmp.eq.s32.totalorder %s15, 0
    %p111 = por %p109, %p110
    %p112 = scmp.ne.s32.totalorder %s100, %s101
    %p113 = scmp.eq.s32.totalorder %s16, 1
    %p114 = por %p112, %p113
    %p116 = scmp.ne.s32.totalorder %s101, %s115
    %p117 = scmp.eq.s32.totalorder %s16, 0
    %p118 = por %p116, %p117
    %s119 = ssub.s32 %s17, %s29
    %s120 = ssub.s32 %s18, %s25
    %s121 = sor.u32 %s119, %s120
    %p122 = scmp.eq.s32.totalorder %s121, 0
    %s124 = sadd.s32 %s123, 1
    %s125 = scalar_select %p122, %s123, %s124
    %p128 = pneg %p122
    %p129 = scmp.eq.s32.totalorder %s10, 1
    %p130 = por %p128, %p129
    %p131 = scmp.ne.s32.totalorder %s123, %s126
    %p132 = scmp.eq.s32.totalorder %s10, 0
    %p133 = por %p131, %p132
    %p134 = scmp.ne.s32.totalorder %s123, %s126
    %p135 = scmp.eq.s32.totalorder %s15, 1
    %p136 = por %p134, %p135
    %p137 = scmp.ne.s32.totalorder %s126, %s127
    %p138 = scmp.eq.s32.totalorder %s15, 0
    %p139 = por %p137, %p138
    %p140 = scmp.ne.s32.totalorder %s126, %s127
    %p141 = scmp.eq.s32.totalorder %s16, 1
    %p142 = por %p140, %p141
    %p144 = scmp.ne.s32.totalorder %s127, %s143
    %p145 = scmp.eq.s32.totalorder %s16, 0
    %p146 = por %p144, %p145
    %p147 = scmp.le.s32.totalorder 1, %s10
    %p148 = scmp.lt.s32.totalorder %s10, 3
    %p149 = pnand %p147, %p148
    %p150 = pneg %p149
    // Predicated region
    $region9: #{upsample_block.3} parent=5 // pred_check
      _
    $region10: #{upsample_block.3} parent=5 // pred_check_branch
      %152 = sbr.rel (%p149) target = $region12
    $region11: #{upsample_block.3} parent=5 // pred_region
      %s153 = ssub.s32 %s10, 1
      // Predicated region
      $region13: #{upsample_block.3} parent=11 // pred_check
        %p154 = pneg %p69
      $region14: #{upsample_block.3} parent=11 // pred_check_branch
        %156 = sbr.rel (%p154) target = $region16
      $region15: #{upsample_block.3} parent=11 // pred_region
        _
      $region16: #{upsample_block.3} parent=11 // pred_fallthru
        _
      // Predicated region
      $region17: #{upsample_block.3} parent=11 // pred_check
        %p157 = pneg %p90
      $region18: #{upsample_block.3} parent=11 // pred_check_branch
        %159 = sbr.rel (%p157) target = $region20
      $region19: #{upsample_block.3} parent=11 // pred_region
        _
      $region20: #{upsample_block.3} parent=11 // pred_fallthru
        _
      // Predicated region
      $region21: #{upsample_block.3} parent=11 // pred_check
        %p160 = pneg %p111
      $region22: #{upsample_block.3} parent=11 // pred_check_branch
        %162 = sbr.rel (%p160) target = $region24
      $region23: #{upsample_block.3} parent=11 // pred_region
        _
      $region24: #{upsample_block.3} parent=11 // pred_fallthru
        _
    $region12: #{upsample_block.3} parent=5 // pred_fallthru
      _
    %p163 = scmp.lt.s32.totalorder %s10, 2
    // Predicated region
    $region25: #{upsample_block.3} parent=5 // pred_check
      %p164 = pneg %p163
    $region26: #{upsample_block.3} parent=5 // pred_check_branch
      %166 = sbr.rel (%p164) target = $region28
    $region27: #{upsample_block.3} parent=5 // pred_region
      // Predicated region
      $region29: #{upsample_block.3} parent=27 // pred_check
        %p167 = pneg %p42
      $region30: #{upsample_block.3} parent=27 // pred_check_branch
        %169 = sbr.rel (%p167) target = $region32
      $region31: #{upsample_block.3} parent=27 // pred_region
        %p170 = scmp.lt.s32.totalorder %s17, 1
        %s171 = scalar_select %p170, %s17, 1
        %s172 = smul.addr %s171, 54
        %s173 = smul.addr %s172, 4
        %s174 = scalar_lea.vmem %s0, %s173
      $region32: #{upsample_block.3} parent=27 // pred_fallthru
        _
    $region28: #{upsample_block.3} parent=5 // pred_fallthru
      _
    %p175 = scmp.le.s32.totalorder 1, %s10
    %p176 = scmp.lt.s32.totalorder %s10, 3
    %p177 = pnand %p175, %p176
    %p178 = pneg %p177
    // Predicated region
    $region33: #{upsample_block.3} parent=5 // pred_check
      _
    $region34: #{upsample_block.3} parent=5 // pred_check_branch
      %180 = sbr.rel (%p177) target = $region36
    $region35: #{upsample_block.3} parent=5 // pred_region
      %s181 = ssub.s32 %s10, 1
      %p182 = scmp.lt.s32.totalorder %s19, 1
      %s183 = scalar_select %p182, %s19, 1
      %s184 = smul.addr %s183, 54
      %s185 = smul.addr %s184, 4
      %s186 = scalar_lea.vmem %s0, %s185
      %p187 = pneg %p48
      %p188 = pneg %p45
      %p189 = pneg %p69
      %p190 = pneg %p66
      %p191 = pneg %p90
      %p192 = pneg %p87
      %p193 = pneg %p111
      %p194 = pneg %p108
      %p195 = pneg %p139
      %p196 = pneg %p136
      %s197 = smul.u32 32, %s20
      %p198 = scmp.lt.s32.totalorder %s19, 1
      %s199 = scalar_select %p198, %s19, 1
      %p200 = scmp.lt.s32.totalorder %s197, 31
      %s201 = scalar_select %p200, %s197, 31
      %s202 = smul.addr %s199, 32
      %s203 = sadd.s32 %s201, %s202
      %s204 = smul.addr %s203, 8
      %s205 = scalar_lea.vmem %s4, %s204
      %p206 = scmp.lt.s32.totalorder %s19, 1
      %s207 = scalar_select %p206, %s19, 1
      %s208 = smul.addr %s207, 54
      %s209 = smul.addr %s208, 4
      %s210 = scalar_lea.vmem %s0, %s209
      %s211 = smul.u32 32, %s20
      %p212 = scmp.lt.s32.totalorder %s19, 1
      %s213 = scalar_select %p212, %s19, 1
      %p214 = scmp.lt.s32.totalorder %s211, 31
      %s215 = scalar_select %p214, %s211, 31
      %s216 = smul.addr %s213, 32
      %s217 = sadd.s32 %s215, %s216
      %s218 = smul.addr %s217, 8
      %s219 = scalar_lea.vmem %s4, %s218
      %s220 = smul.u32 32, %s20
      %s222 = smul.u32 %s20, 16
      %s223 = smul.u32 %s222, 3
      %s224 = smul.addr %s223, 4
      %s225 = scalar_lea.vmem %s210, %s224
      %v226 = vld [vmem:[%s225] sm:$0xf]
      %v227 = vld [vmem:[%s225 + $0x4] sm:$0xf]
      %v228 = vld [vmem:[%s225 + $0x8] sm:$0x1]
      %v229 = vld [vmem:[%s225 + $0xc] sm:$0xf]
      %v230 = vld [vmem:[%s225 + $0x10] sm:$0xf]
      %v231 = vld [vmem:[%s225 + $0x14] sm:$0x1]
      %v232 = vld [vmem:[%s225 + $0x18] sm:$0xf]
      %v233 = vld [vmem:[%s225 + $0x1c] sm:$0xf]
      %v234 = vld [vmem:[%s225 + $0x20] sm:$0x1]
      %v235 = vld [vmem:[%s225 + $0x24] sm:$0xf]
      %v236 = vld [vmem:[%s225 + $0x28] sm:$0xf]
      %v237 = vld [vmem:[%s225 + $0x2c] sm:$0x1]
      %v238 = vld [vmem:[%s225 + $0x30] sm:$0xf]
      %v239 = vld [vmem:[%s225 + $0x34] sm:$0xf]
      %v240 = vld [vmem:[%s225 + $0x38] sm:$0x1]
      %v241 = vld [vmem:[%s225 + $0x3c] sm:$0xf]
      %v242 = vld [vmem:[%s225 + $0x40] sm:$0xf]
      %v243 = vld [vmem:[%s225 + $0x44] sm:$0x1]
      %v244 = vld [vmem:[%s225 + $0x48] sm:$0xf]
      %v245 = vld [vmem:[%s225 + $0x4c] sm:$0xf]
      %v246 = vld [vmem:[%s225 + $0x50] sm:$0x1]
      %v247 = vld [vmem:[%s225 + $0x54] sm:$0xf]
      %v248 = vld [vmem:[%s225 + $0x58] sm:$0xf]
      %v249 = vld [vmem:[%s225 + $0x5c] sm:$0x1]
      %v250 = vld [vmem:[%s225 + $0x60] sm:$0xf]
      %v251 = vld [vmem:[%s225 + $0x64] sm:$0xf]
      %v252 = vld [vmem:[%s225 + $0x68] sm:$0x1]
      %v253 = vld [vmem:[%s225 + $0x6c] sm:$0xf]
      %v254 = vld [vmem:[%s225 + $0x70] sm:$0xf]
      %v255 = vld [vmem:[%s225 + $0x74] sm:$0x1]
      %v256 = vld [vmem:[%s225 + $0x78] sm:$0xf]
      %v257 = vld [vmem:[%s225 + $0x7c] sm:$0xf]
      %v258 = vld [vmem:[%s225 + $0x80] sm:$0x1]
      %v259 = vld [vmem:[%s225 + $0x84] sm:$0xf]
      %v260 = vld [vmem:[%s225 + $0x88] sm:$0xf]
      %v261 = vld [vmem:[%s225 + $0x8c] sm:$0x1]
      %v262 = vld [vmem:[%s225 + $0x90] sm:$0xf]
      %v263 = vld [vmem:[%s225 + $0x94] sm:$0xf]
      %v264 = vld [vmem:[%s225 + $0x98] sm:$0x1]
      %v265 = vld [vmem:[%s225 + $0x9c] sm:$0xf]
      %v266 = vld [vmem:[%s225 + $0xa0] sm:$0xf]
      %v267 = vld [vmem:[%s225 + $0xa4] sm:$0x1]
      %v268 = vld [vmem:[%s225 + $0xa8] sm:$0xf]
      %v269 = vld [vmem:[%s225 + $0xac] sm:$0xf]
      %v270 = vld [vmem:[%s225 + $0xb0] sm:$0x1]
      %v271 = vld [vmem:[%s225 + $0xb4] sm:$0xf]
      %v272 = vld [vmem:[%s225 + $0xb8] sm:$0xf]
      %v273 = vld [vmem:[%s225 + $0xbc] sm:$0x1]
      %v274 = vld [vmem:[%s225 + $0xc0] sm:$0xf]
      %v275 = vld [vmem:[%s225 + $0xc4] sm:$0xf]
      %v276 = vld [vmem:[%s225 + $0xc8] sm:$0x1]
      %v277 = vld [vmem:[%s225 + $0xcc] sm:$0xf]
      %v278 = vld [vmem:[%s225 + $0xd0] sm:$0xf]
      %v279 = vld [vmem:[%s225 + $0xd4] sm:$0x1]
      %v312 = vunpack.c.l.b16 %v226
      %v313 = vunpack.c.l.b16 %v227
      %v314 = vunpack.c.l.b16 %v229
      %v315 = vunpack.c.l.b16 %v230
      %v316 = vunpack.c.l.b16 %v232
      %v317 = vunpack.c.l.b16 %v233
      %v318 = vunpack.c.l.b16 %v235
      %v319 = vunpack.c.l.b16 %v236
      %v320 = vunpack.c.l.b16 %v238
      %v321 = vunpack.c.l.b16 %v239
      %v322 = vunpack.c.l.b16 %v241
      %v323 = vunpack.c.l.b16 %v242
      %v324 = vunpack.c.l.b16 %v244
      %v325 = vunpack.c.l.b16 %v245
      %v326 = vunpack.c.l.b16 %v247
      %v327 = vunpack.c.l.b16 %v248
      %v328 = vunpack.c.l.b16 %v250
      %v329 = vunpack.c.l.b16 %v251
      %v330 = vunpack.c.l.b16 %v253
      %v331 = vunpack.c.l.b16 %v254
      %v332 = vunpack.c.l.b16 %v256
      %v333 = vunpack.c.l.b16 %v257
      %v334 = vunpack.c.l.b16 %v259
      %v335 = vunpack.c.l.b16 %v260
      %v336 = vunpack.c.l.b16 %v262
      %v337 = vunpack.c.l.b16 %v263
      %v338 = vunpack.c.l.b16 %v265
      %v339 = vunpack.c.l.b16 %v266
      %v340 = vunpack.c.l.b16 %v268
      %v341 = vunpack.c.l.b16 %v269
      %v342 = vunpack.c.l.b16 %v271
      %v343 = vunpack.c.l.b16 %v272
      %v344 = vpack.c.b16 %v313, %v312
      %v345 = vpack.c.b16 %v315, %v314
      %v346 = vpack.c.b16 %v317, %v316
      %v347 = vpack.c.b16 %v319, %v318
      %v348 = vpack.c.b16 %v321, %v320
      %v349 = vpack.c.b16 %v323, %v322
      %v350 = vpack.c.b16 %v325, %v324
      %v351 = vpack.c.b16 %v327, %v326
      %v352 = vpack.c.b16 %v329, %v328
      %v353 = vpack.c.b16 %v331, %v330
      %v354 = vpack.c.b16 %v333, %v332
      %v355 = vpack.c.b16 %v335, %v334
      %v356 = vpack.c.b16 %v337, %v336
      %v357 = vpack.c.b16 %v339, %v338
      %v358 = vpack.c.b16 %v341, %v340
      %v359 = vpack.c.b16 %v343, %v342
      %vm376 = vcmask 31744
      %377 = vst.msk [vmem:[#allocation2] sm:$0xff] %vm376, %v344
      %378 = vst.msk [vmem:[#allocation2 + $0x8] sm:$0xff] %vm376, %v345
      %379 = vst.msk [vmem:[#allocation2 + $0x10] sm:$0xff] %vm376, %v346
      %380 = vst.msk [vmem:[#allocation2 + $0x18] sm:$0xff] %vm376, %v347
      %381 = vst.msk [vmem:[#allocation2 + $0x20] sm:$0xff] %vm376, %v348
      %382 = vst.msk [vmem:[#allocation2 + $0x28] sm:$0xff] %vm376, %v349
      %383 = vst.msk [vmem:[#allocation2 + $0x30] sm:$0xff] %vm376, %v350
      %384 = vst.msk [vmem:[#allocation2 + $0x38] sm:$0xff] %vm376, %v351
      %385 = vst.msk [vmem:[#allocation2 + $0x40] sm:$0xff] %vm376, %v352
      %386 = vst.msk [vmem:[#allocation2 + $0x48] sm:$0xff] %vm376, %v353
      %387 = vst.msk [vmem:[#allocation2 + $0x50] sm:$0xff] %vm376, %v354
      %388 = vst.msk [vmem:[#allocation2 + $0x58] sm:$0xff] %vm376, %v355
      %389 = vst.msk [vmem:[#allocation2 + $0x60] sm:$0xff] %vm376, %v356
      %390 = vst.msk [vmem:[#allocation2 + $0x68] sm:$0xff] %vm376, %v357
      %391 = vst.msk [vmem:[#allocation2 + $0x70] sm:$0xff] %vm376, %v358
      %392 = vst.msk [vmem:[#allocation2 + $0x78] sm:$0xff] %vm376, %v359
      %v409 = vunpack.c.l.b16 %v228
      %v410 = vunpack.c.l.b16 %v231
      %v411 = vunpack.c.l.b16 %v234
      %v412 = vunpack.c.l.b16 %v237
      %v413 = vunpack.c.l.b16 %v240
      %v414 = vunpack.c.l.b16 %v243
      %v415 = vunpack.c.l.b16 %v246
      %v416 = vunpack.c.l.b16 %v249
      %v417 = vunpack.c.l.b16 %v252
      %v418 = vunpack.c.l.b16 %v255
      %v419 = vunpack.c.l.b16 %v258
      %v420 = vunpack.c.l.b16 %v261
      %v421 = vunpack.c.l.b16 %v264
      %v422 = vunpack.c.l.b16 %v267
      %v423 = vunpack.c.l.b16 %v270
      %v424 = vunpack.c.l.b16 %v273
      %v425 = vpack.c.b16 %v409, %v409
      %v426 = vpack.c.b16 %v410, %v410
      %v427 = vpack.c.b16 %v411, %v411
      %v428 = vpack.c.b16 %v412, %v412
      %v429 = vpack.c.b16 %v413, %v413
      %v430 = vpack.c.b16 %v414, %v414
      %v431 = vpack.c.b16 %v415, %v415
      %v432 = vpack.c.b16 %v416, %v416
      %v433 = vpack.c.b16 %v417, %v417
      %v434 = vpack.c.b16 %v418, %v418
      %v435 = vpack.c.b16 %v419, %v419
      %v436 = vpack.c.b16 %v420, %v420
      %v437 = vpack.c.b16 %v421, %v421
      %v438 = vpack.c.b16 %v422, %v422
      %v439 = vpack.c.b16 %v423, %v423
      %v440 = vpack.c.b16 %v424, %v424
      %vm441 = vsmask.f32 7424
      %v443 = vshrl.u32 %v344, 16
      %v445 = vshll.u32 %v344, 16
      %v447 = vrot.slane %v445, 1
      %v448 = vor.u32 %v443, %v447
      %v450 = vshll.u32 %v425, 16
      %v452 = vrot.slane %v450, 1
      %v453 = vsel %vm441, %v448, %v452
      %v455 = vshrl.u32 %v345, 16
      %v457 = vshll.u32 %v345, 16
      %v459 = vrot.slane %v457, 1
      %v460 = vor.u32 %v455, %v459
      %v462 = vshll.u32 %v426, 16
      %v464 = vrot.slane %v462, 1
      %v465 = vsel %vm441, %v460, %v464
      %v467 = vshrl.u32 %v346, 16
      %v469 = vshll.u32 %v346, 16
      %v471 = vrot.slane %v469, 1
      %v472 = vor.u32 %v467, %v471
      %v474 = vshll.u32 %v427, 16
      %v476 = vrot.slane %v474, 1
      %v477 = vsel %vm441, %v472, %v476
      %v479 = vshrl.u32 %v347, 16
      %v481 = vshll.u32 %v347, 16
      %v483 = vrot.slane %v481, 1
      %v484 = vor.u32 %v479, %v483
      %v486 = vshll.u32 %v428, 16
      %v488 = vrot.slane %v486, 1
      %v489 = vsel %vm441, %v484, %v488
      %v491 = vshrl.u32 %v348, 16
      %v493 = vshll.u32 %v348, 16
      %v495 = vrot.slane %v493, 1
      %v496 = vor.u32 %v491, %v495
      %v498 = vshll.u32 %v429, 16
      %v500 = vrot.slane %v498, 1
      %v501 = vsel %vm441, %v496, %v500
      %v503 = vshrl.u32 %v349, 16
      %v505 = vshll.u32 %v349, 16
      %v507 = vrot.slane %v505, 1
      %v508 = vor.u32 %v503, %v507
      %v510 = vshll.u32 %v430, 16
      %v512 = vrot.slane %v510, 1
      %v513 = vsel %vm441, %v508, %v512
      %v515 = vshrl.u32 %v350, 16
      %v517 = vshll.u32 %v350, 16
      %v519 = vrot.slane %v517, 1
      %v520 = vor.u32 %v515, %v519
      %v522 = vshll.u32 %v431, 16
      %v524 = vrot.slane %v522, 1
      %v525 = vsel %vm441, %v520, %v524
      %v527 = vshrl.u32 %v351, 16
      %v529 = vshll.u32 %v351, 16
      %v531 = vrot.slane %v529, 1
      %v532 = vor.u32 %v527, %v531
      %v534 = vshll.u32 %v432, 16
      %v536 = vrot.slane %v534, 1
      %v537 = vsel %vm441, %v532, %v536
      %v539 = vshrl.u32 %v352, 16
      %v541 = vshll.u32 %v352, 16
      %v543 = vrot.slane %v541, 1
      %v544 = vor.u32 %v539, %v543
      %v546 = vshll.u32 %v433, 16
      %v548 = vrot.slane %v546, 1
      %v549 = vsel %vm441, %v544, %v548
      %v551 = vshrl.u32 %v353, 16
      %v553 = vshll.u32 %v353, 16
      %v555 = vrot.slane %v553, 1
      %v556 = vor.u32 %v551, %v555
      %v558 = vshll.u32 %v434, 16
      %v560 = vrot.slane %v558, 1
      %v561 = vsel %vm441, %v556, %v560
      %v563 = vshrl.u32 %v354, 16
      %v565 = vshll.u32 %v354, 16
      %v567 = vrot.slane %v565, 1
      %v568 = vor.u32 %v563, %v567
      %v570 = vshll.u32 %v435, 16
      %v572 = vrot.slane %v570, 1
      %v573 = vsel %vm441, %v568, %v572
      %v575 = vshrl.u32 %v355, 16
      %v577 = vshll.u32 %v355, 16
      %v579 = vrot.slane %v577, 1
      %v580 = vor.u32 %v575, %v579
      %v582 = vshll.u32 %v436, 16
      %v584 = vrot.slane %v582, 1
      %v585 = vsel %vm441, %v580, %v584
      %v587 = vshrl.u32 %v356, 16
      %v589 = vshll.u32 %v356, 16
      %v591 = vrot.slane %v589, 1
      %v592 = vor.u32 %v587, %v591
      %v594 = vshll.u32 %v437, 16
      %v596 = vrot.slane %v594, 1
      %v597 = vsel %vm441, %v592, %v596
      %v599 = vshrl.u32 %v357, 16
      %v601 = vshll.u32 %v357, 16
      %v603 = vrot.slane %v601, 1
      %v604 = vor.u32 %v599, %v603
      %v606 = vshll.u32 %v438, 16
      %v608 = vrot.slane %v606, 1
      %v609 = vsel %vm441, %v604, %v608
      %v611 = vshrl.u32 %v358, 16
      %v613 = vshll.u32 %v358, 16
      %v615 = vrot.slane %v613, 1
      %v616 = vor.u32 %v611, %v615
      %v618 = vshll.u32 %v439, 16
      %v620 = vrot.slane %v618, 1
      %v621 = vsel %vm441, %v616, %v620
      %v623 = vshrl.u32 %v359, 16
      %v625 = vshll.u32 %v359, 16
      %v627 = vrot.slane %v625, 1
      %v628 = vor.u32 %v623, %v627
      %v630 = vshll.u32 %v440, 16
      %v632 = vrot.slane %v630, 1
      %v633 = vsel %vm441, %v628, %v632
      %634 = vrot.lane.b32.xlu0 %v453, 4
      %v635 = vpop.permute.xlu0 %634
      %636 = vrot.lane.b32.xlu0 %v465, 4
      %v637 = vpop.permute.xlu0 %636
      %638 = vrot.lane.b32.xlu0 %v477, 4
      %v639 = vpop.permute.xlu0 %638
      %640 = vrot.lane.b32.xlu0 %v489, 4
      %v641 = vpop.permute.xlu0 %640
      %642 = vrot.lane.b32.xlu0 %v501, 4
      %v643 = vpop.permute.xlu0 %642
      %644 = vrot.lane.b32.xlu0 %v513, 4
      %v645 = vpop.permute.xlu0 %644
      %646 = vrot.lane.b32.xlu0 %v525, 4
      %v647 = vpop.permute.xlu0 %646
      %648 = vrot.lane.b32.xlu0 %v537, 4
      %v649 = vpop.permute.xlu0 %648
      %650 = vrot.lane.b32.xlu0 %v549, 4
      %v651 = vpop.permute.xlu0 %650
      %652 = vrot.lane.b32.xlu0 %v561, 4
      %v653 = vpop.permute.xlu0 %652
      %654 = vrot.lane.b32.xlu0 %v573, 4
      %v655 = vpop.permute.xlu0 %654
      %656 = vrot.lane.b32.xlu0 %v585, 4
      %v657 = vpop.permute.xlu0 %656
      %658 = vrot.lane.b32.xlu0 %v597, 4
      %v659 = vpop.permute.xlu0 %658
      %660 = vrot.lane.b32.xlu0 %v609, 4
      %v661 = vpop.permute.xlu0 %660
      %662 = vrot.lane.b32.xlu0 %v621, 4
      %v663 = vpop.permute.xlu0 %662
      %664 = vrot.lane.b32.xlu0 %v633, 4
      %v665 = vpop.permute.xlu0 %664
      %vm682 = vcmask 64544
      %683 = vst.msk [vmem:[#allocation2] sm:$0xff] %vm682, %v635
      %684 = vst.msk [vmem:[#allocation2 + $0x8] sm:$0xff] %vm682, %v637
      %685 = vst.msk [vmem:[#allocation2 + $0x10] sm:$0xff] %vm682, %v639
      %686 = vst.msk [vmem:[#allocation2 + $0x18] sm:$0xff] %vm682, %v641
      %687 = vst.msk [vmem:[#allocation2 + $0x20] sm:$0xff] %vm682, %v643
      %688 = vst.msk [vmem:[#allocation2 + $0x28] sm:$0xff] %vm682, %v645
      %689 = vst.msk [vmem:[#allocation2 + $0x30] sm:$0xff] %vm682, %v647
      %690 = vst.msk [vmem:[#allocation2 + $0x38] sm:$0xff] %vm682, %v649
      %691 = vst.msk [vmem:[#allocation2 + $0x40] sm:$0xff] %vm682, %v651
      %692 = vst.msk [vmem:[#allocation2 + $0x48] sm:$0xff] %vm682, %v653
      %693 = vst.msk [vmem:[#allocation2 + $0x50] sm:$0xff] %vm682, %v655
      %694 = vst.msk [vmem:[#allocation2 + $0x58] sm:$0xff] %vm682, %v657
      %695 = vst.msk [vmem:[#allocation2 + $0x60] sm:$0xff] %vm682, %v659
      %696 = vst.msk [vmem:[#allocation2 + $0x68] sm:$0xff] %vm682, %v661
      %697 = vst.msk [vmem:[#allocation2 + $0x70] sm:$0xff] %vm682, %v663
      %698 = vst.msk [vmem:[#allocation2 + $0x78] sm:$0xff] %vm682, %v665
      %vm699 = vcmask 1046528
      %v700 = vrot.slane %v344, 1
      %v701 = vrot.slane %v425, 1
      %v702 = vsel %vm699, %v700, %v701
      %v703 = vrot.slane %v345, 1
      %v704 = vrot.slane %v426, 1
      %v705 = vsel %vm699, %v703, %v704
      %v706 = vrot.slane %v346, 1
      %v707 = vrot.slane %v427, 1
      %v708 = vsel %vm699, %v706, %v707
      %v709 = vrot.slane %v347, 1
      %v710 = vrot.slane %v428, 1
      %v711 = vsel %vm699, %v709, %v710
      %v712 = vrot.slane %v348, 1
      %v713 = vrot.slane %v429, 1
      %v714 = vsel %vm699, %v712, %v713
      %v715 = vrot.slane %v349, 1
      %v716 = vrot.slane %v430, 1
      %v717 = vsel %vm699, %v715, %v716
      %v718 = vrot.slane %v350, 1
      %v719 = vrot.slane %v431, 1
      %v720 = vsel %vm699, %v718, %v719
      %v721 = vrot.slane %v351, 1
      %v722 = vrot.slane %v432, 1
      %v723 = vsel %vm699, %v721, %v722
      %v724 = vrot.slane %v352, 1
      %v725 = vrot.slane %v433, 1
      %v726 = vsel %vm699, %v724, %v725
      %v727 = vrot.slane %v353, 1
      %v728 = vrot.slane %v434, 1
      %v729 = vsel %vm699, %v727, %v728
      %v730 = vrot.slane %v354, 1
      %v731 = vrot.slane %v435, 1
      %v732 = vsel %vm699, %v730, %v731
      %v733 = vrot.slane %v355, 1
      %v734 = vrot.slane %v436, 1
      %v735 = vsel %vm699, %v733, %v734
      %v736 = vrot.slane %v356, 1
      %v737 = vrot.slane %v437, 1
      %v738 = vsel %vm699, %v736, %v737
      %v739 = vrot.slane %v357, 1
      %v740 = vrot.slane %v438, 1
      %v741 = vsel %vm699, %v739, %v740
      %v742 = vrot.slane %v358, 1
      %v743 = vrot.slane %v439, 1
      %v744 = vsel %vm699, %v742, %v743
      %v745 = vrot.slane %v359, 1
      %v746 = vrot.slane %v440, 1
      %v747 = vsel %vm699, %v745, %v746
      %748 = vrot.lane.b32.xlu0 %v702, 8
      %v749 = vpop.permute.xlu0 %748
      %750 = vrot.lane.b32.xlu0 %v705, 8
      %v751 = vpop.permute.xlu0 %750
      %752 = vrot.lane.b32.xlu0 %v708, 8
      %v753 = vpop.permute.xlu0 %752
      %754 = vrot.lane.b32.xlu0 %v711, 8
      %v755 = vpop.permute.xlu0 %754
      %756 = vrot.lane.b32.xlu0 %v714, 8
      %v757 = vpop.permute.xlu0 %756
      %758 = vrot.lane.b32.xlu0 %v717, 8
      %v759 = vpop.permute.xlu0 %758
      %760 = vrot.lane.b32.xlu0 %v720, 8
      %v761 = vpop.permute.xlu0 %760
      %762 = vrot.lane.b32.xlu0 %v723, 8
      %v763 = vpop.permute.xlu0 %762
      %764 = vrot.lane.b32.xlu0 %v726, 8
      %v765 = vpop.permute.xlu0 %764
      %766 = vrot.lane.b32.xlu0 %v729, 8
      %v767 = vpop.permute.xlu0 %766
      %768 = vrot.lane.b32.xlu0 %v732, 8
      %v769 = vpop.permute.xlu0 %768
      %770 = vrot.lane.b32.xlu0 %v735, 8
      %v771 = vpop.permute.xlu0 %770
      %772 = vrot.lane.b32.xlu0 %v738, 8
      %v773 = vpop.permute.xlu0 %772
      %774 = vrot.lane.b32.xlu0 %v741, 8
      %v775 = vpop.permute.xlu0 %774
      %776 = vrot.lane.b32.xlu0 %v744, 8
      %v777 = vpop.permute.xlu0 %776
      %778 = vrot.lane.b32.xlu0 %v747, 8
      %v779 = vpop.permute.xlu0 %778
      %vm796 = vcmask 97344
      %797 = vst.msk [vmem:[#allocation2] sm:$0xff] %vm796, %v749
      %798 = vst.msk [vmem:[#allocation2 + $0x8] sm:$0xff] %vm796, %v751
      %799 = vst.msk [vmem:[#allocation2 + $0x10] sm:$0xff] %vm796, %v753
      %800 = vst.msk [vmem:[#allocation2 + $0x18] sm:$0xff] %vm796, %v755
      %801 = vst.msk [vmem:[#allocation2 + $0x20] sm:$0xff] %vm796, %v757
      %802 = vst.msk [vmem:[#allocation2 + $0x28] sm:$0xff] %vm796, %v759
      %803 = vst.msk [vmem:[#allocation2 + $0x30] sm:$0xff] %vm796, %v761
      %804 = vst.msk [vmem:[#allocation2 + $0x38] sm:$0xff] %vm796, %v763
      %805 = vst.msk [vmem:[#allocation2 + $0x40] sm:$0xff] %vm796, %v765
      %806 = vst.msk [vmem:[#allocation2 + $0x48] sm:$0xff] %vm796, %v767
      %807 = vst.msk [vmem:[#allocation2 + $0x50] sm:$0xff] %vm796, %v769
      %808 = vst.msk [vmem:[#allocation2 + $0x58] sm:$0xff] %vm796, %v771
      %809 = vst.msk [vmem:[#allocation2 + $0x60] sm:$0xff] %vm796, %v773
      %810 = vst.msk [vmem:[#allocation2 + $0x68] sm:$0xff] %vm796, %v775
      %811 = vst.msk [vmem:[#allocation2 + $0x70] sm:$0xff] %vm796, %v777
      %812 = vst.msk [vmem:[#allocation2 + $0x78] sm:$0xff] %vm796, %v779
      %v815 = vunpack.c.l.b16 %v274
      %v816 = vunpack.c.l.b16 %v275
      %v817 = vpack.c.b16 %v816, %v815
      %818 = vrot.lane.b32.xlu0 %v345, 12
      %v819 = vpop.permute.xlu0 %818
      %820 = vrot.lane.b32.xlu0 %v346, 12
      %v821 = vpop.permute.xlu0 %820
      %822 = vrot.lane.b32.xlu0 %v347, 12
      %v823 = vpop.permute.xlu0 %822
      %824 = vrot.lane.b32.xlu0 %v348, 12
      %v825 = vpop.permute.xlu0 %824
      %826 = vrot.lane.b32.xlu0 %v349, 12
      %v827 = vpop.permute.xlu0 %826
      %828 = vrot.lane.b32.xlu0 %v350, 12
      %v829 = vpop.permute.xlu0 %828
      %830 = vrot.lane.b32.xlu0 %v351, 12
      %v831 = vpop.permute.xlu0 %830
      %832 = vrot.lane.b32.xlu0 %v352, 12
      %v833 = vpop.permute.xlu0 %832
      %834 = vrot.lane.b32.xlu0 %v353, 12
      %v835 = vpop.permute.xlu0 %834
      %836 = vrot.lane.b32.xlu0 %v354, 12
      %v837 = vpop.permute.xlu0 %836
      %838 = vrot.lane.b32.xlu0 %v355, 12
      %v839 = vpop.permute.xlu0 %838
      %840 = vrot.lane.b32.xlu0 %v356, 12
      %v841 = vpop.permute.xlu0 %840
      %842 = vrot.lane.b32.xlu0 %v357, 12
      %v843 = vpop.permute.xlu0 %842
      %844 = vrot.lane.b32.xlu0 %v358, 12
      %v845 = vpop.permute.xlu0 %844
      %846 = vrot.lane.b32.xlu0 %v359, 12
      %v847 = vpop.permute.xlu0 %846
      %848 = vrot.lane.b32.xlu0 %v817, 12
      %v849 = vpop.permute.xlu0 %848
      %vm866 = vcmask 130144
      %867 = vst.msk [vmem:[#allocation2] sm:$0xff] %vm866, %v819
      %868 = vst.msk [vmem:[#allocation2 + $0x8] sm:$0xff] %vm866, %v821
      %869 = vst.msk [vmem:[#allocation2 + $0x10] sm:$0xff] %vm866, %v823
      %870 = vst.msk [vmem:[#allocation2 + $0x18] sm:$0xff] %vm866, %v825
      %871 = vst.msk [vmem:[#allocation2 + $0x20] sm:$0xff] %vm866, %v827
      %872 = vst.msk [vmem:[#allocation2 + $0x28] sm:$0xff] %vm866, %v829
      %873 = vst.msk [vmem:[#allocation2 + $0x30] sm:$0xff] %vm866, %v831
      %874 = vst.msk [vmem:[#allocation2 + $0x38] sm:$0xff] %vm866, %v833
      %875 = vst.msk [vmem:[#allocation2 + $0x40] sm:$0xff] %vm866, %v835
      %876 = vst.msk [vmem:[#allocation2 + $0x48] sm:$0xff] %vm866, %v837
      %877 = vst.msk [vmem:[#allocation2 + $0x50] sm:$0xff] %vm866, %v839
      %878 = vst.msk [vmem:[#allocation2 + $0x58] sm:$0xff] %vm866, %v841
      %879 = vst.msk [vmem:[#allocation2 + $0x60] sm:$0xff] %vm866, %v843
      %880 = vst.msk [vmem:[#allocation2 + $0x68] sm:$0xff] %vm866, %v845
      %881 = vst.msk [vmem:[#allocation2 + $0x70] sm:$0xff] %vm866, %v847
      %882 = vst.msk [vmem:[#allocation2 + $0x78] sm:$0xff] %vm866, %v849
      %v884 = vunpack.c.l.b16 %v276
      %v885 = vpack.c.b16 %v884, %v884
      %v887 = vshrl.u32 %v817, 16
      %v889 = vshll.u32 %v817, 16
      %v891 = vrot.slane %v889, 1
      %v892 = vor.u32 %v887, %v891
      %v894 = vshll.u32 %v885, 16
      %v896 = vrot.slane %v894, 1
      %v897 = vsel %vm441, %v892, %v896
      %898 = vrot.lane.b32.xlu0 %v465, 16
      %v899 = vpop.permute.xlu0 %898
      %900 = vrot.lane.b32.xlu0 %v477, 16
      %v901 = vpop.permute.xlu0 %900
      %902 = vrot.lane.b32.xlu0 %v489, 16
      %v903 = vpop.permute.xlu0 %902
      %904 = vrot.lane.b32.xlu0 %v501, 16
      %v905 = vpop.permute.xlu0 %904
      %906 = vrot.lane.b32.xlu0 %v513, 16
      %v907 = vpop.permute.xlu0 %906
      %908 = vrot.lane.b32.xlu0 %v525, 16
      %v909 = vpop.permute.xlu0 %908
      %910 = vrot.lane.b32.xlu0 %v537, 16
      %v911 = vpop.permute.xlu0 %910
      %912 = vrot.lane.b32.xlu0 %v549, 16
      %v913 = vpop.permute.xlu0 %912
      %914 = vrot.lane.b32.xlu0 %v561, 16
      %v915 = vpop.permute.xlu0 %914
      %916 = vrot.lane.b32.xlu0 %v573, 16
      %v917 = vpop.permute.xlu0 %916
      %918 = vrot.lane.b32.xlu0 %v585, 16
      %v919 = vpop.permute.xlu0 %918
      %920 = vrot.lane.b32.xlu0 %v597, 16
      %v921 = vpop.permute.xlu0 %920
      %922 = vrot.lane.b32.xlu0 %v609, 16
      %v923 = vpop.permute.xlu0 %922
      %924 = vrot.lane.b32.xlu0 %v621, 16
      %v925 = vpop.permute.xlu0 %924
      %926 = vrot.lane.b32.xlu0 %v633, 16
      %v927 = vpop.permute.xlu0 %926
      %928 = vrot.lane.b32.xlu0 %v897, 16
      %v929 = vpop.permute.xlu0 %928
      %vm946 = vcmask 162944
      %947 = vst.msk [vmem:[#allocation2] sm:$0xff] %vm946, %v899
      %948 = vst.msk [vmem:[#allocation2 + $0x8] sm:$0xff] %vm946, %v901
      %949 = vst.msk [vmem:[#allocation2 + $0x10] sm:$0xff] %vm946, %v903
      %950 = vst.msk [vmem:[#allocation2 + $0x18] sm:$0xff] %vm946, %v905
      %951 = vst.msk [vmem:[#allocation2 + $0x20] sm:$0xff] %vm946, %v907
      %952 = vst.msk [vmem:[#allocation2 + $0x28] sm:$0xff] %vm946, %v909
      %953 = vst.msk [vmem:[#allocation2 + $0x30] sm:$0xff] %vm946, %v911
      %954 = vst.msk [vmem:[#allocation2 + $0x38] sm:$0xff] %vm946, %v913
      %955 = vst.msk [vmem:[#allocation2 + $0x40] sm:$0xff] %vm946, %v915
      %956 = vst.msk [vmem:[#allocation2 + $0x48] sm:$0xff] %vm946, %v917
      %957 = vst.msk [vmem:[#allocation2 + $0x50] sm:$0xff] %vm946, %v919
      %958 = vst.msk [vmem:[#allocation2 + $0x58] sm:$0xff] %vm946, %v921
      %959 = vst.msk [vmem:[#allocation2 + $0x60] sm:$0xff] %vm946, %v923
      %960 = vst.msk [vmem:[#allocation2 + $0x68] sm:$0xff] %vm946, %v925
      %961 = vst.msk [vmem:[#allocation2 + $0x70] sm:$0xff] %vm946, %v927
      %962 = vst.msk [vmem:[#allocation2 + $0x78] sm:$0xff] %vm946, %v929
      %v963 = vrot.slane %v817, 1
      %v964 = vrot.slane %v885, 1
      %v965 = vsel %vm699, %v963, %v964
      %966 = vrot.lane.b32.xlu0 %v705, 20
      %v967 = vpop.permute.xlu0 %966
      %968 = vrot.lane.b32.xlu0 %v708, 20
      %v969 = vpop.permute.xlu0 %968
      %970 = vrot.lane.b32.xlu0 %v711, 20
      %v971 = vpop.permute.xlu0 %970
      %972 = vrot.lane.b32.xlu0 %v714, 20
      %v973 = vpop.permute.xlu0 %972
      %974 = vrot.lane.b32.xlu0 %v717, 20
      %v975 = vpop.permute.xlu0 %974
      %976 = vrot.lane.b32.xlu0 %v720, 20
      %v977 = vpop.permute.xlu0 %976
      %978 = vrot.lane.b32.xlu0 %v723, 20
      %v979 = vpop.permute.xlu0 %978
      %980 = vrot.lane.b32.xlu0 %v726, 20
      %v981 = vpop.permute.xlu0 %980
      %982 = vrot.lane.b32.xlu0 %v729, 20
      %v983 = vpop.permute.xlu0 %982
      %984 = vrot.lane.b32.xlu0 %v732, 20
      %v985 = vpop.permute.xlu0 %984
      %986 = vrot.lane.b32.xlu0 %v735, 20
      %v987 = vpop.permute.xlu0 %986
      %988 = vrot.lane.b32.xlu0 %v738, 20
      %v989 = vpop.permute.xlu0 %988
      %990 = vrot.lane.b32.xlu0 %v741, 20
      %v991 = vpop.permute.xlu0 %990
      %992 = vrot.lane.b32.xlu0 %v744, 20
      %v993 = vpop.permute.xlu0 %992
      %994 = vrot.lane.b32.xlu0 %v747, 20
      %v995 = vpop.permute.xlu0 %994
      %996 = vrot.lane.b32.xlu0 %v965, 20
      %v997 = vpop.permute.xlu0 %996
      %vm1014 = vcmask 195744
      %1015 = vst.msk [vmem:[#allocation2] sm:$0xff] %vm1014, %v967
      %1016 = vst.msk [vmem:[#allocation2 + $0x8] sm:$0xff] %vm1014, %v969
      %1017 = vst.msk [vmem:[#allocation2 + $0x10] sm:$0xff] %vm1014, %v971
      %1018 = vst.msk [vmem:[#allocation2 + $0x18] sm:$0xff] %vm1014, %v973
      %1019 = vst.msk [vmem:[#allocation2 + $0x20] sm:$0xff] %vm1014, %v975
      %1020 = vst.msk [vmem:[#allocation2 + $0x28] sm:$0xff] %vm1014, %v977
      %1021 = vst.msk [vmem:[#allocation2 + $0x30] sm:$0xff] %vm1014, %v979
      %1022 = vst.msk [vmem:[#allocation2 + $0x38] sm:$0xff] %vm1014, %v981
      %1023 = vst.msk [vmem:[#allocation2 + $0x40] sm:$0xff] %vm1014, %v983
      %1024 = vst.msk [vmem:[#allocation2 + $0x48] sm:$0xff] %vm1014, %v985
      %1025 = vst.msk [vmem:[#allocation2 + $0x50] sm:$0xff] %vm1014, %v987
      %1026 = vst.msk [vmem:[#allocation2 + $0x58] sm:$0xff] %vm1014, %v989
      %1027 = vst.msk [vmem:[#allocation2 + $0x60] sm:$0xff] %vm1014, %v991
      %1028 = vst.msk [vmem:[#allocation2 + $0x68] sm:$0xff] %vm1014, %v993
      %1029 = vst.msk [vmem:[#allocation2 + $0x70] sm:$0xff] %vm1014, %v995
      %1030 = vst.msk [vmem:[#allocation2 + $0x78] sm:$0xff] %vm1014, %v997
      %v1033 = vunpack.c.l.b16 %v277
      %v1034 = vunpack.c.l.b16 %v278
      %v1035 = vpack.c.b16 %v1034, %v1033
      %1036 = vrot.lane.b32.xlu0 %v346, 24
      %v1037 = vpop.permute.xlu0 %1036
      %1038 = vrot.lane.b32.xlu0 %v347, 24
      %v1039 = vpop.permute.xlu0 %1038
      %1040 = vrot.lane.b32.xlu0 %v348, 24
      %v1041 = vpop.permute.xlu0 %1040
      %1042 = vrot.lane.b32.xlu0 %v349, 24
      %v1043 = vpop.permute.xlu0 %1042
      %1044 = vrot.lane.b32.xlu0 %v350, 24
      %v1045 = vpop.permute.xlu0 %1044
      %1046 = vrot.lane.b32.xlu0 %v351, 24
      %v1047 = vpop.permute.xlu0 %1046
      %1048 = vrot.lane.b32.xlu0 %v352, 24
      %v1049 = vpop.permute.xlu0 %1048
      %1050 = vrot.lane.b32.xlu0 %v353, 24
      %v1051 = vpop.permute.xlu0 %1050
      %1052 = vrot.lane.b32.xlu0 %v354, 24
      %v1053 = vpop.permute.xlu0 %1052
      %1054 = vrot.lane.b32.xlu0 %v355, 24
      %v1055 = vpop.permute.xlu0 %1054
      %1056 = vrot.lane.b32.xlu0 %v356, 24
      %v1057 = vpop.permute.xlu0 %1056
      %1058 = vrot.lane.b32.xlu0 %v357, 24
      %v1059 = vpop.permute.xlu0 %1058
      %1060 = vrot.lane.b32.xlu0 %v358, 24
      %v1061 = vpop.permute.xlu0 %1060
      %1062 = vrot.lane.b32.xlu0 %v359, 24
      %v1063 = vpop.permute.xlu0 %1062
      %1064 = vrot.lane.b32.xlu0 %v817, 24
      %v1065 = vpop.permute.xlu0 %1064
      %1066 = vrot.lane.b32.xlu0 %v1035, 24
      %v1067 = vpop.permute.xlu0 %1066
      %vm1084 = vcmask 228544
      %1085 = vst.msk [vmem:[#allocation2] sm:$0xff] %vm1084, %v1037
      %1086 = vst.msk [vmem:[#allocation2 + $0x8] sm:$0xff] %vm1084, %v1039
      %1087 = vst.msk [vmem:[#allocation2 + $0x10] sm:$0xff] %vm1084, %v1041
      %1088 = vst.msk [vmem:[#allocation2 + $0x18] sm:$0xff] %vm1084, %v1043
      %1089 = vst.msk [vmem:[#allocation2 + $0x20] sm:$0xff] %vm1084, %v1045
      %1090 = vst.msk [vmem:[#allocation2 + $0x28] sm:$0xff] %vm1084, %v1047
      %1091 = vst.msk [vmem:[#allocation2 + $0x30] sm:$0xff] %vm1084, %v1049
      %1092 = vst.msk [vmem:[#allocation2 + $0x38] sm:$0xff] %vm1084, %v1051
      %1093 = vst.msk [vmem:[#allocation2 + $0x40] sm:$0xff] %vm1084, %v1053
      %1094 = vst.msk [vmem:[#allocation2 + $0x48] sm:$0xff] %vm1084, %v1055
      %1095 = vst.msk [vmem:[#allocation2 + $0x50] sm:$0xff] %vm1084, %v1057
      %1096 = vst.msk [vmem:[#allocation2 + $0x58] sm:$0xff] %vm1084, %v1059
      %1097 = vst.msk [vmem:[#allocation2 + $0x60] sm:$0xff] %vm1084, %v1061
      %1098 = vst.msk [vmem:[#allocation2 + $0x68] sm:$0xff] %vm1084, %v1063
      %1099 = vst.msk [vmem:[#allocation2 + $0x70] sm:$0xff] %vm1084, %v1065
      %1100 = vst.msk [vmem:[#allocation2 + $0x78] sm:$0xff] %vm1084, %v1067
      %v1102 = vunpack.c.l.b16 %v279
      %v1103 = vpack.c.b16 %v1102, %v1102
      %v1105 = vshrl.u32 %v1035, 16
      %v1107 = vshll.u32 %v1035, 16
      %v1109 = vrot.slane %v1107, 1
      %v1110 = vor.u32 %v1105, %v1109
      %v1112 = vshll.u32 %v1103, 16
      %v1114 = vrot.slane %v1112, 1
      %v1115 = vsel %vm441, %v1110, %v1114
      %1116 = vrot.lane.b32.xlu0 %v477, 28
      %v1117 = vpop.permute.xlu0 %1116
      %1118 = vrot.lane.b32.xlu0 %v489, 28
      %v1119 = vpop.permute.xlu0 %1118
      %1120 = vrot.lane.b32.xlu0 %v501, 28
      %v1121 = vpop.permute.xlu0 %1120
      %1122 = vrot.lane.b32.xlu0 %v513, 28
      %v1123 = vpop.permute.xlu0 %1122
      %1124 = vrot.lane.b32.xlu0 %v525, 28
      %v1125 = vpop.permute.xlu0 %1124
      %1126 = vrot.lane.b32.xlu0 %v537, 28
      %v1127 = vpop.permute.xlu0 %1126
      %1128 = vrot.lane.b32.xlu0 %v549, 28
      %v1129 = vpop.permute.xlu0 %1128
      %1130 = vrot.lane.b32.xlu0 %v561, 28
      %v1131 = vpop.permute.xlu0 %1130
      %1132 = vrot.lane.b32.xlu0 %v573, 28
      %v1133 = vpop.permute.xlu0 %1132
      %1134 = vrot.lane.b32.xlu0 %v585, 28
      %v1135 = vpop.permute.xlu0 %1134
      %1136 = vrot.lane.b32.xlu0 %v597, 28
      %v1137 = vpop.permute.xlu0 %1136
      %1138 = vrot.lane.b32.xlu0 %v609, 28
      %v1139 = vpop.permute.xlu0 %1138
      %1140 = vrot.lane.b32.xlu0 %v621, 28
      %v1141 = vpop.permute.xlu0 %1140
      %1142 = vrot.lane.b32.xlu0 %v633, 28
      %v1143 = vpop.permute.xlu0 %1142
      %1144 = vrot.lane.b32.xlu0 %v897, 28
      %v1145 = vpop.permute.xlu0 %1144
      %1146 = vrot.lane.b32.xlu0 %v1115, 28
      %v1147 = vpop.permute.xlu0 %1146
      %vm1164 = vcmask 261344
      %1165 = vst.msk [vmem:[#allocation2] sm:$0xff] %vm1164, %v1117
      %1166 = vst.msk [vmem:[#allocation2 + $0x8] sm:$0xff] %vm1164, %v1119
      %1167 = vst.msk [vmem:[#allocation2 + $0x10] sm:$0xff] %vm1164, %v1121
      %1168 = vst.msk [vmem:[#allocation2 + $0x18] sm:$0xff] %vm1164, %v1123
      %1169 = vst.msk [vmem:[#allocation2 + $0x20] sm:$0xff] %vm1164, %v1125
      %1170 = vst.msk [vmem:[#allocation2 + $0x28] sm:$0xff] %vm1164, %v1127
      %1171 = vst.msk [vmem:[#allocation2 + $0x30] sm:$0xff] %vm1164, %v1129
      %1172 = vst.msk [vmem:[#allocation2 + $0x38] sm:$0xff] %vm1164, %v1131
      %1173 = vst.msk [vmem:[#allocation2 + $0x40] sm:$0xff] %vm1164, %v1133
      %1174 = vst.msk [vmem:[#allocation2 + $0x48] sm:$0xff] %vm1164, %v1135
      %1175 = vst.msk [vmem:[#allocation2 + $0x50] sm:$0xff] %vm1164, %v1137
      %1176 = vst.msk [vmem:[#allocation2 + $0x58] sm:$0xff] %vm1164, %v1139
      %1177 = vst.msk [vmem:[#allocation2 + $0x60] sm:$0xff] %vm1164, %v1141
      %1178 = vst.msk [vmem:[#allocation2 + $0x68] sm:$0xff] %vm1164, %v1143
      %1179 = vst.msk [vmem:[#allocation2 + $0x70] sm:$0xff] %vm1164, %v1145
      %1180 = vst.msk [vmem:[#allocation2 + $0x78] sm:$0xff] %vm1164, %v1147
      %v1181 = vrot.slane %v1035, 1
      %v1182 = vrot.slane %v1103, 1
      %v1183 = vsel %vm699, %v1181, %v1182
      %1184 = vrot.lane.b32.xlu0 %v708, 32
      %v1185 = vpop.permute.xlu0 %1184
      %1186 = vrot.lane.b32.xlu0 %v711, 32
      %v1187 = vpop.permute.xlu0 %1186
      %1188 = vrot.lane.b32.xlu0 %v714, 32
      %v1189 = vpop.permute.xlu0 %1188
      %1190 = vrot.lane.b32.xlu0 %v717, 32
      %v1191 = vpop.permute.xlu0 %1190
      %1192 = vrot.lane.b32.xlu0 %v720, 32
      %v1193 = vpop.permute.xlu0 %1192
      %1194 = vrot.lane.b32.xlu0 %v723, 32
      %v1195 = vpop.permute.xlu0 %1194
      %1196 = vrot.lane.b32.xlu0 %v726, 32
      %v1197 = vpop.permute.xlu0 %1196
      %1198 = vrot.lane.b32.xlu0 %v729, 32
      %v1199 = vpop.permute.xlu0 %1198
      %1200 = vrot.lane.b32.xlu0 %v732, 32
      %v1201 = vpop.permute.xlu0 %1200
      %1202 = vrot.lane.b32.xlu0 %v735, 32
      %v1203 = vpop.permute.xlu0 %1202
      %1204 = vrot.lane.b32.xlu0 %v738, 32
      %v1205 = vpop.permute.xlu0 %1204
      %1206 = vrot.lane.b32.xlu0 %v741, 32
      %v1207 = vpop.permute.xlu0 %1206
      %1208 = vrot.lane.b32.xlu0 %v744, 32
      %v1209 = vpop.permute.xlu0 %1208
      %1210 = vrot.lane.b32.xlu0 %v747, 32
      %v1211 = vpop.permute.xlu0 %1210
      %1212 = vrot.lane.b32.xlu0 %v965, 32
      %v1213 = vpop.permute.xlu0 %1212
      %1214 = vrot.lane.b32.xlu0 %v1183, 32
      %v1215 = vpop.permute.xlu0 %1214
      %vm1232 = vcmask 294144
      %1233 = vst.msk [vmem:[#allocation2] sm:$0xff] %vm1232, %v1185
      %1234 = vst.msk [vmem:[#allocation2 + $0x8] sm:$0xff] %vm1232, %v1187
      %1235 = vst.msk [vmem:[#allocation2 + $0x10] sm:$0xff] %vm1232, %v1189
      %1236 = vst.msk [vmem:[#allocation2 + $0x18] sm:$0xff] %vm1232, %v1191
      %1237 = vst.msk [vmem:[#allocation2 + $0x20] sm:$0xff] %vm1232, %v1193
      %1238 = vst.msk [vmem:[#allocation2 + $0x28] sm:$0xff] %vm1232, %v1195
      %1239 = vst.msk [vmem:[#allocation2 + $0x30] sm:$0xff] %vm1232, %v1197
      %1240 = vst.msk [vmem:[#allocation2 + $0x38] sm:$0xff] %vm1232, %v1199
      %1241 = vst.msk [vmem:[#allocation2 + $0x40] sm:$0xff] %vm1232, %v1201
      %1242 = vst.msk [vmem:[#allocation2 + $0x48] sm:$0xff] %vm1232, %v1203
      %1243 = vst.msk [vmem:[#allocation2 + $0x50] sm:$0xff] %vm1232, %v1205
      %1244 = vst.msk [vmem:[#allocation2 + $0x58] sm:$0xff] %vm1232, %v1207
      %1245 = vst.msk [vmem:[#allocation2 + $0x60] sm:$0xff] %vm1232, %v1209
      %1246 = vst.msk [vmem:[#allocation2 + $0x68] sm:$0xff] %vm1232, %v1211
      %1247 = vst.msk [vmem:[#allocation2 + $0x70] sm:$0xff] %vm1232, %v1213
      %1248 = vst.msk [vmem:[#allocation2 + $0x78] sm:$0xff] %vm1232, %v1215
      %v1249 = vld [vmem:[#allocation2] sm:$0xff]
      %v1250 = vld [vmem:[#allocation2 + $0x8] sm:$0xff]
      %v1251 = vld [vmem:[#allocation2 + $0x10] sm:$0xff]
      %v1252 = vld [vmem:[#allocation2 + $0x18] sm:$0xff]
      %v1253 = vld [vmem:[#allocation2 + $0x20] sm:$0xff]
      %v1254 = vld [vmem:[#allocation2 + $0x28] sm:$0xff]
      %v1255 = vld [vmem:[#allocation2 + $0x30] sm:$0xff]
      %v1256 = vld [vmem:[#allocation2 + $0x38] sm:$0xff]
      %v1257 = vld [vmem:[#allocation2 + $0x40] sm:$0xff]
      %v1258 = vld [vmem:[#allocation2 + $0x48] sm:$0xff]
      %v1259 = vld [vmem:[#allocation2 + $0x50] sm:$0xff]
      %v1260 = vld [vmem:[#allocation2 + $0x58] sm:$0xff]
      %v1261 = vld [vmem:[#allocation2 + $0x60] sm:$0xff]
      %v1262 = vld [vmem:[#allocation2 + $0x68] sm:$0xff]
      %v1263 = vld [vmem:[#allocation2 + $0x70] sm:$0xff]
      %v1264 = vld [vmem:[#allocation2 + $0x78] sm:$0xff]
      %v1265 = vld [vmem:[%s1] sm:$0xf]
      %v1266 = vld [vmem:[%s1 + $0x4] sm:$0xf]
      %v1267 = vld [vmem:[%s1 + $0x8] sm:$0xf]
      %v1268 = vld [vmem:[%s1 + $0xc] sm:$0xf]
      %v1269 = vld [vmem:[%s1 + $0x10] sm:$0x3]
      %v1275 = vunpack.c.l.b16 %v1265
      %v1276 = vunpack.c.l.b16 %v1266
      %v1277 = vunpack.c.l.b16 %v1267
      %v1278 = vunpack.c.l.b16 %v1268
      %v1279 = vunpack.c.l.b16 %v1269
      %v1280 = vpack.c.b16 %v1276, %v1275
      %v1281 = vpack.c.b16 %v1278, %v1277
      %v1282 = vpack.c.b16 %v1279, %v1279
      %vm1285 = vcmask 293888
      %v1287 = vsel %vm1285, %v1249, 0
      %v1290 = vsel %vm1285, %v1250, 0
      %v1293 = vsel %vm1285, %v1251, 0
      %v1296 = vsel %vm1285, %v1252, 0
      %v1299 = vsel %vm1285, %v1253, 0
      %v1302 = vsel %vm1285, %v1254, 0
      %v1305 = vsel %vm1285, %v1255, 0
      %v1308 = vsel %vm1285, %v1256, 0
      %v1311 = vsel %vm1285, %v1257, 0
      %v1314 = vsel %vm1285, %v1258, 0
      %v1317 = vsel %vm1285, %v1259, 0
      %v1320 = vsel %vm1285, %v1260, 0
      %v1323 = vsel %vm1285, %v1261, 0
      %v1326 = vsel %vm1285, %v1262, 0
      %v1329 = vsel %vm1285, %v1263, 0
      %v1332 = vsel %vm1285, %v1264, 0
      %vm1334 = vcmask 1041408
      %v1336 = vsel %vm1334, %v1282, 0
      %1338 = vmatprep.subr.bf16.mxu0 0
      %1339 = vmatpush1.bf16.msra.mxu0 %v1280
      %1340 = vmatprep.subr.bf16.mxu0 0
      %1341 = vmatpush1.bf16.msra.mxu0 %v1281
      %1342 = vmatprep.subr.bf16.mxu0 0
      %1343 = vmatpush1.bf16.msra.mxu0 %v1336
      %1344 = vmatprep.subr.bf16.mxu0 0
      %1345 = vmatpush1.bf16.msra.mxu0 0
      %1346 = vmatprep.subr.bf16.mxu0 0
      %1347 = vmatpush1.bf16.msra.mxu0 0
      %1348 = vmatprep.subr.bf16.mxu0 0
      %1349 = vmatpush1.bf16.msra.mxu0 0
      %1350 = vmatprep.subr.bf16.mxu0 0
      %1351 = vmatpush1.bf16.msra.mxu0 0
      %1352 = vmatprep.subr.bf16.mxu0 0
      %1353 = vmatpush1.bf16.msra.mxu0 0
      %1354 = vmatprep.subr.bf16.mxu0 0
      %1355 = vmatpush1.bf16.msra.mxu0 0
      %1356 = vmatprep.subr.bf16.mxu0 0
      %1357 = vmatpush1.bf16.msra.mxu0 0
      %1358 = vmatprep.subr.bf16.mxu0 0
      %1359 = vmatpush1.bf16.msra.mxu0 0
      %1360 = vmatprep.subr.bf16.mxu0 0
      %1361 = vmatpush1.bf16.msra.mxu0 0
      %1362 = vmatprep.subr.bf16.mxu0 0
      %1363 = vmatpush1.bf16.msra.mxu0 0
      %1364 = vmatprep.subr.bf16.mxu0 0
      %1365 = vmatpush1.bf16.msra.mxu0 0
      %1366 = vmatprep.subr.bf16.mxu0 0
      %1367 = vmatpush1.bf16.msra.mxu0 0
      %1368 = vmatprep.subr.bf16.mxu0 0
      %1369 = vmatpush1.bf16.msra.mxu0 0
      %1370 = vmatprep.mubr.bf16.mxu0 0
      %1371 = vmatmul.mubr.bf16.gmra.mrb[0].mxu0 %v1287
      %v1372 = vpop.f32.mrb[0].mxu0
      %v1373 = vadd.f32 0.0, %v1372
      %v1374 = vpop.f32.mrb[0].mxu0
      %v1375 = vpop.f32.mrb[0].mxu0
      %v1376 = vadd.f32 0.0, %v1375
      %v1377 = vpop.f32.mrb[0].mxu0
      %1378 = vmatprep.mubr.bf16.mxu0 0
      %1379 = vmatmul.mubr.bf16.gmra.mrb[0].mxu0 %v1290
      %v1380 = vpop.f32.mrb[0].mxu0
      %v1381 = vadd.f32 0.0, %v1380
      %v1382 = vpop.f32.mrb[0].mxu0
      %v1383 = vpop.f32.mrb[0].mxu0
      %v1384 = vadd.f32 0.0, %v1383
      %v1385 = vpop.f32.mrb[0].mxu0
      %1386 = vmatprep.mubr.bf16.mxu0 0
      %1387 = vmatmul.mubr.bf16.gmra.mrb[0].mxu0 %v1293
      %v1388 = vpop.f32.mrb[0].mxu0
      %v1389 = vadd.f32 0.0, %v1388
      %v1390 = vpop.f32.mrb[0].mxu0
      %v1391 = vpop.f32.mrb[0].mxu0
      %v1392 = vadd.f32 0.0, %v1391
      %v1393 = vpop.f32.mrb[0].mxu0
      %1394 = vmatprep.mubr.bf16.mxu0 0
      %1395 = vmatmul.mubr.bf16.gmra.mrb[0].mxu0 %v1296
      %v1396 = vpop.f32.mrb[0].mxu0
      %v1397 = vadd.f32 0.0, %v1396
      %v1398 = vpop.f32.mrb[0].mxu0
      %v1399 = vpop.f32.mrb[0].mxu0
      %v1400 = vadd.f32 0.0, %v1399
      %v1401 = vpop.f32.mrb[0].mxu0
      %1402 = vmatprep.mubr.bf16.mxu0 0
      %1403 = vmatmul.mubr.bf16.gmra.mrb[0].mxu0 %v1299
      %v1404 = vpop.f32.mrb[0].mxu0
      %v1405 = vadd.f32 0.0, %v1404
      %v1406 = vpop.f32.mrb[0].mxu0
      %v1407 = vpop.f32.mrb[0].mxu0
      %v1408 = vadd.f32 0.0, %v1407
      %v1409 = vpop.f32.mrb[0].mxu0
      %1410 = vmatprep.mubr.bf16.mxu0 0
      %1411 = vmatmul.mubr.bf16.gmra.mrb[0].mxu0 %v1302
      %v1412 = vpop.f32.mrb[0].mxu0
      %v1413 = vadd.f32 0.0, %v1412
      %v1414 = vpop.f32.mrb[0].mxu0
      %v1415 = vpop.f32.mrb[0].mxu0
      %v1416 = vadd.f32 0.0, %v1415
      %v1417 = vpop.f32.mrb[0].mxu0
      %1418 = vmatprep.mubr.bf16.mxu0 0
      %1419 = vmatmul.mubr.bf16.gmra.mrb[0].mxu0 %v1305
      %v1420 = vpop.f32.mrb[0].mxu0
      %v1421 = vadd.f32 0.0, %v1420
      %v1422 = vpop.f32.mrb[0].mxu0
      %v1423 = vpop.f32.mrb[0].mxu0
      %v1424 = vadd.f32 0.0, %v1423
      %v1425 = vpop.f32.mrb[0].mxu0
      %1426 = vmatprep.mubr.bf16.mxu0 0
      %1427 = vmatmul.mubr.bf16.gmra.mrb[0].mxu0 %v1308
      %v1428 = vpop.f32.mrb[0].mxu0
      %v1429 = vadd.f32 0.0, %v1428
      %v1430 = vpop.f32.mrb[0].mxu0
      %v1431 = vpop.f32.mrb[0].mxu0
      %v1432 = vadd.f32 0.0, %v1431
      %v1433 = vpop.f32.mrb[0].mxu0
      %1434 = vmatprep.mubr.bf16.mxu0 0
      %1435 = vmatmul.mubr.bf16.gmra.mrb[0].mxu0 %v1311
      %v1436 = vpop.f32.mrb[0].mxu0
      %v1437 = vadd.f32 0.0, %v1436
      %v1438 = vpop.f32.mrb[0].mxu0
      %v1439 = vpop.f32.mrb[0].mxu0
      %v1440 = vadd.f32 0.0, %v1439
      %v1441 = vpop.f32.mrb[0].mxu0
      %1442 = vmatprep.mubr.bf16.mxu0 0
      %1443 = vmatmul.mubr.bf16.gmra.mrb[0].mxu0 %v1314
      %v1444 = vpop.f32.mrb[0].mxu0
      %v1445 = vadd.f32 0.0, %v1444
      %v1446 = vpop.f32.mrb[0].mxu0
      %v1447 = vpop.f32.mrb[0].mxu0
      %v1448 = vadd.f32 0.0, %v1447
      %v1449 = vpop.f32.mrb[0].mxu0
      %1450 = vmatprep.mubr.bf16.mxu0 0
      %1451 = vmatmul.mubr.bf16.gmra.mrb[0].mxu0 %v1317
      %v1452 = vpop.f32.mrb[0].mxu0
      %v1453 = vadd.f32 0.0, %v1452
      %v1454 = vpop.f32.mrb[0].mxu0
      %v1455 = vpop.f32.mrb[0].mxu0
      %v1456 = vadd.f32 0.0, %v1455
      %v1457 = vpop.f32.mrb[0].mxu0
      %1458 = vmatprep.mubr.bf16.mxu0 0
      %1459 = vmatmul.mubr.bf16.gmra.mrb[0].mxu0 %v1320
      %v1460 = vpop.f32.mrb[0].mxu0
      %v1461 = vadd.f32 0.0, %v1460
      %v1462 = vpop.f32.mrb[0].mxu0
      %v1463 = vpop.f32.mrb[0].mxu0
      %v1464 = vadd.f32 0.0, %v1463
      %v1465 = vpop.f32.mrb[0].mxu0
      %1466 = vmatprep.mubr.bf16.mxu0 0
      %1467 = vmatmul.mubr.bf16.gmra.mrb[0].mxu0 %v1323
      %v1468 = vpop.f32.mrb[0].mxu0
      %v1469 = vadd.f32 0.0, %v1468
      %v1470 = vpop.f32.mrb[0].mxu0
      %v1471 = vpop.f32.mrb[0].mxu0
      %v1472 = vadd.f32 0.0, %v1471
      %v1473 = vpop.f32.mrb[0].mxu0
      %1474 = vmatprep.mubr.bf16.mxu0 0
      %1475 = vmatmul.mubr.bf16.gmra.mrb[0].mxu0 %v1326
      %v1476 = vpop.f32.mrb[0].mxu0
      %v1477 = vadd.f32 0.0, %v1476
      %v1478 = vpop.f32.mrb[0].mxu0
      %v1479 = vpop.f32.mrb[0].mxu0
      %v1480 = vadd.f32 0.0, %v1479
      %v1481 = vpop.f32.mrb[0].mxu0
      %1482 = vmatprep.mubr.bf16.mxu0 0
      %1483 = vmatmul.mubr.bf16.gmra.mrb[0].mxu0 %v1329
      %v1484 = vpop.f32.mrb[0].mxu0
      %v1485 = vadd.f32 0.0, %v1484
      %v1486 = vpop.f32.mrb[0].mxu0
      %v1487 = vpop.f32.mrb[0].mxu0
      %v1488 = vadd.f32 0.0, %v1487
      %v1489 = vpop.f32.mrb[0].mxu0
      %1490 = vmatprep.mubr.bf16.mxu0 0
      %1491 = vmatmul.mubr.bf16.gmra.mrb[0].mxu0 %v1332
      %v1492 = vpop.f32.mrb[0].mxu0
      %v1493 = vadd.f32 0.0, %v1492
      %v1494 = vpop.f32.mrb[0].mxu0
      %v1495 = vpop.f32.mrb[0].mxu0
      %v1496 = vadd.f32 0.0, %v1495
      %v1497 = vpop.f32.mrb[0].mxu0
      %1498 = vdwg.mxu0
      %v1499 = vld [vmem:[%s2] sm:$0x1]
      %v1501 = vlaneseq
      %v1502 = vshrl.u32 %v1501, 7
      %v1503 = vsub.s32 0, %v1502
      %v1504 = vrot.slane %v1499, %v1503
      %v1506 = vmul.f32 %v1373, %v1504
      %v1507 = vmul.f32 %v1376, %v1504
      %v1508 = vmul.f32 %v1381, %v1504
      %v1509 = vmul.f32 %v1384, %v1504
      %v1510 = vmul.f32 %v1389, %v1504
      %v1511 = vmul.f32 %v1392, %v1504
      %v1512 = vmul.f32 %v1397, %v1504
      %v1513 = vmul.f32 %v1400, %v1504
      %v1514 = vmul.f32 %v1405, %v1504
      %v1515 = vmul.f32 %v1408, %v1504
      %v1516 = vmul.f32 %v1413, %v1504
      %v1517 = vmul.f32 %v1416, %v1504
      %v1518 = vmul.f32 %v1421, %v1504
      %v1519 = vmul.f32 %v1424, %v1504
      %v1520 = vmul.f32 %v1429, %v1504
      %v1521 = vmul.f32 %v1432, %v1504
      %v1522 = vmul.f32 %v1437, %v1504
      %v1523 = vmul.f32 %v1440, %v1504
      %v1524 = vmul.f32 %v1445, %v1504
      %v1525 = vmul.f32 %v1448, %v1504
      %v1526 = vmul.f32 %v1453, %v1504
      %v1527 = vmul.f32 %v1456, %v1504
      %v1528 = vmul.f32 %v1461, %v1504
      %v1529 = vmul.f32 %v1464, %v1504
      %v1530 = vmul.f32 %v1469, %v1504
      %v1531 = vmul.f32 %v1472, %v1504
      %v1532 = vmul.f32 %v1477, %v1504
      %v1533 = vmul.f32 %v1480, %v1504
      %v1534 = vmul.f32 %v1485, %v1504
      %v1535 = vmul.f32 %v1488, %v1504
      %v1536 = vmul.f32 %v1493, %v1504
      %v1537 = vmul.f32 %v1496, %v1504
      %v1538 = vld [vmem:[%s3] sm:$0x1]
      %v1540 = vlaneseq
      %v1541 = vshrl.u32 %v1540, 7
      %v1542 = vsub.s32 0, %v1541
      %v1543 = vrot.slane %v1538, %v1542
      %v1545 = vadd.f32 %v1506, %v1543
      %v1546 = vadd.f32 %v1507, %v1543
      %v1547 = vadd.f32 %v1508, %v1543
      %v1548 = vadd.f32 %v1509, %v1543
      %v1549 = vadd.f32 %v1510, %v1543
      %v1550 = vadd.f32 %v1511, %v1543
      %v1551 = vadd.f32 %v1512, %v1543
      %v1552 = vadd.f32 %v1513, %v1543
      %v1553 = vadd.f32 %v1514, %v1543
      %v1554 = vadd.f32 %v1515, %v1543
      %v1555 = vadd.f32 %v1516, %v1543
      %v1556 = vadd.f32 %v1517, %v1543
      %v1557 = vadd.f32 %v1518, %v1543
      %v1558 = vadd.f32 %v1519, %v1543
      %v1559 = vadd.f32 %v1520, %v1543
      %v1560 = vadd.f32 %v1521, %v1543
      %v1561 = vadd.f32 %v1522, %v1543
      %v1562 = vadd.f32 %v1523, %v1543
      %v1563 = vadd.f32 %v1524, %v1543
      %v1564 = vadd.f32 %v1525, %v1543
      %v1565 = vadd.f32 %v1526, %v1543
      %v1566 = vadd.f32 %v1527, %v1543
      %v1567 = vadd.f32 %v1528, %v1543
      %v1568 = vadd.f32 %v1529, %v1543
      %v1569 = vadd.f32 %v1530, %v1543
      %v1570 = vadd.f32 %v1531, %v1543
      %v1571 = vadd.f32 %v1532, %v1543
      %v1572 = vadd.f32 %v1533, %v1543
      %v1573 = vadd.f32 %v1534, %v1543
      %v1574 = vadd.f32 %v1535, %v1543
      %v1575 = vadd.f32 %v1536, %v1543
      %v1576 = vadd.f32 %v1537, %v1543
      %v1577 = vmax.f32 %v1545, 0.0
      %v1578 = vmax.f32 %v1546, 0.0
      %v1579 = vmax.f32 %v1547, 0.0
      %v1580 = vmax.f32 %v1548, 0.0
      %v1581 = vmax.f32 %v1549, 0.0
      %v1582 = vmax.f32 %v1550, 0.0
      %v1583 = vmax.f32 %v1551, 0.0
      %v1584 = vmax.f32 %v1552, 0.0
      %v1585 = vmax.f32 %v1553, 0.0
      %v1586 = vmax.f32 %v1554, 0.0
      %v1587 = vmax.f32 %v1555, 0.0
      %v1588 = vmax.f32 %v1556, 0.0
      %v1589 = vmax.f32 %v1557, 0.0
      %v1590 = vmax.f32 %v1558, 0.0
      %v1591 = vmax.f32 %v1559, 0.0
      %v1592 = vmax.f32 %v1560, 0.0
      %v1593 = vmax.f32 %v1561, 0.0
      %v1594 = vmax.f32 %v1562, 0.0
      %v1595 = vmax.f32 %v1563, 0.0
      %v1596 = vmax.f32 %v1564, 0.0
      %v1597 = vmax.f32 %v1565, 0.0
      %v1598 = vmax.f32 %v1566, 0.0
      %v1599 = vmax.f32 %v1567, 0.0
      %v1600 = vmax.f32 %v1568, 0.0
      %v1601 = vmax.f32 %v1569, 0.0
      %v1602 = vmax.f32 %v1570, 0.0
      %v1603 = vmax.f32 %v1571, 0.0
      %v1604 = vmax.f32 %v1572, 0.0
      %v1605 = vmax.f32 %v1573, 0.0
      %v1606 = vmax.f32 %v1574, 0.0
      %v1607 = vmax.f32 %v1575, 0.0
      %v1608 = vmax.f32 %v1576, 0.0
      %vm1609 = vcmask 261120
      %1610 = vst.msk [vmem:[%s219] sm:$0xff] %vm1609, %v1577
      %1611 = vst.msk [vmem:[%s219 + $0x8] sm:$0xff] %vm1609, %v1578
      %1612 = vst.msk [vmem:[%s219 + $0x10] sm:$0xff] %vm1609, %v1579
      %1613 = vst.msk [vmem:[%s219 + $0x18] sm:$0xff] %vm1609, %v1580
      %1614 = vst.msk [vmem:[%s219 + $0x20] sm:$0xff] %vm1609, %v1581
      %1615 = vst.msk [vmem:[%s219 + $0x28] sm:$0xff] %vm1609, %v1582
      %1616 = vst.msk [vmem:[%s219 + $0x30] sm:$0xff] %vm1609, %v1583
      %1617 = vst.msk [vmem:[%s219 + $0x38] sm:$0xff] %vm1609, %v1584
      %1618 = vst.msk [vmem:[%s219 + $0x40] sm:$0xff] %vm1609, %v1585
      %1619 = vst.msk [vmem:[%s219 + $0x48] sm:$0xff] %vm1609, %v1586
      %1620 = vst.msk [vmem:[%s219 + $0x50] sm:$0xff] %vm1609, %v1587
      %1621 = vst.msk [vmem:[%s219 + $0x58] sm:$0xff] %vm1609, %v1588
      %1622 = vst.msk [vmem:[%s219 + $0x60] sm:$0xff] %vm1609, %v1589
      %1623 = vst.msk [vmem:[%s219 + $0x68] sm:$0xff] %vm1609, %v1590
      %1624 = vst.msk [vmem:[%s219 + $0x70] sm:$0xff] %vm1609, %v1591
      %1625 = vst.msk [vmem:[%s219 + $0x78] sm:$0xff] %vm1609, %v1592
      %1626 = vst.msk [vmem:[%s219 + $0x80] sm:$0xff] %vm1609, %v1593
      %1627 = vst.msk [vmem:[%s219 + $0x88] sm:$0xff] %vm1609, %v1594
      %1628 = vst.msk [vmem:[%s219 + $0x90] sm:$0xff] %vm1609, %v1595
      %1629 = vst.msk [vmem:[%s219 + $0x98] sm:$0xff] %vm1609, %v1596
      %1630 = vst.msk [vmem:[%s219 + $0xa0] sm:$0xff] %vm1609, %v1597
      %1631 = vst.msk [vmem:[%s219 + $0xa8] sm:$0xff] %vm1609, %v1598
      %1632 = vst.msk [vmem:[%s219 + $0xb0] sm:$0xff] %vm1609, %v1599
      %1633 = vst.msk [vmem:[%s219 + $0xb8] sm:$0xff] %vm1609, %v1600
      %1634 = vst.msk [vmem:[%s219 + $0xc0] sm:$0xff] %vm1609, %v1601
      %1635 = vst.msk [vmem:[%s219 + $0xc8] sm:$0xff] %vm1609, %v1602
      %1636 = vst.msk [vmem:[%s219 + $0xd0] sm:$0xff] %vm1609, %v1603
      %1637 = vst.msk [vmem:[%s219 + $0xd8] sm:$0xff] %vm1609, %v1604
      %1638 = vst.msk [vmem:[%s219 + $0xe0] sm:$0xff] %vm1609, %v1605
      %1639 = vst.msk [vmem:[%s219 + $0xe8] sm:$0xff] %vm1609, %v1606
      %1640 = vst.msk [vmem:[%s219 + $0xf0] sm:$0xff] %vm1609, %v1607
      %1641 = vst.msk [vmem:[%s219 + $0xf8] sm:$0xff] %vm1609, %v1608
      %s1642 = smul.u32 32, %s20
      %p1643 = scmp.lt.s32.totalorder %s19, 1
      %s1644 = scalar_select %p1643, %s19, 1
      %p1645 = scmp.lt.s32.totalorder %s1642, 31
      %s1646 = scalar_select %p1645, %s1642, 31
      %s1647 = smul.addr %s1644, 32
      %s1648 = sadd.s32 %s1646, %s1647
      %s1649 = smul.addr %s1648, 8
      %s1650 = scalar_lea.vmem %s4, %s1649
      // Predicated region
      $region37: #{upsample_block.3} parent=35 // pred_check
        %p1651 = pneg %p136
      $region38: #{upsample_block.3} parent=35 // pred_check_branch
        %1653 = sbr.rel (%p1651) target = $region40
      $region39: #{upsample_block.3} parent=35 // pred_region
        %s1654 = smul.u32 32, %s20
      $region40: #{upsample_block.3} parent=35 // pred_fallthru
        _
    $region36: #{upsample_block.3} parent=5 // pred_fallthru
      _
    %p1655 = scmp.le.s32.totalorder 2, %s10
    // Predicated region
    $region41: #{upsample_block.3} parent=5 // pred_check
      %p1656 = pneg %p1655
    $region42: #{upsample_block.3} parent=5 // pred_check_branch
      %1658 = sbr.rel (%p1656) target = $region44
    $region43: #{upsample_block.3} parent=5 // pred_region
      %s1659 = ssub.s32 %s10, 2
      // Predicated region
      $region45: #{upsample_block.3} parent=43 // pred_check
        %p1660 = pneg %p142
      $region46: #{upsample_block.3} parent=43 // pred_check_branch
        %1662 = sbr.rel (%p1660) target = $region48
      $region47: #{upsample_block.3} parent=43 // pred_region
        %s1663 = smul.u32 32, %s22
        %p1664 = scmp.lt.s32.totalorder %s21, 1
        %s1665 = scalar_select %p1664, %s21, 1
        %p1666 = scmp.lt.s32.totalorder %s1663, 31
        %s1667 = scalar_select %p1666, %s1663, 31
        %s1668 = smul.addr %s1665, 32
        %s1669 = sadd.s32 %s1667, %s1668
        %s1670 = smul.addr %s1669, 8
        %s1671 = scalar_lea.vmem %s4, %s1670
      $region48: #{upsample_block.3} parent=43 // pred_fallthru
        _
    $region44: #{upsample_block.3} parent=5 // pred_fallthru
      _
  $region6: #{upsample_block.3} parent=0 // loop_footer
    %s14 = sadd.s32 1, %s10
  $region7: #{upsample_block.3} parent=0 // loop_footer_branch
    %9 = sbr.rel target = $region3
  $region8: #{upsample_block.3} parent=0 // loop_exit
    _

</llo_original>
